<compile_context>
chip_gen: v7x
topology: tpu7x:2x2x1
jax: 0.10.0
libtpu: 0.0.40
codegen_flags: <defaults>
</compile_context>

<pallas_src>
import functools

import jax
import jax.numpy as jnp
from jax import lax
from jax.experimental import pallas as pl
from jax.experimental.pallas import tpu as pltpu


def _round_up(x, m):
    return ((x + m - 1) // m) * m


def _device_kind():
    try:
        return jax.devices()[0].device_kind.lower()
    except Exception:
        return ""


# ---------------------------------------------------------------------------
# Fused depthwise (1, kw, groups=nin) conv + pointwise 1x1 conv kernel
# ---------------------------------------------------------------------------
def _dsc_kernel(x_ref, wd_ref, wp_ref, bpe_ref, o_ref, *,
                c_in, c_out, kw, wo, rc):
    """x_ref  : (c_in,  tr, Wp)  VMEM  -- rows = B*H on sublanes, time on lanes
       wd_ref : (c_out, kw)      SMEM  -- depthwise weights
       wp_ref : (c_out, c_out)   SMEM  -- pointwise weights
       bpe_ref: (c_out,)         SMEM  -- effective bias = bp + wp @ bd
       o_ref  : (c_out, tr, wo)  VMEM  -- wo is a multiple of 128 (lane-dense)
    """
    cpg = c_out // c_in          # output channels per depthwise group
    tr = o_ref.shape[1]
    n_chunks = tr // rc          # static

    # Hoist all scalar weight reads out of the chunk loop (loop-invariant;
    # keeps the scalar-load slots off the critical path of the VALU-bound body).
    wd_s = [[wd_ref[co, dw] for dw in range(kw)] for co in range(c_out)]
    wp_s = [[wp_ref[co2, co] for co in range(c_out)] for co2 in range(c_out)]
    bp_s = [bpe_ref[co] for co in range(c_out)]

    def chunk(ci, carry):
        r0 = pl.multiple_of(ci * rc, rc)

        # Load each input-channel row-chunk once; shifted windows are plain
        # lane slices of the resident chunk (no im2col replication anywhere).
        xs = [x_ref[cin, pl.ds(r0, rc), :] for cin in range(c_in)]

        # Depthwise conv: d[co] = sum_dw x[cin(co), :, dw:dw+wo] * wd[co, dw]
        # (depthwise bias already folded into bpe in the wrapper).
        d = []
        for co in range(c_out):
            cin = co // cpg
            acc = xs[cin][:, 0:wo] * wd_s[co][0]
            for dw in range(1, kw):
                acc = acc + xs[cin][:, dw:dw + wo] * wd_s[co][dw]
            d.append(acc)

        # Pointwise 1x1 conv fused as the epilogue (c_out is tiny, so
        # scalar-broadcast FMAs beat a 128-padded MXU matmul), then one
        # lane-dense store per output channel.
        for co2 in range(c_out):
            acc = d[0] * wp_s[co2][0]
            for co in range(1, c_out):
                acc = acc + d[co] * wp_s[co2][co]
            o_ref[co2, pl.ds(r0, rc), :] = (acc + bp_s[co2]).astype(o_ref.dtype)
        return carry

    # Chunked loop bounds the vreg live set; unroll fully only when small.
    lax.fori_loop(0, n_chunks, chunk, 0, unroll=(n_chunks <= 4))


def depthwise_separable_conv(x, wd, bd, wp, bp):
    """x : (B, nin, H, W)
       wd: (nout, 1, 1, kw)   depthwise weight (groups = nin)
       bd: (nout,)            depthwise bias
       wp: (nout, nout, 1, 1) pointwise weight
       bp: (nout,)            pointwise bias
       -> (B, nout, H, W - kw + 1)
    """
    B, c_in, H, W = x.shape
    c_out, _, _, kw = wd.shape
    assert c_out % c_in == 0, "PyTorch groups=nin requires nout % nin == 0"
    wo = W - kw + 1
    R = B * H

    # Lane-dense output: pad the output width up to a multiple of 128 so the
    # store is an unmasked vst; pad input lanes with zeros to cover the extra
    # (garbage) columns, which are sliced off below.
    wo_pad = _round_up(wo, 128)
    w_need = wo_pad + kw - 1

    # Layout: (channels, rows=B*H, time) -- time on lanes, rows on sublanes,
    # channels as the (untiled) leading axis so each channel is a clean 2-D tile.
    xr = jnp.transpose(x, (1, 0, 2, 3)).reshape(c_in, R, W).astype(jnp.float32)
    if w_need > W:
        xr = jnp.pad(xr, ((0, 0), (0, 0), (0, w_need - W)))

    # --- row tiling -------------------------------------------------------
    rc = 16                       # rows per in-kernel chunk (vreg-bounded)
    kind = _device_kind()
    n_cores = 2 if "v7" in kind else 1          # v7x: 2 TensorCores/chip
    # Per-tile VMEM footprint ~ (c_in*w_pad + c_out*wo_pad) * tr * 4B * 2 bufs.
    # v5e default scoped VMEM is 16 MiB -> cap tr at 512 there; 1024 elsewhere.
    tr_cap = 512 if "v5" in kind else 1024
    # Only force a multi-tile split on v7x (>=2 tiles per core so prefetch /
    # writeback overlap); on single-TC chips a split is pure per-step overhead.
    min_tiles = 2 * n_cores if n_cores > 1 else 1
    tr = min(tr_cap, _round_up(pl.cdiv(R, min_tiles), rc))
    tr = max(tr, rc)
    Rp = _round_up(R, tr)
    if Rp != R:
        xr = jnp.pad(xr, ((0, 0), (0, Rp - R), (0, 0)))

    # --- weights ------------------------------------------------------------
    wd2 = wd.reshape(c_out, kw).astype(jnp.float32)
    wp2 = wp.reshape(c_out, c_out).astype(jnp.float32)
    # Fold the depthwise bias into the pointwise bias: z = wp@(dw(x)+bd)+bp
    #                                                    = wp@dw(x) + (bp + wp@bd)
    bpe = bp.astype(jnp.float32) + wp2 @ bd.astype(jnp.float32)

    kernel = functools.partial(_dsc_kernel, c_in=c_in, c_out=c_out, kw=kw,
                               wo=wo_pad, rc=rc)
    smem_spec = pl.BlockSpec(memory_space=pltpu.MemorySpace.SMEM)

    out = pl.pallas_call(
        kernel,
        out_shape=jax.ShapeDtypeStruct((c_out, Rp, wo_pad), jnp.float32),
        grid_spec=pltpu.PrefetchScalarGridSpec(
            num_scalar_prefetch=0,
            grid=(Rp // tr,),
            in_specs=[pl.BlockSpec((c_in, tr, w_need), lambda r: (0, r, 0)),
                      smem_spec, smem_spec, smem_spec],
            out_specs=pl.BlockSpec((c_out, tr, wo_pad), lambda r: (0, r, 0))),
        compiler_params=pltpu.CompilerParams(
            dimension_semantics=("parallel",)),
    )(xr, wd2, wp2, bpe)

    out = out[:, :R, :wo]
    # (nout, B*H, Wo) -> (B, nout, H, Wo)
    return jnp.transpose(out.reshape(c_out, B, H, wo), (1, 0, 2, 3))


# ---------------------------------------------------------------------------
# Pure-XLA reference (correctness check against the Pallas kernel)
# ---------------------------------------------------------------------------
def _reference(x, wd, bd, wp, bp):
    nin = x.shape[1]
    dn = ('NCHW', 'OIHW', 'NCHW')
    y = lax.conv_general_dilated(x, wd, (1, 1), 'VALID',
                                 dimension_numbers=dn,
                                 feature_group_count=nin,
                                 precision=lax.Precision.HIGHEST)
    y = y + bd.reshape(1, -1, 1, 1)
    z = lax.conv_general_dilated(y, wp, (1, 1), 'VALID',
                                 dimension_numbers=dn,
                                 precision=lax.Precision.HIGHEST)
    return z + bp.reshape(1, -1, 1, 1)


# ---------------------------------------------------------------------------
if __name__ == "__main__":
    key = jax.random.PRNGKey(0)
    kx, kwd, kbd, kwp, kbp = jax.random.split(key, 5)

    # Small shapes consistent with the module: nin=4, nout=8 (nout % nin == 0),
    # kernel_size=7, spatial (H, W) = (16, 134) -> output width exactly 128.
    B, nin, nout, H, ksz = 2, 4, 8, 16, 7
    W = 128 + ksz - 1

    x = jax.random.normal(kx, (B, nin, H, W), jnp.float32)

    # PyTorch-style uniform init bounds.
    bound_d = 1.0 / (1 * 1 * ksz) ** 0.5
    wd = jax.random.uniform(kwd, (nout, 1, 1, ksz), jnp.float32, -bound_d, bound_d)
    bd = jax.random.uniform(kbd, (nout,), jnp.float32, -bound_d, bound_d)
    bound_p = 1.0 / (nout * 1 * 1) ** 0.5
    wp = jax.random.uniform(kwp, (nout, nout, 1, 1), jnp.float32, -bound_p, bound_p)
    bp = jax.random.uniform(kbp, (nout,), jnp.float32, -bound_p, bound_p)

    fwd = jax.jit(depthwise_separable_conv)
    out = fwd(x, wd, bd, wp, bp)
    jax.block_until_ready(out)

    assert out.shape == (B, nout, H, W - ksz + 1)

    ref = _reference(x, wd, bd, wp, bp)
    max_err = float(jnp.max(jnp.abs(out - ref)))
    assert max_err < 1e-3, f"max abs err vs reference = {max_err}"

    print("KERNEL_OK")
</pallas_src>

<mosaic_0001>
module attributes {stable_mosaic.version = 11 : i64} {
  func.func @_dsc_kernel(%arg0: i32, %arg1: memref<4x32x134xf32, #tpu.memory_space<vmem>>, %arg2: memref<8x7xf32, #tpu.memory_space<smem>>, %arg3: memref<8x8xf32, #tpu.memory_space<smem>>, %arg4: memref<8xf32, #tpu.memory_space<smem>>, %arg5: memref<8x32x128xf32, #tpu.memory_space<vmem>>) attributes {dimension_semantics = [#tpu.dimension_semantics<parallel>], iteration_bounds = array<i64: 1>, scalar_prefetch = 0 : i64, scratch_operands = 0 : i64, tpu.core_type = #tpu.core_type<tc>, window_params = [{transform_indices = @transform_0, window_bounds = array<i64: 4, 32, 134>}, {transform_indices = @transform_1, window_bounds = array<i64: 8, 7>}, {transform_indices = @transform_2, window_bounds = array<i64: 8, 8>}, {transform_indices = @transform_3, window_bounds = array<i64: 8>}, {transform_indices = @transform_4, window_bounds = array<i64: 8, 32, 128>}]} {
    %c0 = arith.constant 0 : index
    %c0_0 = arith.constant 0 : index
    %0 = memref.load %arg2[%c0, %c0_0] : memref<8x7xf32, #tpu.memory_space<smem>>
    %c0_1 = arith.constant 0 : index
    %c1 = arith.constant 1 : index
    %1 = memref.load %arg2[%c0_1, %c1] : memref<8x7xf32, #tpu.memory_space<smem>>
    %c0_2 = arith.constant 0 : index
    %c2 = arith.constant 2 : index
    %2 = memref.load %arg2[%c0_2, %c2] : memref<8x7xf32, #tpu.memory_space<smem>>
    %c0_3 = arith.constant 0 : index
    %c3 = arith.constant 3 : index
    %3 = memref.load %arg2[%c0_3, %c3] : memref<8x7xf32, #tpu.memory_space<smem>>
    %c0_4 = arith.constant 0 : index
    %c4 = arith.constant 4 : index
    %4 = memref.load %arg2[%c0_4, %c4] : memref<8x7xf32, #tpu.memory_space<smem>>
    %c0_5 = arith.constant 0 : index
    %c5 = arith.constant 5 : index
    %5 = memref.load %arg2[%c0_5, %c5] : memref<8x7xf32, #tpu.memory_space<smem>>
    %c0_6 = arith.constant 0 : index
    %c6 = arith.constant 6 : index
    %6 = memref.load %arg2[%c0_6, %c6] : memref<8x7xf32, #tpu.memory_space<smem>>
    %c1_7 = arith.constant 1 : index
    %c0_8 = arith.constant 0 : index
    %7 = memref.load %arg2[%c1_7, %c0_8] : memref<8x7xf32, #tpu.memory_space<smem>>
    %c1_9 = arith.constant 1 : index
    %c1_10 = arith.constant 1 : index
    %8 = memref.load %arg2[%c1_9, %c1_10] : memref<8x7xf32, #tpu.memory_space<smem>>
    %c1_11 = arith.constant 1 : index
    %c2_12 = arith.constant 2 : index
    %9 = memref.load %arg2[%c1_11, %c2_12] : memref<8x7xf32, #tpu.memory_space<smem>>
    %c1_13 = arith.constant 1 : index
    %c3_14 = arith.constant 3 : index
    %10 = memref.load %arg2[%c1_13, %c3_14] : memref<8x7xf32, #tpu.memory_space<smem>>
    %c1_15 = arith.constant 1 : index
    %c4_16 = arith.constant 4 : index
    %11 = memref.load %arg2[%c1_15, %c4_16] : memref<8x7xf32, #tpu.memory_space<smem>>
    %c1_17 = arith.constant 1 : index
    %c5_18 = arith.constant 5 : index
    %12 = memref.load %arg2[%c1_17, %c5_18] : memref<8x7xf32, #tpu.memory_space<smem>>
    %c1_19 = arith.constant 1 : index
    %c6_20 = arith.constant 6 : index
    %13 = memref.load %arg2[%c1_19, %c6_20] : memref<8x7xf32, #tpu.memory_space<smem>>
    %c2_21 = arith.constant 2 : index
    %c0_22 = arith.constant 0 : index
    %14 = memref.load %arg2[%c2_21, %c0_22] : memref<8x7xf32, #tpu.memory_space<smem>>
    %c2_23 = arith.constant 2 : index
    %c1_24 = arith.constant 1 : index
    %15 = memref.load %arg2[%c2_23, %c1_24] : memref<8x7xf32, #tpu.memory_space<smem>>
    %c2_25 = arith.constant 2 : index
    %c2_26 = arith.constant 2 : index
    %16 = memref.load %arg2[%c2_25, %c2_26] : memref<8x7xf32, #tpu.memory_space<smem>>
    %c2_27 = arith.constant 2 : index
    %c3_28 = arith.constant 3 : index
    %17 = memref.load %arg2[%c2_27, %c3_28] : memref<8x7xf32, #tpu.memory_space<smem>>
    %c2_29 = arith.constant 2 : index
    %c4_30 = arith.constant 4 : index
    %18 = memref.load %arg2[%c2_29, %c4_30] : memref<8x7xf32, #tpu.memory_space<smem>>
    %c2_31 = arith.constant 2 : index
    %c5_32 = arith.constant 5 : index
    %19 = memref.load %arg2[%c2_31, %c5_32] : memref<8x7xf32, #tpu.memory_space<smem>>
    %c2_33 = arith.constant 2 : index
    %c6_34 = arith.constant 6 : index
    %20 = memref.load %arg2[%c2_33, %c6_34] : memref<8x7xf32, #tpu.memory_space<smem>>
    %c3_35 = arith.constant 3 : index
    %c0_36 = arith.constant 0 : index
    %21 = memref.load %arg2[%c3_35, %c0_36] : memref<8x7xf32, #tpu.memory_space<smem>>
    %c3_37 = arith.constant 3 : index
    %c1_38 = arith.constant 1 : index
    %22 = memref.load %arg2[%c3_37, %c1_38] : memref<8x7xf32, #tpu.memory_space<smem>>
    %c3_39 = arith.constant 3 : index
    %c2_40 = arith.constant 2 : index
    %23 = memref.load %arg2[%c3_39, %c2_40] : memref<8x7xf32, #tpu.memory_space<smem>>
    %c3_41 = arith.constant 3 : index
    %c3_42 = arith.constant 3 : index
    %24 = memref.load %arg2[%c3_41, %c3_42] : memref<8x7xf32, #tpu.memory_space<smem>>
    %c3_43 = arith.constant 3 : index
    %c4_44 = arith.constant 4 : index
    %25 = memref.load %arg2[%c3_43, %c4_44] : memref<8x7xf32, #tpu.memory_space<smem>>
    %c3_45 = arith.constant 3 : index
    %c5_46 = arith.constant 5 : index
    %26 = memref.load %arg2[%c3_45, %c5_46] : memref<8x7xf32, #tpu.memory_space<smem>>
    %c3_47 = arith.constant 3 : index
    %c6_48 = arith.constant 6 : index
    %27 = memref.load %arg2[%c3_47, %c6_48] : memref<8x7xf32, #tpu.memory_space<smem>>
    %c4_49 = arith.constant 4 : index
    %c0_50 = arith.constant 0 : index
    %28 = memref.load %arg2[%c4_49, %c0_50] : memref<8x7xf32, #tpu.memory_space<smem>>
    %c4_51 = arith.constant 4 : index
    %c1_52 = arith.constant 1 : index
    %29 = memref.load %arg2[%c4_51, %c1_52] : memref<8x7xf32, #tpu.memory_space<smem>>
    %c4_53 = arith.constant 4 : index
    %c2_54 = arith.constant 2 : index
    %30 = memref.load %arg2[%c4_53, %c2_54] : memref<8x7xf32, #tpu.memory_space<smem>>
    %c4_55 = arith.constant 4 : index
    %c3_56 = arith.constant 3 : index
    %31 = memref.load %arg2[%c4_55, %c3_56] : memref<8x7xf32, #tpu.memory_space<smem>>
    %c4_57 = arith.constant 4 : index
    %c4_58 = arith.constant 4 : index
    %32 = memref.load %arg2[%c4_57, %c4_58] : memref<8x7xf32, #tpu.memory_space<smem>>
    %c4_59 = arith.constant 4 : index
    %c5_60 = arith.constant 5 : index
    %33 = memref.load %arg2[%c4_59, %c5_60] : memref<8x7xf32, #tpu.memory_space<smem>>
    %c4_61 = arith.constant 4 : index
    %c6_62 = arith.constant 6 : index
    %34 = memref.load %arg2[%c4_61, %c6_62] : memref<8x7xf32, #tpu.memory_space<smem>>
    %c5_63 = arith.constant 5 : index
    %c0_64 = arith.constant 0 : index
    %35 = memref.load %arg2[%c5_63, %c0_64] : memref<8x7xf32, #tpu.memory_space<smem>>
    %c5_65 = arith.constant 5 : index
    %c1_66 = arith.constant 1 : index
    %36 = memref.load %arg2[%c5_65, %c1_66] : memref<8x7xf32, #tpu.memory_space<smem>>
    %c5_67 = arith.constant 5 : index
    %c2_68 = arith.constant 2 : index
    %37 = memref.load %arg2[%c5_67, %c2_68] : memref<8x7xf32, #tpu.memory_space<smem>>
    %c5_69 = arith.constant 5 : index
    %c3_70 = arith.constant 3 : index
    %38 = memref.load %arg2[%c5_69, %c3_70] : memref<8x7xf32, #tpu.memory_space<smem>>
    %c5_71 = arith.constant 5 : index
    %c4_72 = arith.constant 4 : index
    %39 = memref.load %arg2[%c5_71, %c4_72] : memref<8x7xf32, #tpu.memory_space<smem>>
    %c5_73 = arith.constant 5 : index
    %c5_74 = arith.constant 5 : index
    %40 = memref.load %arg2[%c5_73, %c5_74] : memref<8x7xf32, #tpu.memory_space<smem>>
    %c5_75 = arith.constant 5 : index
    %c6_76 = arith.constant 6 : index
    %41 = memref.load %arg2[%c5_75, %c6_76] : memref<8x7xf32, #tpu.memory_space<smem>>
    %c6_77 = arith.constant 6 : index
    %c0_78 = arith.constant 0 : index
    %42 = memref.load %arg2[%c6_77, %c0_78] : memref<8x7xf32, #tpu.memory_space<smem>>
    %c6_79 = arith.constant 6 : index
    %c1_80 = arith.constant 1 : index
    %43 = memref.load %arg2[%c6_79, %c1_80] : memref<8x7xf32, #tpu.memory_space<smem>>
    %c6_81 = arith.constant 6 : index
    %c2_82 = arith.constant 2 : index
    %44 = memref.load %arg2[%c6_81, %c2_82] : memref<8x7xf32, #tpu.memory_space<smem>>
    %c6_83 = arith.constant 6 : index
    %c3_84 = arith.constant 3 : index
    %45 = memref.load %arg2[%c6_83, %c3_84] : memref<8x7xf32, #tpu.memory_space<smem>>
    %c6_85 = arith.constant 6 : index
    %c4_86 = arith.constant 4 : index
    %46 = memref.load %arg2[%c6_85, %c4_86] : memref<8x7xf32, #tpu.memory_space<smem>>
    %c6_87 = arith.constant 6 : index
    %c5_88 = arith.constant 5 : index
    %47 = memref.load %arg2[%c6_87, %c5_88] : memref<8x7xf32, #tpu.memory_space<smem>>
    %c6_89 = arith.constant 6 : index
    %c6_90 = arith.constant 6 : index
    %48 = memref.load %arg2[%c6_89, %c6_90] : memref<8x7xf32, #tpu.memory_space<smem>>
    %c7 = arith.constant 7 : index
    %c0_91 = arith.constant 0 : index
    %49 = memref.load %arg2[%c7, %c0_91] : memref<8x7xf32, #tpu.memory_space<smem>>
    %c7_92 = arith.constant 7 : index
    %c1_93 = arith.constant 1 : index
    %50 = memref.load %arg2[%c7_92, %c1_93] : memref<8x7xf32, #tpu.memory_space<smem>>
    %c7_94 = arith.constant 7 : index
    %c2_95 = arith.constant 2 : index
    %51 = memref.load %arg2[%c7_94, %c2_95] : memref<8x7xf32, #tpu.memory_space<smem>>
    %c7_96 = arith.constant 7 : index
    %c3_97 = arith.constant 3 : index
    %52 = memref.load %arg2[%c7_96, %c3_97] : memref<8x7xf32, #tpu.memory_space<smem>>
    %c7_98 = arith.constant 7 : index
    %c4_99 = arith.constant 4 : index
    %53 = memref.load %arg2[%c7_98, %c4_99] : memref<8x7xf32, #tpu.memory_space<smem>>
    %c7_100 = arith.constant 7 : index
    %c5_101 = arith.constant 5 : index
    %54 = memref.load %arg2[%c7_100, %c5_101] : memref<8x7xf32, #tpu.memory_space<smem>>
    %c7_102 = arith.constant 7 : index
    %c6_103 = arith.constant 6 : index
    %55 = memref.load %arg2[%c7_102, %c6_103] : memref<8x7xf32, #tpu.memory_space<smem>>
    %c0_104 = arith.constant 0 : index
    %c0_105 = arith.constant 0 : index
    %56 = memref.load %arg3[%c0_104, %c0_105] : memref<8x8xf32, #tpu.memory_space<smem>>
    %c0_106 = arith.constant 0 : index
    %c1_107 = arith.constant 1 : index
    %57 = memref.load %arg3[%c0_106, %c1_107] : memref<8x8xf32, #tpu.memory_space<smem>>
    %c0_108 = arith.constant 0 : index
    %c2_109 = arith.constant 2 : index
    %58 = memref.load %arg3[%c0_108, %c2_109] : memref<8x8xf32, #tpu.memory_space<smem>>
    %c0_110 = arith.constant 0 : index
    %c3_111 = arith.constant 3 : index
    %59 = memref.load %arg3[%c0_110, %c3_111] : memref<8x8xf32, #tpu.memory_space<smem>>
    %c0_112 = arith.constant 0 : index
    %c4_113 = arith.constant 4 : index
    %60 = memref.load %arg3[%c0_112, %c4_113] : memref<8x8xf32, #tpu.memory_space<smem>>
    %c0_114 = arith.constant 0 : index
    %c5_115 = arith.constant 5 : index
    %61 = memref.load %arg3[%c0_114, %c5_115] : memref<8x8xf32, #tpu.memory_space<smem>>
    %c0_116 = arith.constant 0 : index
    %c6_117 = arith.constant 6 : index
    %62 = memref.load %arg3[%c0_116, %c6_117] : memref<8x8xf32, #tpu.memory_space<smem>>
    %c0_118 = arith.constant 0 : index
    %c7_119 = arith.constant 7 : index
    %63 = memref.load %arg3[%c0_118, %c7_119] : memref<8x8xf32, #tpu.memory_space<smem>>
    %c1_120 = arith.constant 1 : index
    %c0_121 = arith.constant 0 : index
    %64 = memref.load %arg3[%c1_120, %c0_121] : memref<8x8xf32, #tpu.memory_space<smem>>
    %c1_122 = arith.constant 1 : index
    %c1_123 = arith.constant 1 : index
    %65 = memref.load %arg3[%c1_122, %c1_123] : memref<8x8xf32, #tpu.memory_space<smem>>
    %c1_124 = arith.constant 1 : index
    %c2_125 = arith.constant 2 : index
    %66 = memref.load %arg3[%c1_124, %c2_125] : memref<8x8xf32, #tpu.memory_space<smem>>
    %c1_126 = arith.constant 1 : index
    %c3_127 = arith.constant 3 : index
    %67 = memref.load %arg3[%c1_126, %c3_127] : memref<8x8xf32, #tpu.memory_space<smem>>
    %c1_128 = arith.constant 1 : index
    %c4_129 = arith.constant 4 : index
    %68 = memref.load %arg3[%c1_128, %c4_129] : memref<8x8xf32, #tpu.memory_space<smem>>
    %c1_130 = arith.constant 1 : index
    %c5_131 = arith.constant 5 : index
    %69 = memref.load %arg3[%c1_130, %c5_131] : memref<8x8xf32, #tpu.memory_space<smem>>
    %c1_132 = arith.constant 1 : index
    %c6_133 = arith.constant 6 : index
    %70 = memref.load %arg3[%c1_132, %c6_133] : memref<8x8xf32, #tpu.memory_space<smem>>
    %c1_134 = arith.constant 1 : index
    %c7_135 = arith.constant 7 : index
    %71 = memref.load %arg3[%c1_134, %c7_135] : memref<8x8xf32, #tpu.memory_space<smem>>
    %c2_136 = arith.constant 2 : index
    %c0_137 = arith.constant 0 : index
    %72 = memref.load %arg3[%c2_136, %c0_137] : memref<8x8xf32, #tpu.memory_space<smem>>
    %c2_138 = arith.constant 2 : index
    %c1_139 = arith.constant 1 : index
    %73 = memref.load %arg3[%c2_138, %c1_139] : memref<8x8xf32, #tpu.memory_space<smem>>
    %c2_140 = arith.constant 2 : index
    %c2_141 = arith.constant 2 : index
    %74 = memref.load %arg3[%c2_140, %c2_141] : memref<8x8xf32, #tpu.memory_space<smem>>
    %c2_142 = arith.constant 2 : index
    %c3_143 = arith.constant 3 : index
    %75 = memref.load %arg3[%c2_142, %c3_143] : memref<8x8xf32, #tpu.memory_space<smem>>
    %c2_144 = arith.constant 2 : index
    %c4_145 = arith.constant 4 : index
    %76 = memref.load %arg3[%c2_144, %c4_145] : memref<8x8xf32, #tpu.memory_space<smem>>
    %c2_146 = arith.constant 2 : index
    %c5_147 = arith.constant 5 : index
    %77 = memref.load %arg3[%c2_146, %c5_147] : memref<8x8xf32, #tpu.memory_space<smem>>
    %c2_148 = arith.constant 2 : index
    %c6_149 = arith.constant 6 : index
    %78 = memref.load %arg3[%c2_148, %c6_149] : memref<8x8xf32, #tpu.memory_space<smem>>
    %c2_150 = arith.constant 2 : index
    %c7_151 = arith.constant 7 : index
    %79 = memref.load %arg3[%c2_150, %c7_151] : memref<8x8xf32, #tpu.memory_space<smem>>
    %c3_152 = arith.constant 3 : index
    %c0_153 = arith.constant 0 : index
    %80 = memref.load %arg3[%c3_152, %c0_153] : memref<8x8xf32, #tpu.memory_space<smem>>
    %c3_154 = arith.constant 3 : index
    %c1_155 = arith.constant 1 : index
    %81 = memref.load %arg3[%c3_154, %c1_155] : memref<8x8xf32, #tpu.memory_space<smem>>
    %c3_156 = arith.constant 3 : index
    %c2_157 = arith.constant 2 : index
    %82 = memref.load %arg3[%c3_156, %c2_157] : memref<8x8xf32, #tpu.memory_space<smem>>
    %c3_158 = arith.constant 3 : index
    %c3_159 = arith.constant 3 : index
    %83 = memref.load %arg3[%c3_158, %c3_159] : memref<8x8xf32, #tpu.memory_space<smem>>
    %c3_160 = arith.constant 3 : index
    %c4_161 = arith.constant 4 : index
    %84 = memref.load %arg3[%c3_160, %c4_161] : memref<8x8xf32, #tpu.memory_space<smem>>
    %c3_162 = arith.constant 3 : index
    %c5_163 = arith.constant 5 : index
    %85 = memref.load %arg3[%c3_162, %c5_163] : memref<8x8xf32, #tpu.memory_space<smem>>
    %c3_164 = arith.constant 3 : index
    %c6_165 = arith.constant 6 : index
    %86 = memref.load %arg3[%c3_164, %c6_165] : memref<8x8xf32, #tpu.memory_space<smem>>
    %c3_166 = arith.constant 3 : index
    %c7_167 = arith.constant 7 : index
    %87 = memref.load %arg3[%c3_166, %c7_167] : memref<8x8xf32, #tpu.memory_space<smem>>
    %c4_168 = arith.constant 4 : index
    %c0_169 = arith.constant 0 : index
    %88 = memref.load %arg3[%c4_168, %c0_169] : memref<8x8xf32, #tpu.memory_space<smem>>
    %c4_170 = arith.constant 4 : index
    %c1_171 = arith.constant 1 : index
    %89 = memref.load %arg3[%c4_170, %c1_171] : memref<8x8xf32, #tpu.memory_space<smem>>
    %c4_172 = arith.constant 4 : index
    %c2_173 = arith.constant 2 : index
    %90 = memref.load %arg3[%c4_172, %c2_173] : memref<8x8xf32, #tpu.memory_space<smem>>
    %c4_174 = arith.constant 4 : index
    %c3_175 = arith.constant 3 : index
    %91 = memref.load %arg3[%c4_174, %c3_175] : memref<8x8xf32, #tpu.memory_space<smem>>
    %c4_176 = arith.constant 4 : index
    %c4_177 = arith.constant 4 : index
    %92 = memref.load %arg3[%c4_176, %c4_177] : memref<8x8xf32, #tpu.memory_space<smem>>
    %c4_178 = arith.constant 4 : index
    %c5_179 = arith.constant 5 : index
    %93 = memref.load %arg3[%c4_178, %c5_179] : memref<8x8xf32, #tpu.memory_space<smem>>
    %c4_180 = arith.constant 4 : index
    %c6_181 = arith.constant 6 : index
    %94 = memref.load %arg3[%c4_180, %c6_181] : memref<8x8xf32, #tpu.memory_space<smem>>
    %c4_182 = arith.constant 4 : index
    %c7_183 = arith.constant 7 : index
    %95 = memref.load %arg3[%c4_182, %c7_183] : memref<8x8xf32, #tpu.memory_space<smem>>
    %c5_184 = arith.constant 5 : index
    %c0_185 = arith.constant 0 : index
    %96 = memref.load %arg3[%c5_184, %c0_185] : memref<8x8xf32, #tpu.memory_space<smem>>
    %c5_186 = arith.constant 5 : index
    %c1_187 = arith.constant 1 : index
    %97 = memref.load %arg3[%c5_186, %c1_187] : memref<8x8xf32, #tpu.memory_space<smem>>
    %c5_188 = arith.constant 5 : index
    %c2_189 = arith.constant 2 : index
    %98 = memref.load %arg3[%c5_188, %c2_189] : memref<8x8xf32, #tpu.memory_space<smem>>
    %c5_190 = arith.constant 5 : index
    %c3_191 = arith.constant 3 : index
    %99 = memref.load %arg3[%c5_190, %c3_191] : memref<8x8xf32, #tpu.memory_space<smem>>
    %c5_192 = arith.constant 5 : index
    %c4_193 = arith.constant 4 : index
    %100 = memref.load %arg3[%c5_192, %c4_193] : memref<8x8xf32, #tpu.memory_space<smem>>
    %c5_194 = arith.constant 5 : index
    %c5_195 = arith.constant 5 : index
    %101 = memref.load %arg3[%c5_194, %c5_195] : memref<8x8xf32, #tpu.memory_space<smem>>
    %c5_196 = arith.constant 5 : index
    %c6_197 = arith.constant 6 : index
    %102 = memref.load %arg3[%c5_196, %c6_197] : memref<8x8xf32, #tpu.memory_space<smem>>
    %c5_198 = arith.constant 5 : index
    %c7_199 = arith.constant 7 : index
    %103 = memref.load %arg3[%c5_198, %c7_199] : memref<8x8xf32, #tpu.memory_space<smem>>
    %c6_200 = arith.constant 6 : index
    %c0_201 = arith.constant 0 : index
    %104 = memref.load %arg3[%c6_200, %c0_201] : memref<8x8xf32, #tpu.memory_space<smem>>
    %c6_202 = arith.constant 6 : index
    %c1_203 = arith.constant 1 : index
    %105 = memref.load %arg3[%c6_202, %c1_203] : memref<8x8xf32, #tpu.memory_space<smem>>
    %c6_204 = arith.constant 6 : index
    %c2_205 = arith.constant 2 : index
    %106 = memref.load %arg3[%c6_204, %c2_205] : memref<8x8xf32, #tpu.memory_space<smem>>
    %c6_206 = arith.constant 6 : index
    %c3_207 = arith.constant 3 : index
    %107 = memref.load %arg3[%c6_206, %c3_207] : memref<8x8xf32, #tpu.memory_space<smem>>
    %c6_208 = arith.constant 6 : index
    %c4_209 = arith.constant 4 : index
    %108 = memref.load %arg3[%c6_208, %c4_209] : memref<8x8xf32, #tpu.memory_space<smem>>
    %c6_210 = arith.constant 6 : index
    %c5_211 = arith.constant 5 : index
    %109 = memref.load %arg3[%c6_210, %c5_211] : memref<8x8xf32, #tpu.memory_space<smem>>
    %c6_212 = arith.constant 6 : index
    %c6_213 = arith.constant 6 : index
    %110 = memref.load %arg3[%c6_212, %c6_213] : memref<8x8xf32, #tpu.memory_space<smem>>
    %c6_214 = arith.constant 6 : index
    %c7_215 = arith.constant 7 : index
    %111 = memref.load %arg3[%c6_214, %c7_215] : memref<8x8xf32, #tpu.memory_space<smem>>
    %c7_216 = arith.constant 7 : index
    %c0_217 = arith.constant 0 : index
    %112 = memref.load %arg3[%c7_216, %c0_217] : memref<8x8xf32, #tpu.memory_space<smem>>
    %c7_218 = arith.constant 7 : index
    %c1_219 = arith.constant 1 : index
    %113 = memref.load %arg3[%c7_218, %c1_219] : memref<8x8xf32, #tpu.memory_space<smem>>
    %c7_220 = arith.constant 7 : index
    %c2_221 = arith.constant 2 : index
    %114 = memref.load %arg3[%c7_220, %c2_221] : memref<8x8xf32, #tpu.memory_space<smem>>
    %c7_222 = arith.constant 7 : index
    %c3_223 = arith.constant 3 : index
    %115 = memref.load %arg3[%c7_222, %c3_223] : memref<8x8xf32, #tpu.memory_space<smem>>
    %c7_224 = arith.constant 7 : index
    %c4_225 = arith.constant 4 : index
    %116 = memref.load %arg3[%c7_224, %c4_225] : memref<8x8xf32, #tpu.memory_space<smem>>
    %c7_226 = arith.constant 7 : index
    %c5_227 = arith.constant 5 : index
    %117 = memref.load %arg3[%c7_226, %c5_227] : memref<8x8xf32, #tpu.memory_space<smem>>
    %c7_228 = arith.constant 7 : index
    %c6_229 = arith.constant 6 : index
    %118 = memref.load %arg3[%c7_228, %c6_229] : memref<8x8xf32, #tpu.memory_space<smem>>
    %c7_230 = arith.constant 7 : index
    %c7_231 = arith.constant 7 : index
    %119 = memref.load %arg3[%c7_230, %c7_231] : memref<8x8xf32, #tpu.memory_space<smem>>
    %c0_232 = arith.constant 0 : index
    %120 = memref.load %arg4[%c0_232] : memref<8xf32, #tpu.memory_space<smem>>
    %c1_233 = arith.constant 1 : index
    %121 = memref.load %arg4[%c1_233] : memref<8xf32, #tpu.memory_space<smem>>
    %c2_234 = arith.constant 2 : index
    %122 = memref.load %arg4[%c2_234] : memref<8xf32, #tpu.memory_space<smem>>
    %c3_235 = arith.constant 3 : index
    %123 = memref.load %arg4[%c3_235] : memref<8xf32, #tpu.memory_space<smem>>
    %c4_236 = arith.constant 4 : index
    %124 = memref.load %arg4[%c4_236] : memref<8xf32, #tpu.memory_space<smem>>
    %c5_237 = arith.constant 5 : index
    %125 = memref.load %arg4[%c5_237] : memref<8xf32, #tpu.memory_space<smem>>
    %c6_238 = arith.constant 6 : index
    %126 = memref.load %arg4[%c6_238] : memref<8xf32, #tpu.memory_space<smem>>
    %c7_239 = arith.constant 7 : index
    %127 = memref.load %arg4[%c7_239] : memref<8xf32, #tpu.memory_space<smem>>
    %c0_i32 = arith.constant 0 : i32
    %c16_i32 = arith.constant 16 : i32
    %128 = arith.muli %c0_i32, %c16_i32 : i32
    %129 = tpu.assume_multiple %128, 16 : i32
    %c0_240 = arith.constant 0 : index
    %130 = arith.index_cast %129 : i32 to index
    %c0_241 = arith.constant 0 : index
    %131 = vector.load %arg1[%c0_240, %130, %c0_241] : memref<4x32x134xf32, #tpu.memory_space<vmem>>, vector<1x16x134xf32>
    %132 = vector.shape_cast %131 : vector<1x16x134xf32> to vector<16x134xf32>
    %c1_242 = arith.constant 1 : index
    %133 = arith.index_cast %129 : i32 to index
    %c0_243 = arith.constant 0 : index
    %134 = vector.load %arg1[%c1_242, %133, %c0_243] : memref<4x32x134xf32, #tpu.memory_space<vmem>>, vector<1x16x134xf32>
    %135 = vector.shape_cast %134 : vector<1x16x134xf32> to vector<16x134xf32>
    %c2_244 = arith.constant 2 : index
    %136 = arith.index_cast %129 : i32 to index
    %c0_245 = arith.constant 0 : index
    %137 = vector.load %arg1[%c2_244, %136, %c0_245] : memref<4x32x134xf32, #tpu.memory_space<vmem>>, vector<1x16x134xf32>
    %138 = vector.shape_cast %137 : vector<1x16x134xf32> to vector<16x134xf32>
    %c3_246 = arith.constant 3 : index
    %139 = arith.index_cast %129 : i32 to index
    %c0_247 = arith.constant 0 : index
    %140 = vector.load %arg1[%c3_246, %139, %c0_247] : memref<4x32x134xf32, #tpu.memory_space<vmem>>, vector<1x16x134xf32>
    %141 = vector.shape_cast %140 : vector<1x16x134xf32> to vector<16x134xf32>
    %142 = vector.extract_strided_slice %132 {offsets = [0, 0], sizes = [16, 128], strides = [1, 1]} : vector<16x134xf32> to vector<16x128xf32>
    %143 = vector.broadcast %0 : f32 to vector<16x128xf32>
    %144 = arith.mulf %142, %143 : vector<16x128xf32>
    %145 = vector.extract_strided_slice %132 {offsets = [0, 1], sizes = [16, 128], strides = [1, 1]} : vector<16x134xf32> to vector<16x128xf32>
    %146 = vector.broadcast %1 : f32 to vector<16x128xf32>
    %147 = arith.mulf %145, %146 : vector<16x128xf32>
    %148 = arith.addf %144, %147 : vector<16x128xf32>
    %149 = vector.extract_strided_slice %132 {offsets = [0, 2], sizes = [16, 128], strides = [1, 1]} : vector<16x134xf32> to vector<16x128xf32>
    %150 = vector.broadcast %2 : f32 to vector<16x128xf32>
    %151 = arith.mulf %149, %150 : vector<16x128xf32>
    %152 = arith.addf %148, %151 : vector<16x128xf32>
    %153 = vector.extract_strided_slice %132 {offsets = [0, 3], sizes = [16, 128], strides = [1, 1]} : vector<16x134xf32> to vector<16x128xf32>
    %154 = vector.broadcast %3 : f32 to vector<16x128xf32>
    %155 = arith.mulf %153, %154 : vector<16x128xf32>
    %156 = arith.addf %152, %155 : vector<16x128xf32>
    %157 = vector.extract_strided_slice %132 {offsets = [0, 4], sizes = [16, 128], strides = [1, 1]} : vector<16x134xf32> to vector<16x128xf32>
    %158 = vector.broadcast %4 : f32 to vector<16x128xf32>
    %159 = arith.mulf %157, %158 : vector<16x128xf32>
    %160 = arith.addf %156, %159 : vector<16x128xf32>
    %161 = vector.extract_strided_slice %132 {offsets = [0, 5], sizes = [16, 128], strides = [1, 1]} : vector<16x134xf32> to vector<16x128xf32>
    %162 = vector.broadcast %5 : f32 to vector<16x128xf32>
    %163 = arith.mulf %161, %162 : vector<16x128xf32>
    %164 = arith.addf %160, %163 : vector<16x128xf32>
    %165 = vector.extract_strided_slice %132 {offsets = [0, 6], sizes = [16, 128], strides = [1, 1]} : vector<16x134xf32> to vector<16x128xf32>
    %166 = vector.broadcast %6 : f32 to vector<16x128xf32>
    %167 = arith.mulf %165, %166 : vector<16x128xf32>
    %168 = arith.addf %164, %167 : vector<16x128xf32>
    %169 = vector.extract_strided_slice %132 {offsets = [0, 0], sizes = [16, 128], strides = [1, 1]} : vector<16x134xf32> to vector<16x128xf32>
    %170 = vector.broadcast %7 : f32 to vector<16x128xf32>
    %171 = arith.mulf %169, %170 : vector<16x128xf32>
    %172 = vector.extract_strided_slice %132 {offsets = [0, 1], sizes = [16, 128], strides = [1, 1]} : vector<16x134xf32> to vector<16x128xf32>
    %173 = vector.broadcast %8 : f32 to vector<16x128xf32>
    %174 = arith.mulf %172, %173 : vector<16x128xf32>
    %175 = arith.addf %171, %174 : vector<16x128xf32>
    %176 = vector.extract_strided_slice %132 {offsets = [0, 2], sizes = [16, 128], strides = [1, 1]} : vector<16x134xf32> to vector<16x128xf32>
    %177 = vector.broadcast %9 : f32 to vector<16x128xf32>
    %178 = arith.mulf %176, %177 : vector<16x128xf32>
    %179 = arith.addf %175, %178 : vector<16x128xf32>
    %180 = vector.extract_strided_slice %132 {offsets = [0, 3], sizes = [16, 128], strides = [1, 1]} : vector<16x134xf32> to vector<16x128xf32>
    %181 = vector.broadcast %10 : f32 to vector<16x128xf32>
    %182 = arith.mulf %180, %181 : vector<16x128xf32>
    %183 = arith.addf %179, %182 : vector<16x128xf32>
    %184 = vector.extract_strided_slice %132 {offsets = [0, 4], sizes = [16, 128], strides = [1, 1]} : vector<16x134xf32> to vector<16x128xf32>
    %185 = vector.broadcast %11 : f32 to vector<16x128xf32>
    %186 = arith.mulf %184, %185 : vector<16x128xf32>
    %187 = arith.addf %183, %186 : vector<16x128xf32>
    %188 = vector.extract_strided_slice %132 {offsets = [0, 5], sizes = [16, 128], strides = [1, 1]} : vector<16x134xf32> to vector<16x128xf32>
    %189 = vector.broadcast %12 : f32 to vector<16x128xf32>
    %190 = arith.mulf %188, %189 : vector<16x128xf32>
    %191 = arith.addf %187, %190 : vector<16x128xf32>
    %192 = vector.extract_strided_slice %132 {offsets = [0, 6], sizes = [16, 128], strides = [1, 1]} : vector<16x134xf32> to vector<16x128xf32>
    %193 = vector.broadcast %13 : f32 to vector<16x128xf32>
    %194 = arith.mulf %192, %193 : vector<16x128xf32>
    %195 = arith.addf %191, %194 : vector<16x128xf32>
    %196 = vector.extract_strided_slice %135 {offsets = [0, 0], sizes = [16, 128], strides = [1, 1]} : vector<16x134xf32> to vector<16x128xf32>
    %197 = vector.broadcast %14 : f32 to vector<16x128xf32>
    %198 = arith.mulf %196, %197 : vector<16x128xf32>
    %199 = vector.extract_strided_slice %135 {offsets = [0, 1], sizes = [16, 128], strides = [1, 1]} : vector<16x134xf32> to vector<16x128xf32>
    %200 = vector.broadcast %15 : f32 to vector<16x128xf32>
    %201 = arith.mulf %199, %200 : vector<16x128xf32>
    %202 = arith.addf %198, %201 : vector<16x128xf32>
    %203 = vector.extract_strided_slice %135 {offsets = [0, 2], sizes = [16, 128], strides = [1, 1]} : vector<16x134xf32> to vector<16x128xf32>
    %204 = vector.broadcast %16 : f32 to vector<16x128xf32>
    %205 = arith.mulf %203, %204 : vector<16x128xf32>
    %206 = arith.addf %202, %205 : vector<16x128xf32>
    %207 = vector.extract_strided_slice %135 {offsets = [0, 3], sizes = [16, 128], strides = [1, 1]} : vector<16x134xf32> to vector<16x128xf32>
    %208 = vector.broadcast %17 : f32 to vector<16x128xf32>
    %209 = arith.mulf %207, %208 : vector<16x128xf32>
    %210 = arith.addf %206, %209 : vector<16x128xf32>
    %211 = vector.extract_strided_slice %135 {offsets = [0, 4], sizes = [16, 128], strides = [1, 1]} : vector<16x134xf32> to vector<16x128xf32>
    %212 = vector.broadcast %18 : f32 to vector<16x128xf32>
    %213 = arith.mulf %211, %212 : vector<16x128xf32>
    %214 = arith.addf %210, %213 : vector<16x128xf32>
    %215 = vector.extract_strided_slice %135 {offsets = [0, 5], sizes = [16, 128], strides = [1, 1]} : vector<16x134xf32> to vector<16x128xf32>
    %216 = vector.broadcast %19 : f32 to vector<16x128xf32>
    %217 = arith.mulf %215, %216 : vector<16x128xf32>
    %218 = arith.addf %214, %217 : vector<16x128xf32>
    %219 = vector.extract_strided_slice %135 {offsets = [0, 6], sizes = [16, 128], strides = [1, 1]} : vector<16x134xf32> to vector<16x128xf32>
    %220 = vector.broadcast %20 : f32 to vector<16x128xf32>
    %221 = arith.mulf %219, %220 : vector<16x128xf32>
    %222 = arith.addf %218, %221 : vector<16x128xf32>
    %223 = vector.extract_strided_slice %135 {offsets = [0, 0], sizes = [16, 128], strides = [1, 1]} : vector<16x134xf32> to vector<16x128xf32>
    %224 = vector.broadcast %21 : f32 to vector<16x128xf32>
    %225 = arith.mulf %223, %224 : vector<16x128xf32>
    %226 = vector.extract_strided_slice %135 {offsets = [0, 1], sizes = [16, 128], strides = [1, 1]} : vector<16x134xf32> to vector<16x128xf32>
    %227 = vector.broadcast %22 : f32 to vector<16x128xf32>
    %228 = arith.mulf %226, %227 : vector<16x128xf32>
    %229 = arith.addf %225, %228 : vector<16x128xf32>
    %230 = vector.extract_strided_slice %135 {offsets = [0, 2], sizes = [16, 128], strides = [1, 1]} : vector<16x134xf32> to vector<16x128xf32>
    %231 = vector.broadcast %23 : f32 to vector<16x128xf32>
    %232 = arith.mulf %230, %231 : vector<16x128xf32>
    %233 = arith.addf %229, %232 : vector<16x128xf32>
    %234 = vector.extract_strided_slice %135 {offsets = [0, 3], sizes = [16, 128], strides = [1, 1]} : vector<16x134xf32> to vector<16x128xf32>
    %235 = vector.broadcast %24 : f32 to vector<16x128xf32>
    %236 = arith.mulf %234, %235 : vector<16x128xf32>
    %237 = arith.addf %233, %236 : vector<16x128xf32>
    %238 = vector.extract_strided_slice %135 {offsets = [0, 4], sizes = [16, 128], strides = [1, 1]} : vector<16x134xf32> to vector<16x128xf32>
    %239 = vector.broadcast %25 : f32 to vector<16x128xf32>
    %240 = arith.mulf %238, %239 : vector<16x128xf32>
    %241 = arith.addf %237, %240 : vector<16x128xf32>
    %242 = vector.extract_strided_slice %135 {offsets = [0, 5], sizes = [16, 128], strides = [1, 1]} : vector<16x134xf32> to vector<16x128xf32>
    %243 = vector.broadcast %26 : f32 to vector<16x128xf32>
    %244 = arith.mulf %242, %243 : vector<16x128xf32>
    %245 = arith.addf %241, %244 : vector<16x128xf32>
    %246 = vector.extract_strided_slice %135 {offsets = [0, 6], sizes = [16, 128], strides = [1, 1]} : vector<16x134xf32> to vector<16x128xf32>
    %247 = vector.broadcast %27 : f32 to vector<16x128xf32>
    %248 = arith.mulf %246, %247 : vector<16x128xf32>
    %249 = arith.addf %245, %248 : vector<16x128xf32>
    %250 = vector.extract_strided_slice %138 {offsets = [0, 0], sizes = [16, 128], strides = [1, 1]} : vector<16x134xf32> to vector<16x128xf32>
    %251 = vector.broadcast %28 : f32 to vector<16x128xf32>
    %252 = arith.mulf %250, %251 : vector<16x128xf32>
    %253 = vector.extract_strided_slice %138 {offsets = [0, 1], sizes = [16, 128], strides = [1, 1]} : vector<16x134xf32> to vector<16x128xf32>
    %254 = vector.broadcast %29 : f32 to vector<16x128xf32>
    %255 = arith.mulf %253, %254 : vector<16x128xf32>
    %256 = arith.addf %252, %255 : vector<16x128xf32>
    %257 = vector.extract_strided_slice %138 {offsets = [0, 2], sizes = [16, 128], strides = [1, 1]} : vector<16x134xf32> to vector<16x128xf32>
    %258 = vector.broadcast %30 : f32 to vector<16x128xf32>
    %259 = arith.mulf %257, %258 : vector<16x128xf32>
    %260 = arith.addf %256, %259 : vector<16x128xf32>
    %261 = vector.extract_strided_slice %138 {offsets = [0, 3], sizes = [16, 128], strides = [1, 1]} : vector<16x134xf32> to vector<16x128xf32>
    %262 = vector.broadcast %31 : f32 to vector<16x128xf32>
    %263 = arith.mulf %261, %262 : vector<16x128xf32>
    %264 = arith.addf %260, %263 : vector<16x128xf32>
    %265 = vector.extract_strided_slice %138 {offsets = [0, 4], sizes = [16, 128], strides = [1, 1]} : vector<16x134xf32> to vector<16x128xf32>
    %266 = vector.broadcast %32 : f32 to vector<16x128xf32>
    %267 = arith.mulf %265, %266 : vector<16x128xf32>
    %268 = arith.addf %264, %267 : vector<16x128xf32>
    %269 = vector.extract_strided_slice %138 {offsets = [0, 5], sizes = [16, 128], strides = [1, 1]} : vector<16x134xf32> to vector<16x128xf32>
    %270 = vector.broadcast %33 : f32 to vector<16x128xf32>
    %271 = arith.mulf %269, %270 : vector<16x128xf32>
    %272 = arith.addf %268, %271 : vector<16x128xf32>
    %273 = vector.extract_strided_slice %138 {offsets = [0, 6], sizes = [16, 128], strides = [1, 1]} : vector<16x134xf32> to vector<16x128xf32>
    %274 = vector.broadcast %34 : f32 to vector<16x128xf32>
    %275 = arith.mulf %273, %274 : vector<16x128xf32>
    %276 = arith.addf %272, %275 : vector<16x128xf32>
    %277 = vector.extract_strided_slice %138 {offsets = [0, 0], sizes = [16, 128], strides = [1, 1]} : vector<16x134xf32> to vector<16x128xf32>
    %278 = vector.broadcast %35 : f32 to vector<16x128xf32>
    %279 = arith.mulf %277, %278 : vector<16x128xf32>
    %280 = vector.extract_strided_slice %138 {offsets = [0, 1], sizes = [16, 128], strides = [1, 1]} : vector<16x134xf32> to vector<16x128xf32>
    %281 = vector.broadcast %36 : f32 to vector<16x128xf32>
    %282 = arith.mulf %280, %281 : vector<16x128xf32>
    %283 = arith.addf %279, %282 : vector<16x128xf32>
    %284 = vector.extract_strided_slice %138 {offsets = [0, 2], sizes = [16, 128], strides = [1, 1]} : vector<16x134xf32> to vector<16x128xf32>
    %285 = vector.broadcast %37 : f32 to vector<16x128xf32>
    %286 = arith.mulf %284, %285 : vector<16x128xf32>
    %287 = arith.addf %283, %286 : vector<16x128xf32>
    %288 = vector.extract_strided_slice %138 {offsets = [0, 3], sizes = [16, 128], strides = [1, 1]} : vector<16x134xf32> to vector<16x128xf32>
    %289 = vector.broadcast %38 : f32 to vector<16x128xf32>
    %290 = arith.mulf %288, %289 : vector<16x128xf32>
    %291 = arith.addf %287, %290 : vector<16x128xf32>
    %292 = vector.extract_strided_slice %138 {offsets = [0, 4], sizes = [16, 128], strides = [1, 1]} : vector<16x134xf32> to vector<16x128xf32>
    %293 = vector.broadcast %39 : f32 to vector<16x128xf32>
    %294 = arith.mulf %292, %293 : vector<16x128xf32>
    %295 = arith.addf %291, %294 : vector<16x128xf32>
    %296 = vector.extract_strided_slice %138 {offsets = [0, 5], sizes = [16, 128], strides = [1, 1]} : vector<16x134xf32> to vector<16x128xf32>
    %297 = vector.broadcast %40 : f32 to vector<16x128xf32>
    %298 = arith.mulf %296, %297 : vector<16x128xf32>
    %299 = arith.addf %295, %298 : vector<16x128xf32>
    %300 = vector.extract_strided_slice %138 {offsets = [0, 6], sizes = [16, 128], strides = [1, 1]} : vector<16x134xf32> to vector<16x128xf32>
    %301 = vector.broadcast %41 : f32 to vector<16x128xf32>
    %302 = arith.mulf %300, %301 : vector<16x128xf32>
    %303 = arith.addf %299, %302 : vector<16x128xf32>
    %304 = vector.extract_strided_slice %141 {offsets = [0, 0], sizes = [16, 128], strides = [1, 1]} : vector<16x134xf32> to vector<16x128xf32>
    %305 = vector.broadcast %42 : f32 to vector<16x128xf32>
    %306 = arith.mulf %304, %305 : vector<16x128xf32>
    %307 = vector.extract_strided_slice %141 {offsets = [0, 1], sizes = [16, 128], strides = [1, 1]} : vector<16x134xf32> to vector<16x128xf32>
    %308 = vector.broadcast %43 : f32 to vector<16x128xf32>
    %309 = arith.mulf %307, %308 : vector<16x128xf32>
    %310 = arith.addf %306, %309 : vector<16x128xf32>
    %311 = vector.extract_strided_slice %141 {offsets = [0, 2], sizes = [16, 128], strides = [1, 1]} : vector<16x134xf32> to vector<16x128xf32>
    %312 = vector.broadcast %44 : f32 to vector<16x128xf32>
    %313 = arith.mulf %311, %312 : vector<16x128xf32>
    %314 = arith.addf %310, %313 : vector<16x128xf32>
    %315 = vector.extract_strided_slice %141 {offsets = [0, 3], sizes = [16, 128], strides = [1, 1]} : vector<16x134xf32> to vector<16x128xf32>
    %316 = vector.broadcast %45 : f32 to vector<16x128xf32>
    %317 = arith.mulf %315, %316 : vector<16x128xf32>
    %318 = arith.addf %314, %317 : vector<16x128xf32>
    %319 = vector.extract_strided_slice %141 {offsets = [0, 4], sizes = [16, 128], strides = [1, 1]} : vector<16x134xf32> to vector<16x128xf32>
    %320 = vector.broadcast %46 : f32 to vector<16x128xf32>
    %321 = arith.mulf %319, %320 : vector<16x128xf32>
    %322 = arith.addf %318, %321 : vector<16x128xf32>
    %323 = vector.extract_strided_slice %141 {offsets = [0, 5], sizes = [16, 128], strides = [1, 1]} : vector<16x134xf32> to vector<16x128xf32>
    %324 = vector.broadcast %47 : f32 to vector<16x128xf32>
    %325 = arith.mulf %323, %324 : vector<16x128xf32>
    %326 = arith.addf %322, %325 : vector<16x128xf32>
    %327 = vector.extract_strided_slice %141 {offsets = [0, 6], sizes = [16, 128], strides = [1, 1]} : vector<16x134xf32> to vector<16x128xf32>
    %328 = vector.broadcast %48 : f32 to vector<16x128xf32>
    %329 = arith.mulf %327, %328 : vector<16x128xf32>
    %330 = arith.addf %326, %329 : vector<16x128xf32>
    %331 = vector.extract_strided_slice %141 {offsets = [0, 0], sizes = [16, 128], strides = [1, 1]} : vector<16x134xf32> to vector<16x128xf32>
    %332 = vector.broadcast %49 : f32 to vector<16x128xf32>
    %333 = arith.mulf %331, %332 : vector<16x128xf32>
    %334 = vector.extract_strided_slice %141 {offsets = [0, 1], sizes = [16, 128], strides = [1, 1]} : vector<16x134xf32> to vector<16x128xf32>
    %335 = vector.broadcast %50 : f32 to vector<16x128xf32>
    %336 = arith.mulf %334, %335 : vector<16x128xf32>
    %337 = arith.addf %333, %336 : vector<16x128xf32>
    %338 = vector.extract_strided_slice %141 {offsets = [0, 2], sizes = [16, 128], strides = [1, 1]} : vector<16x134xf32> to vector<16x128xf32>
    %339 = vector.broadcast %51 : f32 to vector<16x128xf32>
    %340 = arith.mulf %338, %339 : vector<16x128xf32>
    %341 = arith.addf %337, %340 : vector<16x128xf32>
    %342 = vector.extract_strided_slice %141 {offsets = [0, 3], sizes = [16, 128], strides = [1, 1]} : vector<16x134xf32> to vector<16x128xf32>
    %343 = vector.broadcast %52 : f32 to vector<16x128xf32>
    %344 = arith.mulf %342, %343 : vector<16x128xf32>
    %345 = arith.addf %341, %344 : vector<16x128xf32>
    %346 = vector.extract_strided_slice %141 {offsets = [0, 4], sizes = [16, 128], strides = [1, 1]} : vector<16x134xf32> to vector<16x128xf32>
    %347 = vector.broadcast %53 : f32 to vector<16x128xf32>
    %348 = arith.mulf %346, %347 : vector<16x128xf32>
    %349 = arith.addf %345, %348 : vector<16x128xf32>
    %350 = vector.extract_strided_slice %141 {offsets = [0, 5], sizes = [16, 128], strides = [1, 1]} : vector<16x134xf32> to vector<16x128xf32>
    %351 = vector.broadcast %54 : f32 to vector<16x128xf32>
    %352 = arith.mulf %350, %351 : vector<16x128xf32>
    %353 = arith.addf %349, %352 : vector<16x128xf32>
    %354 = vector.extract_strided_slice %141 {offsets = [0, 6], sizes = [16, 128], strides = [1, 1]} : vector<16x134xf32> to vector<16x128xf32>
    %355 = vector.broadcast %55 : f32 to vector<16x128xf32>
    %356 = arith.mulf %354, %355 : vector<16x128xf32>
    %357 = arith.addf %353, %356 : vector<16x128xf32>
    %358 = vector.broadcast %56 : f32 to vector<16x128xf32>
    %359 = arith.mulf %168, %358 : vector<16x128xf32>
    %360 = vector.broadcast %57 : f32 to vector<16x128xf32>
    %361 = arith.mulf %195, %360 : vector<16x128xf32>
    %362 = arith.addf %359, %361 : vector<16x128xf32>
    %363 = vector.broadcast %58 : f32 to vector<16x128xf32>
    %364 = arith.mulf %222, %363 : vector<16x128xf32>
    %365 = arith.addf %362, %364 : vector<16x128xf32>
    %366 = vector.broadcast %59 : f32 to vector<16x128xf32>
    %367 = arith.mulf %249, %366 : vector<16x128xf32>
    %368 = arith.addf %365, %367 : vector<16x128xf32>
    %369 = vector.broadcast %60 : f32 to vector<16x128xf32>
    %370 = arith.mulf %276, %369 : vector<16x128xf32>
    %371 = arith.addf %368, %370 : vector<16x128xf32>
    %372 = vector.broadcast %61 : f32 to vector<16x128xf32>
    %373 = arith.mulf %303, %372 : vector<16x128xf32>
    %374 = arith.addf %371, %373 : vector<16x128xf32>
    %375 = vector.broadcast %62 : f32 to vector<16x128xf32>
    %376 = arith.mulf %330, %375 : vector<16x128xf32>
    %377 = arith.addf %374, %376 : vector<16x128xf32>
    %378 = vector.broadcast %63 : f32 to vector<16x128xf32>
    %379 = arith.mulf %357, %378 : vector<16x128xf32>
    %380 = arith.addf %377, %379 : vector<16x128xf32>
    %381 = vector.broadcast %120 : f32 to vector<16x128xf32>
    %382 = arith.addf %380, %381 : vector<16x128xf32>
    %c0_248 = arith.constant 0 : index
    %383 = arith.index_cast %129 : i32 to index
    %c0_249 = arith.constant 0 : index
    %384 = vector.load %arg5[%c0_248, %383, %c0_249] : memref<8x32x128xf32, #tpu.memory_space<vmem>>, vector<1x16x128xf32>
    %385 = vector.shape_cast %384 : vector<1x16x128xf32> to vector<16x128xf32>
    %386 = vector.shape_cast %382 : vector<16x128xf32> to vector<1x16x128xf32>
    tpu.vector_store %arg5[%c0_248, %383, %c0_249], %386 {strides = array<i32>} : memref<8x32x128xf32, #tpu.memory_space<vmem>>, vector<1x16x128xf32>,
    %387 = vector.broadcast %64 : f32 to vector<16x128xf32>
    %388 = arith.mulf %168, %387 : vector<16x128xf32>
    %389 = vector.broadcast %65 : f32 to vector<16x128xf32>
    %390 = arith.mulf %195, %389 : vector<16x128xf32>
    %391 = arith.addf %388, %390 : vector<16x128xf32>
    %392 = vector.broadcast %66 : f32 to vector<16x128xf32>
    %393 = arith.mulf %222, %392 : vector<16x128xf32>
    %394 = arith.addf %391, %393 : vector<16x128xf32>
    %395 = vector.broadcast %67 : f32 to vector<16x128xf32>
    %396 = arith.mulf %249, %395 : vector<16x128xf32>
    %397 = arith.addf %394, %396 : vector<16x128xf32>
    %398 = vector.broadcast %68 : f32 to vector<16x128xf32>
    %399 = arith.mulf %276, %398 : vector<16x128xf32>
    %400 = arith.addf %397, %399 : vector<16x128xf32>
    %401 = vector.broadcast %69 : f32 to vector<16x128xf32>
    %402 = arith.mulf %303, %401 : vector<16x128xf32>
    %403 = arith.addf %400, %402 : vector<16x128xf32>
    %404 = vector.broadcast %70 : f32 to vector<16x128xf32>
    %405 = arith.mulf %330, %404 : vector<16x128xf32>
    %406 = arith.addf %403, %405 : vector<16x128xf32>
    %407 = vector.broadcast %71 : f32 to vector<16x128xf32>
    %408 = arith.mulf %357, %407 : vector<16x128xf32>
    %409 = arith.addf %406, %408 : vector<16x128xf32>
    %410 = vector.broadcast %121 : f32 to vector<16x128xf32>
    %411 = arith.addf %409, %410 : vector<16x128xf32>
    %c1_250 = arith.constant 1 : index
    %412 = arith.index_cast %129 : i32 to index
    %c0_251 = arith.constant 0 : index
    %413 = vector.load %arg5[%c1_250, %412, %c0_251] : memref<8x32x128xf32, #tpu.memory_space<vmem>>, vector<1x16x128xf32>
    %414 = vector.shape_cast %413 : vector<1x16x128xf32> to vector<16x128xf32>
    %415 = vector.shape_cast %411 : vector<16x128xf32> to vector<1x16x128xf32>
    tpu.vector_store %arg5[%c1_250, %412, %c0_251], %415 {strides = array<i32>} : memref<8x32x128xf32, #tpu.memory_space<vmem>>, vector<1x16x128xf32>,
    %416 = vector.broadcast %72 : f32 to vector<16x128xf32>
    %417 = arith.mulf %168, %416 : vector<16x128xf32>
    %418 = vector.broadcast %73 : f32 to vector<16x128xf32>
    %419 = arith.mulf %195, %418 : vector<16x128xf32>
    %420 = arith.addf %417, %419 : vector<16x128xf32>
    %421 = vector.broadcast %74 : f32 to vector<16x128xf32>
    %422 = arith.mulf %222, %421 : vector<16x128xf32>
    %423 = arith.addf %420, %422 : vector<16x128xf32>
    %424 = vector.broadcast %75 : f32 to vector<16x128xf32>
    %425 = arith.mulf %249, %424 : vector<16x128xf32>
    %426 = arith.addf %423, %425 : vector<16x128xf32>
    %427 = vector.broadcast %76 : f32 to vector<16x128xf32>
    %428 = arith.mulf %276, %427 : vector<16x128xf32>
    %429 = arith.addf %426, %428 : vector<16x128xf32>
    %430 = vector.broadcast %77 : f32 to vector<16x128xf32>
    %431 = arith.mulf %303, %430 : vector<16x128xf32>
    %432 = arith.addf %429, %431 : vector<16x128xf32>
    %433 = vector.broadcast %78 : f32 to vector<16x128xf32>
    %434 = arith.mulf %330, %433 : vector<16x128xf32>
    %435 = arith.addf %432, %434 : vector<16x128xf32>
    %436 = vector.broadcast %79 : f32 to vector<16x128xf32>
    %437 = arith.mulf %357, %436 : vector<16x128xf32>
    %438 = arith.addf %435, %437 : vector<16x128xf32>
    %439 = vector.broadcast %122 : f32 to vector<16x128xf32>
    %440 = arith.addf %438, %439 : vector<16x128xf32>
    %c2_252 = arith.constant 2 : index
    %441 = arith.index_cast %129 : i32 to index
    %c0_253 = arith.constant 0 : index
    %442 = vector.load %arg5[%c2_252, %441, %c0_253] : memref<8x32x128xf32, #tpu.memory_space<vmem>>, vector<1x16x128xf32>
    %443 = vector.shape_cast %442 : vector<1x16x128xf32> to vector<16x128xf32>
    %444 = vector.shape_cast %440 : vector<16x128xf32> to vector<1x16x128xf32>
    tpu.vector_store %arg5[%c2_252, %441, %c0_253], %444 {strides = array<i32>} : memref<8x32x128xf32, #tpu.memory_space<vmem>>, vector<1x16x128xf32>,
    %445 = vector.broadcast %80 : f32 to vector<16x128xf32>
    %446 = arith.mulf %168, %445 : vector<16x128xf32>
    %447 = vector.broadcast %81 : f32 to vector<16x128xf32>
    %448 = arith.mulf %195, %447 : vector<16x128xf32>
    %449 = arith.addf %446, %448 : vector<16x128xf32>
    %450 = vector.broadcast %82 : f32 to vector<16x128xf32>
    %451 = arith.mulf %222, %450 : vector<16x128xf32>
    %452 = arith.addf %449, %451 : vector<16x128xf32>
    %453 = vector.broadcast %83 : f32 to vector<16x128xf32>
    %454 = arith.mulf %249, %453 : vector<16x128xf32>
    %455 = arith.addf %452, %454 : vector<16x128xf32>
    %456 = vector.broadcast %84 : f32 to vector<16x128xf32>
    %457 = arith.mulf %276, %456 : vector<16x128xf32>
    %458 = arith.addf %455, %457 : vector<16x128xf32>
    %459 = vector.broadcast %85 : f32 to vector<16x128xf32>
    %460 = arith.mulf %303, %459 : vector<16x128xf32>
    %461 = arith.addf %458, %460 : vector<16x128xf32>
    %462 = vector.broadcast %86 : f32 to vector<16x128xf32>
    %463 = arith.mulf %330, %462 : vector<16x128xf32>
    %464 = arith.addf %461, %463 : vector<16x128xf32>
    %465 = vector.broadcast %87 : f32 to vector<16x128xf32>
    %466 = arith.mulf %357, %465 : vector<16x128xf32>
    %467 = arith.addf %464, %466 : vector<16x128xf32>
    %468 = vector.broadcast %123 : f32 to vector<16x128xf32>
    %469 = arith.addf %467, %468 : vector<16x128xf32>
    %c3_254 = arith.constant 3 : index
    %470 = arith.index_cast %129 : i32 to index
    %c0_255 = arith.constant 0 : index
    %471 = vector.load %arg5[%c3_254, %470, %c0_255] : memref<8x32x128xf32, #tpu.memory_space<vmem>>, vector<1x16x128xf32>
    %472 = vector.shape_cast %471 : vector<1x16x128xf32> to vector<16x128xf32>
    %473 = vector.shape_cast %469 : vector<16x128xf32> to vector<1x16x128xf32>
    tpu.vector_store %arg5[%c3_254, %470, %c0_255], %473 {strides = array<i32>} : memref<8x32x128xf32, #tpu.memory_space<vmem>>, vector<1x16x128xf32>,
    %474 = vector.broadcast %88 : f32 to vector<16x128xf32>
    %475 = arith.mulf %168, %474 : vector<16x128xf32>
    %476 = vector.broadcast %89 : f32 to vector<16x128xf32>
    %477 = arith.mulf %195, %476 : vector<16x128xf32>
    %478 = arith.addf %475, %477 : vector<16x128xf32>
    %479 = vector.broadcast %90 : f32 to vector<16x128xf32>
    %480 = arith.mulf %222, %479 : vector<16x128xf32>
    %481 = arith.addf %478, %480 : vector<16x128xf32>
    %482 = vector.broadcast %91 : f32 to vector<16x128xf32>
    %483 = arith.mulf %249, %482 : vector<16x128xf32>
    %484 = arith.addf %481, %483 : vector<16x128xf32>
    %485 = vector.broadcast %92 : f32 to vector<16x128xf32>
    %486 = arith.mulf %276, %485 : vector<16x128xf32>
    %487 = arith.addf %484, %486 : vector<16x128xf32>
    %488 = vector.broadcast %93 : f32 to vector<16x128xf32>
    %489 = arith.mulf %303, %488 : vector<16x128xf32>
    %490 = arith.addf %487, %489 : vector<16x128xf32>
    %491 = vector.broadcast %94 : f32 to vector<16x128xf32>
    %492 = arith.mulf %330, %491 : vector<16x128xf32>
    %493 = arith.addf %490, %492 : vector<16x128xf32>
    %494 = vector.broadcast %95 : f32 to vector<16x128xf32>
    %495 = arith.mulf %357, %494 : vector<16x128xf32>
    %496 = arith.addf %493, %495 : vector<16x128xf32>
    %497 = vector.broadcast %124 : f32 to vector<16x128xf32>
    %498 = arith.addf %496, %497 : vector<16x128xf32>
    %c4_256 = arith.constant 4 : index
    %499 = arith.index_cast %129 : i32 to index
    %c0_257 = arith.constant 0 : index
    %500 = vector.load %arg5[%c4_256, %499, %c0_257] : memref<8x32x128xf32, #tpu.memory_space<vmem>>, vector<1x16x128xf32>
    %501 = vector.shape_cast %500 : vector<1x16x128xf32> to vector<16x128xf32>
    %502 = vector.shape_cast %498 : vector<16x128xf32> to vector<1x16x128xf32>
    tpu.vector_store %arg5[%c4_256, %499, %c0_257], %502 {strides = array<i32>} : memref<8x32x128xf32, #tpu.memory_space<vmem>>, vector<1x16x128xf32>,
    %503 = vector.broadcast %96 : f32 to vector<16x128xf32>
    %504 = arith.mulf %168, %503 : vector<16x128xf32>
    %505 = vector.broadcast %97 : f32 to vector<16x128xf32>
    %506 = arith.mulf %195, %505 : vector<16x128xf32>
    %507 = arith.addf %504, %506 : vector<16x128xf32>
    %508 = vector.broadcast %98 : f32 to vector<16x128xf32>
    %509 = arith.mulf %222, %508 : vector<16x128xf32>
    %510 = arith.addf %507, %509 : vector<16x128xf32>
    %511 = vector.broadcast %99 : f32 to vector<16x128xf32>
    %512 = arith.mulf %249, %511 : vector<16x128xf32>
    %513 = arith.addf %510, %512 : vector<16x128xf32>
    %514 = vector.broadcast %100 : f32 to vector<16x128xf32>
    %515 = arith.mulf %276, %514 : vector<16x128xf32>
    %516 = arith.addf %513, %515 : vector<16x128xf32>
    %517 = vector.broadcast %101 : f32 to vector<16x128xf32>
    %518 = arith.mulf %303, %517 : vector<16x128xf32>
    %519 = arith.addf %516, %518 : vector<16x128xf32>
    %520 = vector.broadcast %102 : f32 to vector<16x128xf32>
    %521 = arith.mulf %330, %520 : vector<16x128xf32>
    %522 = arith.addf %519, %521 : vector<16x128xf32>
    %523 = vector.broadcast %103 : f32 to vector<16x128xf32>
    %524 = arith.mulf %357, %523 : vector<16x128xf32>
    %525 = arith.addf %522, %524 : vector<16x128xf32>
    %526 = vector.broadcast %125 : f32 to vector<16x128xf32>
    %527 = arith.addf %525, %526 : vector<16x128xf32>
    %c5_258 = arith.constant 5 : index
    %528 = arith.index_cast %129 : i32 to index
    %c0_259 = arith.constant 0 : index
    %529 = vector.load %arg5[%c5_258, %528, %c0_259] : memref<8x32x128xf32, #tpu.memory_space<vmem>>, vector<1x16x128xf32>
    %530 = vector.shape_cast %529 : vector<1x16x128xf32> to vector<16x128xf32>
    %531 = vector.shape_cast %527 : vector<16x128xf32> to vector<1x16x128xf32>
    tpu.vector_store %arg5[%c5_258, %528, %c0_259], %531 {strides = array<i32>} : memref<8x32x128xf32, #tpu.memory_space<vmem>>, vector<1x16x128xf32>,
    %532 = vector.broadcast %104 : f32 to vector<16x128xf32>
    %533 = arith.mulf %168, %532 : vector<16x128xf32>
    %534 = vector.broadcast %105 : f32 to vector<16x128xf32>
    %535 = arith.mulf %195, %534 : vector<16x128xf32>
    %536 = arith.addf %533, %535 : vector<16x128xf32>
    %537 = vector.broadcast %106 : f32 to vector<16x128xf32>
    %538 = arith.mulf %222, %537 : vector<16x128xf32>
    %539 = arith.addf %536, %538 : vector<16x128xf32>
    %540 = vector.broadcast %107 : f32 to vector<16x128xf32>
    %541 = arith.mulf %249, %540 : vector<16x128xf32>
    %542 = arith.addf %539, %541 : vector<16x128xf32>
    %543 = vector.broadcast %108 : f32 to vector<16x128xf32>
    %544 = arith.mulf %276, %543 : vector<16x128xf32>
    %545 = arith.addf %542, %544 : vector<16x128xf32>
    %546 = vector.broadcast %109 : f32 to vector<16x128xf32>
    %547 = arith.mulf %303, %546 : vector<16x128xf32>
    %548 = arith.addf %545, %547 : vector<16x128xf32>
    %549 = vector.broadcast %110 : f32 to vector<16x128xf32>
    %550 = arith.mulf %330, %549 : vector<16x128xf32>
    %551 = arith.addf %548, %550 : vector<16x128xf32>
    %552 = vector.broadcast %111 : f32 to vector<16x128xf32>
    %553 = arith.mulf %357, %552 : vector<16x128xf32>
    %554 = arith.addf %551, %553 : vector<16x128xf32>
    %555 = vector.broadcast %126 : f32 to vector<16x128xf32>
    %556 = arith.addf %554, %555 : vector<16x128xf32>
    %c6_260 = arith.constant 6 : index
    %557 = arith.index_cast %129 : i32 to index
    %c0_261 = arith.constant 0 : index
    %558 = vector.load %arg5[%c6_260, %557, %c0_261] : memref<8x32x128xf32, #tpu.memory_space<vmem>>, vector<1x16x128xf32>
    %559 = vector.shape_cast %558 : vector<1x16x128xf32> to vector<16x128xf32>
    %560 = vector.shape_cast %556 : vector<16x128xf32> to vector<1x16x128xf32>
    tpu.vector_store %arg5[%c6_260, %557, %c0_261], %560 {strides = array<i32>} : memref<8x32x128xf32, #tpu.memory_space<vmem>>, vector<1x16x128xf32>,
    %561 = vector.broadcast %112 : f32 to vector<16x128xf32>
    %562 = arith.mulf %168, %561 : vector<16x128xf32>
    %563 = vector.broadcast %113 : f32 to vector<16x128xf32>
    %564 = arith.mulf %195, %563 : vector<16x128xf32>
    %565 = arith.addf %562, %564 : vector<16x128xf32>
    %566 = vector.broadcast %114 : f32 to vector<16x128xf32>
    %567 = arith.mulf %222, %566 : vector<16x128xf32>
    %568 = arith.addf %565, %567 : vector<16x128xf32>
    %569 = vector.broadcast %115 : f32 to vector<16x128xf32>
    %570 = arith.mulf %249, %569 : vector<16x128xf32>
    %571 = arith.addf %568, %570 : vector<16x128xf32>
    %572 = vector.broadcast %116 : f32 to vector<16x128xf32>
    %573 = arith.mulf %276, %572 : vector<16x128xf32>
    %574 = arith.addf %571, %573 : vector<16x128xf32>
    %575 = vector.broadcast %117 : f32 to vector<16x128xf32>
    %576 = arith.mulf %303, %575 : vector<16x128xf32>
    %577 = arith.addf %574, %576 : vector<16x128xf32>
    %578 = vector.broadcast %118 : f32 to vector<16x128xf32>
    %579 = arith.mulf %330, %578 : vector<16x128xf32>
    %580 = arith.addf %577, %579 : vector<16x128xf32>
    %581 = vector.broadcast %119 : f32 to vector<16x128xf32>
    %582 = arith.mulf %357, %581 : vector<16x128xf32>
    %583 = arith.addf %580, %582 : vector<16x128xf32>
    %584 = vector.broadcast %127 : f32 to vector<16x128xf32>
    %585 = arith.addf %583, %584 : vector<16x128xf32>
    %c7_262 = arith.constant 7 : index
    %586 = arith.index_cast %129 : i32 to index
    %c0_263 = arith.constant 0 : index
    %587 = vector.load %arg5[%c7_262, %586, %c0_263] : memref<8x32x128xf32, #tpu.memory_space<vmem>>, vector<1x16x128xf32>
    %588 = vector.shape_cast %587 : vector<1x16x128xf32> to vector<16x128xf32>
    %589 = vector.shape_cast %585 : vector<16x128xf32> to vector<1x16x128xf32>
    tpu.vector_store %arg5[%c7_262, %586, %c0_263], %589 {strides = array<i32>} : memref<8x32x128xf32, #tpu.memory_space<vmem>>, vector<1x16x128xf32>,
    %c1_i32 = arith.constant 1 : i32
    %c16_i32_264 = arith.constant 16 : i32
    %590 = arith.muli %c1_i32, %c16_i32_264 : i32
    %591 = tpu.assume_multiple %590, 16 : i32
    %c0_265 = arith.constant 0 : index
    %592 = arith.index_cast %591 : i32 to index
    %c0_266 = arith.constant 0 : index
    %593 = vector.load %arg1[%c0_265, %592, %c0_266] : memref<4x32x134xf32, #tpu.memory_space<vmem>>, vector<1x16x134xf32>
    %594 = vector.shape_cast %593 : vector<1x16x134xf32> to vector<16x134xf32>
    %c1_267 = arith.constant 1 : index
    %595 = arith.index_cast %591 : i32 to index
    %c0_268 = arith.constant 0 : index
    %596 = vector.load %arg1[%c1_267, %595, %c0_268] : memref<4x32x134xf32, #tpu.memory_space<vmem>>, vector<1x16x134xf32>
    %597 = vector.shape_cast %596 : vector<1x16x134xf32> to vector<16x134xf32>
    %c2_269 = arith.constant 2 : index
    %598 = arith.index_cast %591 : i32 to index
    %c0_270 = arith.constant 0 : index
    %599 = vector.load %arg1[%c2_269, %598, %c0_270] : memref<4x32x134xf32, #tpu.memory_space<vmem>>, vector<1x16x134xf32>
    %600 = vector.shape_cast %599 : vector<1x16x134xf32> to vector<16x134xf32>
    %c3_271 = arith.constant 3 : index
    %601 = arith.index_cast %591 : i32 to index
    %c0_272 = arith.constant 0 : index
    %602 = vector.load %arg1[%c3_271, %601, %c0_272] : memref<4x32x134xf32, #tpu.memory_space<vmem>>, vector<1x16x134xf32>
    %603 = vector.shape_cast %602 : vector<1x16x134xf32> to vector<16x134xf32>
    %604 = vector.extract_strided_slice %594 {offsets = [0, 0], sizes = [16, 128], strides = [1, 1]} : vector<16x134xf32> to vector<16x128xf32>
    %605 = vector.broadcast %0 : f32 to vector<16x128xf32>
    %606 = arith.mulf %604, %605 : vector<16x128xf32>
    %607 = vector.extract_strided_slice %594 {offsets = [0, 1], sizes = [16, 128], strides = [1, 1]} : vector<16x134xf32> to vector<16x128xf32>
    %608 = vector.broadcast %1 : f32 to vector<16x128xf32>
    %609 = arith.mulf %607, %608 : vector<16x128xf32>
    %610 = arith.addf %606, %609 : vector<16x128xf32>
    %611 = vector.extract_strided_slice %594 {offsets = [0, 2], sizes = [16, 128], strides = [1, 1]} : vector<16x134xf32> to vector<16x128xf32>
    %612 = vector.broadcast %2 : f32 to vector<16x128xf32>
    %613 = arith.mulf %611, %612 : vector<16x128xf32>
    %614 = arith.addf %610, %613 : vector<16x128xf32>
    %615 = vector.extract_strided_slice %594 {offsets = [0, 3], sizes = [16, 128], strides = [1, 1]} : vector<16x134xf32> to vector<16x128xf32>
    %616 = vector.broadcast %3 : f32 to vector<16x128xf32>
    %617 = arith.mulf %615, %616 : vector<16x128xf32>
    %618 = arith.addf %614, %617 : vector<16x128xf32>
    %619 = vector.extract_strided_slice %594 {offsets = [0, 4], sizes = [16, 128], strides = [1, 1]} : vector<16x134xf32> to vector<16x128xf32>
    %620 = vector.broadcast %4 : f32 to vector<16x128xf32>
    %621 = arith.mulf %619, %620 : vector<16x128xf32>
    %622 = arith.addf %618, %621 : vector<16x128xf32>
    %623 = vector.extract_strided_slice %594 {offsets = [0, 5], sizes = [16, 128], strides = [1, 1]} : vector<16x134xf32> to vector<16x128xf32>
    %624 = vector.broadcast %5 : f32 to vector<16x128xf32>
    %625 = arith.mulf %623, %624 : vector<16x128xf32>
    %626 = arith.addf %622, %625 : vector<16x128xf32>
    %627 = vector.extract_strided_slice %594 {offsets = [0, 6], sizes = [16, 128], strides = [1, 1]} : vector<16x134xf32> to vector<16x128xf32>
    %628 = vector.broadcast %6 : f32 to vector<16x128xf32>
    %629 = arith.mulf %627, %628 : vector<16x128xf32>
    %630 = arith.addf %626, %629 : vector<16x128xf32>
    %631 = vector.extract_strided_slice %594 {offsets = [0, 0], sizes = [16, 128], strides = [1, 1]} : vector<16x134xf32> to vector<16x128xf32>
    %632 = vector.broadcast %7 : f32 to vector<16x128xf32>
    %633 = arith.mulf %631, %632 : vector<16x128xf32>
    %634 = vector.extract_strided_slice %594 {offsets = [0, 1], sizes = [16, 128], strides = [1, 1]} : vector<16x134xf32> to vector<16x128xf32>
    %635 = vector.broadcast %8 : f32 to vector<16x128xf32>
    %636 = arith.mulf %634, %635 : vector<16x128xf32>
    %637 = arith.addf %633, %636 : vector<16x128xf32>
    %638 = vector.extract_strided_slice %594 {offsets = [0, 2], sizes = [16, 128], strides = [1, 1]} : vector<16x134xf32> to vector<16x128xf32>
    %639 = vector.broadcast %9 : f32 to vector<16x128xf32>
    %640 = arith.mulf %638, %639 : vector<16x128xf32>
    %641 = arith.addf %637, %640 : vector<16x128xf32>
    %642 = vector.extract_strided_slice %594 {offsets = [0, 3], sizes = [16, 128], strides = [1, 1]} : vector<16x134xf32> to vector<16x128xf32>
    %643 = vector.broadcast %10 : f32 to vector<16x128xf32>
    %644 = arith.mulf %642, %643 : vector<16x128xf32>
    %645 = arith.addf %641, %644 : vector<16x128xf32>
    %646 = vector.extract_strided_slice %594 {offsets = [0, 4], sizes = [16, 128], strides = [1, 1]} : vector<16x134xf32> to vector<16x128xf32>
    %647 = vector.broadcast %11 : f32 to vector<16x128xf32>
    %648 = arith.mulf %646, %647 : vector<16x128xf32>
    %649 = arith.addf %645, %648 : vector<16x128xf32>
    %650 = vector.extract_strided_slice %594 {offsets = [0, 5], sizes = [16, 128], strides = [1, 1]} : vector<16x134xf32> to vector<16x128xf32>
    %651 = vector.broadcast %12 : f32 to vector<16x128xf32>
    %652 = arith.mulf %650, %651 : vector<16x128xf32>
    %653 = arith.addf %649, %652 : vector<16x128xf32>
    %654 = vector.extract_strided_slice %594 {offsets = [0, 6], sizes = [16, 128], strides = [1, 1]} : vector<16x134xf32> to vector<16x128xf32>
    %655 = vector.broadcast %13 : f32 to vector<16x128xf32>
    %656 = arith.mulf %654, %655 : vector<16x128xf32>
    %657 = arith.addf %653, %656 : vector<16x128xf32>
    %658 = vector.extract_strided_slice %597 {offsets = [0, 0], sizes = [16, 128], strides = [1, 1]} : vector<16x134xf32> to vector<16x128xf32>
    %659 = vector.broadcast %14 : f32 to vector<16x128xf32>
    %660 = arith.mulf %658, %659 : vector<16x128xf32>
    %661 = vector.extract_strided_slice %597 {offsets = [0, 1], sizes = [16, 128], strides = [1, 1]} : vector<16x134xf32> to vector<16x128xf32>
    %662 = vector.broadcast %15 : f32 to vector<16x128xf32>
    %663 = arith.mulf %661, %662 : vector<16x128xf32>
    %664 = arith.addf %660, %663 : vector<16x128xf32>
    %665 = vector.extract_strided_slice %597 {offsets = [0, 2], sizes = [16, 128], strides = [1, 1]} : vector<16x134xf32> to vector<16x128xf32>
    %666 = vector.broadcast %16 : f32 to vector<16x128xf32>
    %667 = arith.mulf %665, %666 : vector<16x128xf32>
    %668 = arith.addf %664, %667 : vector<16x128xf32>
    %669 = vector.extract_strided_slice %597 {offsets = [0, 3], sizes = [16, 128], strides = [1, 1]} : vector<16x134xf32> to vector<16x128xf32>
    %670 = vector.broadcast %17 : f32 to vector<16x128xf32>
    %671 = arith.mulf %669, %670 : vector<16x128xf32>
    %672 = arith.addf %668, %671 : vector<16x128xf32>
    %673 = vector.extract_strided_slice %597 {offsets = [0, 4], sizes = [16, 128], strides = [1, 1]} : vector<16x134xf32> to vector<16x128xf32>
    %674 = vector.broadcast %18 : f32 to vector<16x128xf32>
    %675 = arith.mulf %673, %674 : vector<16x128xf32>
    %676 = arith.addf %672, %675 : vector<16x128xf32>
    %677 = vector.extract_strided_slice %597 {offsets = [0, 5], sizes = [16, 128], strides = [1, 1]} : vector<16x134xf32> to vector<16x128xf32>
    %678 = vector.broadcast %19 : f32 to vector<16x128xf32>
    %679 = arith.mulf %677, %678 : vector<16x128xf32>
    %680 = arith.addf %676, %679 : vector<16x128xf32>
    %681 = vector.extract_strided_slice %597 {offsets = [0, 6], sizes = [16, 128], strides = [1, 1]} : vector<16x134xf32> to vector<16x128xf32>
    %682 = vector.broadcast %20 : f32 to vector<16x128xf32>
    %683 = arith.mulf %681, %682 : vector<16x128xf32>
    %684 = arith.addf %680, %683 : vector<16x128xf32>
    %685 = vector.extract_strided_slice %597 {offsets = [0, 0], sizes = [16, 128], strides = [1, 1]} : vector<16x134xf32> to vector<16x128xf32>
    %686 = vector.broadcast %21 : f32 to vector<16x128xf32>
    %687 = arith.mulf %685, %686 : vector<16x128xf32>
    %688 = vector.extract_strided_slice %597 {offsets = [0, 1], sizes = [16, 128], strides = [1, 1]} : vector<16x134xf32> to vector<16x128xf32>
    %689 = vector.broadcast %22 : f32 to vector<16x128xf32>
    %690 = arith.mulf %688, %689 : vector<16x128xf32>
    %691 = arith.addf %687, %690 : vector<16x128xf32>
    %692 = vector.extract_strided_slice %597 {offsets = [0, 2], sizes = [16, 128], strides = [1, 1]} : vector<16x134xf32> to vector<16x128xf32>
    %693 = vector.broadcast %23 : f32 to vector<16x128xf32>
    %694 = arith.mulf %692, %693 : vector<16x128xf32>
    %695 = arith.addf %691, %694 : vector<16x128xf32>
    %696 = vector.extract_strided_slice %597 {offsets = [0, 3], sizes = [16, 128], strides = [1, 1]} : vector<16x134xf32> to vector<16x128xf32>
    %697 = vector.broadcast %24 : f32 to vector<16x128xf32>
    %698 = arith.mulf %696, %697 : vector<16x128xf32>
    %699 = arith.addf %695, %698 : vector<16x128xf32>
    %700 = vector.extract_strided_slice %597 {offsets = [0, 4], sizes = [16, 128], strides = [1, 1]} : vector<16x134xf32> to vector<16x128xf32>
    %701 = vector.broadcast %25 : f32 to vector<16x128xf32>
    %702 = arith.mulf %700, %701 : vector<16x128xf32>
    %703 = arith.addf %699, %702 : vector<16x128xf32>
    %704 = vector.extract_strided_slice %597 {offsets = [0, 5], sizes = [16, 128], strides = [1, 1]} : vector<16x134xf32> to vector<16x128xf32>
    %705 = vector.broadcast %26 : f32 to vector<16x128xf32>
    %706 = arith.mulf %704, %705 : vector<16x128xf32>
    %707 = arith.addf %703, %706 : vector<16x128xf32>
    %708 = vector.extract_strided_slice %597 {offsets = [0, 6], sizes = [16, 128], strides = [1, 1]} : vector<16x134xf32> to vector<16x128xf32>
    %709 = vector.broadcast %27 : f32 to vector<16x128xf32>
    %710 = arith.mulf %708, %709 : vector<16x128xf32>
    %711 = arith.addf %707, %710 : vector<16x128xf32>
    %712 = vector.extract_strided_slice %600 {offsets = [0, 0], sizes = [16, 128], strides = [1, 1]} : vector<16x134xf32> to vector<16x128xf32>
    %713 = vector.broadcast %28 : f32 to vector<16x128xf32>
    %714 = arith.mulf %712, %713 : vector<16x128xf32>
    %715 = vector.extract_strided_slice %600 {offsets = [0, 1], sizes = [16, 128], strides = [1, 1]} : vector<16x134xf32> to vector<16x128xf32>
    %716 = vector.broadcast %29 : f32 to vector<16x128xf32>
    %717 = arith.mulf %715, %716 : vector<16x128xf32>
    %718 = arith.addf %714, %717 : vector<16x128xf32>
    %719 = vector.extract_strided_slice %600 {offsets = [0, 2], sizes = [16, 128], strides = [1, 1]} : vector<16x134xf32> to vector<16x128xf32>
    %720 = vector.broadcast %30 : f32 to vector<16x128xf32>
    %721 = arith.mulf %719, %720 : vector<16x128xf32>
    %722 = arith.addf %718, %721 : vector<16x128xf32>
    %723 = vector.extract_strided_slice %600 {offsets = [0, 3], sizes = [16, 128], strides = [1, 1]} : vector<16x134xf32> to vector<16x128xf32>
    %724 = vector.broadcast %31 : f32 to vector<16x128xf32>
    %725 = arith.mulf %723, %724 : vector<16x128xf32>
    %726 = arith.addf %722, %725 : vector<16x128xf32>
    %727 = vector.extract_strided_slice %600 {offsets = [0, 4], sizes = [16, 128], strides = [1, 1]} : vector<16x134xf32> to vector<16x128xf32>
    %728 = vector.broadcast %32 : f32 to vector<16x128xf32>
    %729 = arith.mulf %727, %728 : vector<16x128xf32>
    %730 = arith.addf %726, %729 : vector<16x128xf32>
    %731 = vector.extract_strided_slice %600 {offsets = [0, 5], sizes = [16, 128], strides = [1, 1]} : vector<16x134xf32> to vector<16x128xf32>
    %732 = vector.broadcast %33 : f32 to vector<16x128xf32>
    %733 = arith.mulf %731, %732 : vector<16x128xf32>
    %734 = arith.addf %730, %733 : vector<16x128xf32>
    %735 = vector.extract_strided_slice %600 {offsets = [0, 6], sizes = [16, 128], strides = [1, 1]} : vector<16x134xf32> to vector<16x128xf32>
    %736 = vector.broadcast %34 : f32 to vector<16x128xf32>
    %737 = arith.mulf %735, %736 : vector<16x128xf32>
    %738 = arith.addf %734, %737 : vector<16x128xf32>
    %739 = vector.extract_strided_slice %600 {offsets = [0, 0], sizes = [16, 128], strides = [1, 1]} : vector<16x134xf32> to vector<16x128xf32>
    %740 = vector.broadcast %35 : f32 to vector<16x128xf32>
    %741 = arith.mulf %739, %740 : vector<16x128xf32>
    %742 = vector.extract_strided_slice %600 {offsets = [0, 1], sizes = [16, 128], strides = [1, 1]} : vector<16x134xf32> to vector<16x128xf32>
    %743 = vector.broadcast %36 : f32 to vector<16x128xf32>
    %744 = arith.mulf %742, %743 : vector<16x128xf32>
    %745 = arith.addf %741, %744 : vector<16x128xf32>
    %746 = vector.extract_strided_slice %600 {offsets = [0, 2], sizes = [16, 128], strides = [1, 1]} : vector<16x134xf32> to vector<16x128xf32>
    %747 = vector.broadcast %37 : f32 to vector<16x128xf32>
    %748 = arith.mulf %746, %747 : vector<16x128xf32>
    %749 = arith.addf %745, %748 : vector<16x128xf32>
    %750 = vector.extract_strided_slice %600 {offsets = [0, 3], sizes = [16, 128], strides = [1, 1]} : vector<16x134xf32> to vector<16x128xf32>
    %751 = vector.broadcast %38 : f32 to vector<16x128xf32>
    %752 = arith.mulf %750, %751 : vector<16x128xf32>
    %753 = arith.addf %749, %752 : vector<16x128xf32>
    %754 = vector.extract_strided_slice %600 {offsets = [0, 4], sizes = [16, 128], strides = [1, 1]} : vector<16x134xf32> to vector<16x128xf32>
    %755 = vector.broadcast %39 : f32 to vector<16x128xf32>
    %756 = arith.mulf %754, %755 : vector<16x128xf32>
    %757 = arith.addf %753, %756 : vector<16x128xf32>
    %758 = vector.extract_strided_slice %600 {offsets = [0, 5], sizes = [16, 128], strides = [1, 1]} : vector<16x134xf32> to vector<16x128xf32>
    %759 = vector.broadcast %40 : f32 to vector<16x128xf32>
    %760 = arith.mulf %758, %759 : vector<16x128xf32>
    %761 = arith.addf %757, %760 : vector<16x128xf32>
    %762 = vector.extract_strided_slice %600 {offsets = [0, 6], sizes = [16, 128], strides = [1, 1]} : vector<16x134xf32> to vector<16x128xf32>
    %763 = vector.broadcast %41 : f32 to vector<16x128xf32>
    %764 = arith.mulf %762, %763 : vector<16x128xf32>
    %765 = arith.addf %761, %764 : vector<16x128xf32>
    %766 = vector.extract_strided_slice %603 {offsets = [0, 0], sizes = [16, 128], strides = [1, 1]} : vector<16x134xf32> to vector<16x128xf32>
    %767 = vector.broadcast %42 : f32 to vector<16x128xf32>
    %768 = arith.mulf %766, %767 : vector<16x128xf32>
    %769 = vector.extract_strided_slice %603 {offsets = [0, 1], sizes = [16, 128], strides = [1, 1]} : vector<16x134xf32> to vector<16x128xf32>
    %770 = vector.broadcast %43 : f32 to vector<16x128xf32>
    %771 = arith.mulf %769, %770 : vector<16x128xf32>
    %772 = arith.addf %768, %771 : vector<16x128xf32>
    %773 = vector.extract_strided_slice %603 {offsets = [0, 2], sizes = [16, 128], strides = [1, 1]} : vector<16x134xf32> to vector<16x128xf32>
    %774 = vector.broadcast %44 : f32 to vector<16x128xf32>
    %775 = arith.mulf %773, %774 : vector<16x128xf32>
    %776 = arith.addf %772, %775 : vector<16x128xf32>
    %777 = vector.extract_strided_slice %603 {offsets = [0, 3], sizes = [16, 128], strides = [1, 1]} : vector<16x134xf32> to vector<16x128xf32>
    %778 = vector.broadcast %45 : f32 to vector<16x128xf32>
    %779 = arith.mulf %777, %778 : vector<16x128xf32>
    %780 = arith.addf %776, %779 : vector<16x128xf32>
    %781 = vector.extract_strided_slice %603 {offsets = [0, 4], sizes = [16, 128], strides = [1, 1]} : vector<16x134xf32> to vector<16x128xf32>
    %782 = vector.broadcast %46 : f32 to vector<16x128xf32>
    %783 = arith.mulf %781, %782 : vector<16x128xf32>
    %784 = arith.addf %780, %783 : vector<16x128xf32>
    %785 = vector.extract_strided_slice %603 {offsets = [0, 5], sizes = [16, 128], strides = [1, 1]} : vector<16x134xf32> to vector<16x128xf32>
    %786 = vector.broadcast %47 : f32 to vector<16x128xf32>
    %787 = arith.mulf %785, %786 : vector<16x128xf32>
    %788 = arith.addf %784, %787 : vector<16x128xf32>
    %789 = vector.extract_strided_slice %603 {offsets = [0, 6], sizes = [16, 128], strides = [1, 1]} : vector<16x134xf32> to vector<16x128xf32>
    %790 = vector.broadcast %48 : f32 to vector<16x128xf32>
    %791 = arith.mulf %789, %790 : vector<16x128xf32>
    %792 = arith.addf %788, %791 : vector<16x128xf32>
    %793 = vector.extract_strided_slice %603 {offsets = [0, 0], sizes = [16, 128], strides = [1, 1]} : vector<16x134xf32> to vector<16x128xf32>
    %794 = vector.broadcast %49 : f32 to vector<16x128xf32>
    %795 = arith.mulf %793, %794 : vector<16x128xf32>
    %796 = vector.extract_strided_slice %603 {offsets = [0, 1], sizes = [16, 128], strides = [1, 1]} : vector<16x134xf32> to vector<16x128xf32>
    %797 = vector.broadcast %50 : f32 to vector<16x128xf32>
    %798 = arith.mulf %796, %797 : vector<16x128xf32>
    %799 = arith.addf %795, %798 : vector<16x128xf32>
    %800 = vector.extract_strided_slice %603 {offsets = [0, 2], sizes = [16, 128], strides = [1, 1]} : vector<16x134xf32> to vector<16x128xf32>
    %801 = vector.broadcast %51 : f32 to vector<16x128xf32>
    %802 = arith.mulf %800, %801 : vector<16x128xf32>
    %803 = arith.addf %799, %802 : vector<16x128xf32>
    %804 = vector.extract_strided_slice %603 {offsets = [0, 3], sizes = [16, 128], strides = [1, 1]} : vector<16x134xf32> to vector<16x128xf32>
    %805 = vector.broadcast %52 : f32 to vector<16x128xf32>
    %806 = arith.mulf %804, %805 : vector<16x128xf32>
    %807 = arith.addf %803, %806 : vector<16x128xf32>
    %808 = vector.extract_strided_slice %603 {offsets = [0, 4], sizes = [16, 128], strides = [1, 1]} : vector<16x134xf32> to vector<16x128xf32>
    %809 = vector.broadcast %53 : f32 to vector<16x128xf32>
    %810 = arith.mulf %808, %809 : vector<16x128xf32>
    %811 = arith.addf %807, %810 : vector<16x128xf32>
    %812 = vector.extract_strided_slice %603 {offsets = [0, 5], sizes = [16, 128], strides = [1, 1]} : vector<16x134xf32> to vector<16x128xf32>
    %813 = vector.broadcast %54 : f32 to vector<16x128xf32>
    %814 = arith.mulf %812, %813 : vector<16x128xf32>
    %815 = arith.addf %811, %814 : vector<16x128xf32>
    %816 = vector.extract_strided_slice %603 {offsets = [0, 6], sizes = [16, 128], strides = [1, 1]} : vector<16x134xf32> to vector<16x128xf32>
    %817 = vector.broadcast %55 : f32 to vector<16x128xf32>
    %818 = arith.mulf %816, %817 : vector<16x128xf32>
    %819 = arith.addf %815, %818 : vector<16x128xf32>
    %820 = vector.broadcast %56 : f32 to vector<16x128xf32>
    %821 = arith.mulf %630, %820 : vector<16x128xf32>
    %822 = vector.broadcast %57 : f32 to vector<16x128xf32>
    %823 = arith.mulf %657, %822 : vector<16x128xf32>
    %824 = arith.addf %821, %823 : vector<16x128xf32>
    %825 = vector.broadcast %58 : f32 to vector<16x128xf32>
    %826 = arith.mulf %684, %825 : vector<16x128xf32>
    %827 = arith.addf %824, %826 : vector<16x128xf32>
    %828 = vector.broadcast %59 : f32 to vector<16x128xf32>
    %829 = arith.mulf %711, %828 : vector<16x128xf32>
    %830 = arith.addf %827, %829 : vector<16x128xf32>
    %831 = vector.broadcast %60 : f32 to vector<16x128xf32>
    %832 = arith.mulf %738, %831 : vector<16x128xf32>
    %833 = arith.addf %830, %832 : vector<16x128xf32>
    %834 = vector.broadcast %61 : f32 to vector<16x128xf32>
    %835 = arith.mulf %765, %834 : vector<16x128xf32>
    %836 = arith.addf %833, %835 : vector<16x128xf32>
    %837 = vector.broadcast %62 : f32 to vector<16x128xf32>
    %838 = arith.mulf %792, %837 : vector<16x128xf32>
    %839 = arith.addf %836, %838 : vector<16x128xf32>
    %840 = vector.broadcast %63 : f32 to vector<16x128xf32>
    %841 = arith.mulf %819, %840 : vector<16x128xf32>
    %842 = arith.addf %839, %841 : vector<16x128xf32>
    %843 = vector.broadcast %120 : f32 to vector<16x128xf32>
    %844 = arith.addf %842, %843 : vector<16x128xf32>
    %c0_273 = arith.constant 0 : index
    %845 = arith.index_cast %591 : i32 to index
    %c0_274 = arith.constant 0 : index
    %846 = vector.load %arg5[%c0_273, %845, %c0_274] : memref<8x32x128xf32, #tpu.memory_space<vmem>>, vector<1x16x128xf32>
    %847 = vector.shape_cast %846 : vector<1x16x128xf32> to vector<16x128xf32>
    %848 = vector.shape_cast %844 : vector<16x128xf32> to vector<1x16x128xf32>
    tpu.vector_store %arg5[%c0_273, %845, %c0_274], %848 {strides = array<i32>} : memref<8x32x128xf32, #tpu.memory_space<vmem>>, vector<1x16x128xf32>,
    %849 = vector.broadcast %64 : f32 to vector<16x128xf32>
    %850 = arith.mulf %630, %849 : vector<16x128xf32>
    %851 = vector.broadcast %65 : f32 to vector<16x128xf32>
    %852 = arith.mulf %657, %851 : vector<16x128xf32>
    %853 = arith.addf %850, %852 : vector<16x128xf32>
    %854 = vector.broadcast %66 : f32 to vector<16x128xf32>
    %855 = arith.mulf %684, %854 : vector<16x128xf32>
    %856 = arith.addf %853, %855 : vector<16x128xf32>
    %857 = vector.broadcast %67 : f32 to vector<16x128xf32>
    %858 = arith.mulf %711, %857 : vector<16x128xf32>
    %859 = arith.addf %856, %858 : vector<16x128xf32>
    %860 = vector.broadcast %68 : f32 to vector<16x128xf32>
    %861 = arith.mulf %738, %860 : vector<16x128xf32>
    %862 = arith.addf %859, %861 : vector<16x128xf32>
    %863 = vector.broadcast %69 : f32 to vector<16x128xf32>
    %864 = arith.mulf %765, %863 : vector<16x128xf32>
    %865 = arith.addf %862, %864 : vector<16x128xf32>
    %866 = vector.broadcast %70 : f32 to vector<16x128xf32>
    %867 = arith.mulf %792, %866 : vector<16x128xf32>
    %868 = arith.addf %865, %867 : vector<16x128xf32>
    %869 = vector.broadcast %71 : f32 to vector<16x128xf32>
    %870 = arith.mulf %819, %869 : vector<16x128xf32>
    %871 = arith.addf %868, %870 : vector<16x128xf32>
    %872 = vector.broadcast %121 : f32 to vector<16x128xf32>
    %873 = arith.addf %871, %872 : vector<16x128xf32>
    %c1_275 = arith.constant 1 : index
    %874 = arith.index_cast %591 : i32 to index
    %c0_276 = arith.constant 0 : index
    %875 = vector.load %arg5[%c1_275, %874, %c0_276] : memref<8x32x128xf32, #tpu.memory_space<vmem>>, vector<1x16x128xf32>
    %876 = vector.shape_cast %875 : vector<1x16x128xf32> to vector<16x128xf32>
    %877 = vector.shape_cast %873 : vector<16x128xf32> to vector<1x16x128xf32>
    tpu.vector_store %arg5[%c1_275, %874, %c0_276], %877 {strides = array<i32>} : memref<8x32x128xf32, #tpu.memory_space<vmem>>, vector<1x16x128xf32>,
    %878 = vector.broadcast %72 : f32 to vector<16x128xf32>
    %879 = arith.mulf %630, %878 : vector<16x128xf32>
    %880 = vector.broadcast %73 : f32 to vector<16x128xf32>
    %881 = arith.mulf %657, %880 : vector<16x128xf32>
    %882 = arith.addf %879, %881 : vector<16x128xf32>
    %883 = vector.broadcast %74 : f32 to vector<16x128xf32>
    %884 = arith.mulf %684, %883 : vector<16x128xf32>
    %885 = arith.addf %882, %884 : vector<16x128xf32>
    %886 = vector.broadcast %75 : f32 to vector<16x128xf32>
    %887 = arith.mulf %711, %886 : vector<16x128xf32>
    %888 = arith.addf %885, %887 : vector<16x128xf32>
    %889 = vector.broadcast %76 : f32 to vector<16x128xf32>
    %890 = arith.mulf %738, %889 : vector<16x128xf32>
    %891 = arith.addf %888, %890 : vector<16x128xf32>
    %892 = vector.broadcast %77 : f32 to vector<16x128xf32>
    %893 = arith.mulf %765, %892 : vector<16x128xf32>
    %894 = arith.addf %891, %893 : vector<16x128xf32>
    %895 = vector.broadcast %78 : f32 to vector<16x128xf32>
    %896 = arith.mulf %792, %895 : vector<16x128xf32>
    %897 = arith.addf %894, %896 : vector<16x128xf32>
    %898 = vector.broadcast %79 : f32 to vector<16x128xf32>
    %899 = arith.mulf %819, %898 : vector<16x128xf32>
    %900 = arith.addf %897, %899 : vector<16x128xf32>
    %901 = vector.broadcast %122 : f32 to vector<16x128xf32>
    %902 = arith.addf %900, %901 : vector<16x128xf32>
    %c2_277 = arith.constant 2 : index
    %903 = arith.index_cast %591 : i32 to index
    %c0_278 = arith.constant 0 : index
    %904 = vector.load %arg5[%c2_277, %903, %c0_278] : memref<8x32x128xf32, #tpu.memory_space<vmem>>, vector<1x16x128xf32>
    %905 = vector.shape_cast %904 : vector<1x16x128xf32> to vector<16x128xf32>
    %906 = vector.shape_cast %902 : vector<16x128xf32> to vector<1x16x128xf32>
    tpu.vector_store %arg5[%c2_277, %903, %c0_278], %906 {strides = array<i32>} : memref<8x32x128xf32, #tpu.memory_space<vmem>>, vector<1x16x128xf32>,
    %907 = vector.broadcast %80 : f32 to vector<16x128xf32>
    %908 = arith.mulf %630, %907 : vector<16x128xf32>
    %909 = vector.broadcast %81 : f32 to vector<16x128xf32>
    %910 = arith.mulf %657, %909 : vector<16x128xf32>
    %911 = arith.addf %908, %910 : vector<16x128xf32>
    %912 = vector.broadcast %82 : f32 to vector<16x128xf32>
    %913 = arith.mulf %684, %912 : vector<16x128xf32>
    %914 = arith.addf %911, %913 : vector<16x128xf32>
    %915 = vector.broadcast %83 : f32 to vector<16x128xf32>
    %916 = arith.mulf %711, %915 : vector<16x128xf32>
    %917 = arith.addf %914, %916 : vector<16x128xf32>
    %918 = vector.broadcast %84 : f32 to vector<16x128xf32>
    %919 = arith.mulf %738, %918 : vector<16x128xf32>
    %920 = arith.addf %917, %919 : vector<16x128xf32>
    %921 = vector.broadcast %85 : f32 to vector<16x128xf32>
    %922 = arith.mulf %765, %921 : vector<16x128xf32>
    %923 = arith.addf %920, %922 : vector<16x128xf32>
    %924 = vector.broadcast %86 : f32 to vector<16x128xf32>
    %925 = arith.mulf %792, %924 : vector<16x128xf32>
    %926 = arith.addf %923, %925 : vector<16x128xf32>
    %927 = vector.broadcast %87 : f32 to vector<16x128xf32>
    %928 = arith.mulf %819, %927 : vector<16x128xf32>
    %929 = arith.addf %926, %928 : vector<16x128xf32>
    %930 = vector.broadcast %123 : f32 to vector<16x128xf32>
    %931 = arith.addf %929, %930 : vector<16x128xf32>
    %c3_279 = arith.constant 3 : index
    %932 = arith.index_cast %591 : i32 to index
    %c0_280 = arith.constant 0 : index
    %933 = vector.load %arg5[%c3_279, %932, %c0_280] : memref<8x32x128xf32, #tpu.memory_space<vmem>>, vector<1x16x128xf32>
    %934 = vector.shape_cast %933 : vector<1x16x128xf32> to vector<16x128xf32>
    %935 = vector.shape_cast %931 : vector<16x128xf32> to vector<1x16x128xf32>
    tpu.vector_store %arg5[%c3_279, %932, %c0_280], %935 {strides = array<i32>} : memref<8x32x128xf32, #tpu.memory_space<vmem>>, vector<1x16x128xf32>,
    %936 = vector.broadcast %88 : f32 to vector<16x128xf32>
    %937 = arith.mulf %630, %936 : vector<16x128xf32>
    %938 = vector.broadcast %89 : f32 to vector<16x128xf32>
    %939 = arith.mulf %657, %938 : vector<16x128xf32>
    %940 = arith.addf %937, %939 : vector<16x128xf32>
    %941 = vector.broadcast %90 : f32 to vector<16x128xf32>
    %942 = arith.mulf %684, %941 : vector<16x128xf32>
    %943 = arith.addf %940, %942 : vector<16x128xf32>
    %944 = vector.broadcast %91 : f32 to vector<16x128xf32>
    %945 = arith.mulf %711, %944 : vector<16x128xf32>
    %946 = arith.addf %943, %945 : vector<16x128xf32>
    %947 = vector.broadcast %92 : f32 to vector<16x128xf32>
    %948 = arith.mulf %738, %947 : vector<16x128xf32>
    %949 = arith.addf %946, %948 : vector<16x128xf32>
    %950 = vector.broadcast %93 : f32 to vector<16x128xf32>
    %951 = arith.mulf %765, %950 : vector<16x128xf32>
    %952 = arith.addf %949, %951 : vector<16x128xf32>
    %953 = vector.broadcast %94 : f32 to vector<16x128xf32>
    %954 = arith.mulf %792, %953 : vector<16x128xf32>
    %955 = arith.addf %952, %954 : vector<16x128xf32>
    %956 = vector.broadcast %95 : f32 to vector<16x128xf32>
    %957 = arith.mulf %819, %956 : vector<16x128xf32>
    %958 = arith.addf %955, %957 : vector<16x128xf32>
    %959 = vector.broadcast %124 : f32 to vector<16x128xf32>
    %960 = arith.addf %958, %959 : vector<16x128xf32>
    %c4_281 = arith.constant 4 : index
    %961 = arith.index_cast %591 : i32 to index
    %c0_282 = arith.constant 0 : index
    %962 = vector.load %arg5[%c4_281, %961, %c0_282] : memref<8x32x128xf32, #tpu.memory_space<vmem>>, vector<1x16x128xf32>
    %963 = vector.shape_cast %962 : vector<1x16x128xf32> to vector<16x128xf32>
    %964 = vector.shape_cast %960 : vector<16x128xf32> to vector<1x16x128xf32>
    tpu.vector_store %arg5[%c4_281, %961, %c0_282], %964 {strides = array<i32>} : memref<8x32x128xf32, #tpu.memory_space<vmem>>, vector<1x16x128xf32>,
    %965 = vector.broadcast %96 : f32 to vector<16x128xf32>
    %966 = arith.mulf %630, %965 : vector<16x128xf32>
    %967 = vector.broadcast %97 : f32 to vector<16x128xf32>
    %968 = arith.mulf %657, %967 : vector<16x128xf32>
    %969 = arith.addf %966, %968 : vector<16x128xf32>
    %970 = vector.broadcast %98 : f32 to vector<16x128xf32>
    %971 = arith.mulf %684, %970 : vector<16x128xf32>
    %972 = arith.addf %969, %971 : vector<16x128xf32>
    %973 = vector.broadcast %99 : f32 to vector<16x128xf32>
    %974 = arith.mulf %711, %973 : vector<16x128xf32>
    %975 = arith.addf %972, %974 : vector<16x128xf32>
    %976 = vector.broadcast %100 : f32 to vector<16x128xf32>
    %977 = arith.mulf %738, %976 : vector<16x128xf32>
    %978 = arith.addf %975, %977 : vector<16x128xf32>
    %979 = vector.broadcast %101 : f32 to vector<16x128xf32>
    %980 = arith.mulf %765, %979 : vector<16x128xf32>
    %981 = arith.addf %978, %980 : vector<16x128xf32>
    %982 = vector.broadcast %102 : f32 to vector<16x128xf32>
    %983 = arith.mulf %792, %982 : vector<16x128xf32>
    %984 = arith.addf %981, %983 : vector<16x128xf32>
    %985 = vector.broadcast %103 : f32 to vector<16x128xf32>
    %986 = arith.mulf %819, %985 : vector<16x128xf32>
    %987 = arith.addf %984, %986 : vector<16x128xf32>
    %988 = vector.broadcast %125 : f32 to vector<16x128xf32>
    %989 = arith.addf %987, %988 : vector<16x128xf32>
    %c5_283 = arith.constant 5 : index
    %990 = arith.index_cast %591 : i32 to index
    %c0_284 = arith.constant 0 : index
    %991 = vector.load %arg5[%c5_283, %990, %c0_284] : memref<8x32x128xf32, #tpu.memory_space<vmem>>, vector<1x16x128xf32>
    %992 = vector.shape_cast %991 : vector<1x16x128xf32> to vector<16x128xf32>
    %993 = vector.shape_cast %989 : vector<16x128xf32> to vector<1x16x128xf32>
    tpu.vector_store %arg5[%c5_283, %990, %c0_284], %993 {strides = array<i32>} : memref<8x32x128xf32, #tpu.memory_space<vmem>>, vector<1x16x128xf32>,
    %994 = vector.broadcast %104 : f32 to vector<16x128xf32>
    %995 = arith.mulf %630, %994 : vector<16x128xf32>
    %996 = vector.broadcast %105 : f32 to vector<16x128xf32>
    %997 = arith.mulf %657, %996 : vector<16x128xf32>
    %998 = arith.addf %995, %997 : vector<16x128xf32>
    %999 = vector.broadcast %106 : f32 to vector<16x128xf32>
    %1000 = arith.mulf %684, %999 : vector<16x128xf32>
    %1001 = arith.addf %998, %1000 : vector<16x128xf32>
    %1002 = vector.broadcast %107 : f32 to vector<16x128xf32>
    %1003 = arith.mulf %711, %1002 : vector<16x128xf32>
    %1004 = arith.addf %1001, %1003 : vector<16x128xf32>
    %1005 = vector.broadcast %108 : f32 to vector<16x128xf32>
    %1006 = arith.mulf %738, %1005 : vector<16x128xf32>
    %1007 = arith.addf %1004, %1006 : vector<16x128xf32>
    %1008 = vector.broadcast %109 : f32 to vector<16x128xf32>
    %1009 = arith.mulf %765, %1008 : vector<16x128xf32>
    %1010 = arith.addf %1007, %1009 : vector<16x128xf32>
    %1011 = vector.broadcast %110 : f32 to vector<16x128xf32>
    %1012 = arith.mulf %792, %1011 : vector<16x128xf32>
    %1013 = arith.addf %1010, %1012 : vector<16x128xf32>
    %1014 = vector.broadcast %111 : f32 to vector<16x128xf32>
    %1015 = arith.mulf %819, %1014 : vector<16x128xf32>
    %1016 = arith.addf %1013, %1015 : vector<16x128xf32>
    %1017 = vector.broadcast %126 : f32 to vector<16x128xf32>
    %1018 = arith.addf %1016, %1017 : vector<16x128xf32>
    %c6_285 = arith.constant 6 : index
    %1019 = arith.index_cast %591 : i32 to index
    %c0_286 = arith.constant 0 : index
    %1020 = vector.load %arg5[%c6_285, %1019, %c0_286] : memref<8x32x128xf32, #tpu.memory_space<vmem>>, vector<1x16x128xf32>
    %1021 = vector.shape_cast %1020 : vector<1x16x128xf32> to vector<16x128xf32>
    %1022 = vector.shape_cast %1018 : vector<16x128xf32> to vector<1x16x128xf32>
    tpu.vector_store %arg5[%c6_285, %1019, %c0_286], %1022 {strides = array<i32>} : memref<8x32x128xf32, #tpu.memory_space<vmem>>, vector<1x16x128xf32>,
    %1023 = vector.broadcast %112 : f32 to vector<16x128xf32>
    %1024 = arith.mulf %630, %1023 : vector<16x128xf32>
    %1025 = vector.broadcast %113 : f32 to vector<16x128xf32>
    %1026 = arith.mulf %657, %1025 : vector<16x128xf32>
    %1027 = arith.addf %1024, %1026 : vector<16x128xf32>
    %1028 = vector.broadcast %114 : f32 to vector<16x128xf32>
    %1029 = arith.mulf %684, %1028 : vector<16x128xf32>
    %1030 = arith.addf %1027, %1029 : vector<16x128xf32>
    %1031 = vector.broadcast %115 : f32 to vector<16x128xf32>
    %1032 = arith.mulf %711, %1031 : vector<16x128xf32>
    %1033 = arith.addf %1030, %1032 : vector<16x128xf32>
    %1034 = vector.broadcast %116 : f32 to vector<16x128xf32>
    %1035 = arith.mulf %738, %1034 : vector<16x128xf32>
    %1036 = arith.addf %1033, %1035 : vector<16x128xf32>
    %1037 = vector.broadcast %117 : f32 to vector<16x128xf32>
    %1038 = arith.mulf %765, %1037 : vector<16x128xf32>
    %1039 = arith.addf %1036, %1038 : vector<16x128xf32>
    %1040 = vector.broadcast %118 : f32 to vector<16x128xf32>
    %1041 = arith.mulf %792, %1040 : vector<16x128xf32>
    %1042 = arith.addf %1039, %1041 : vector<16x128xf32>
    %1043 = vector.broadcast %119 : f32 to vector<16x128xf32>
    %1044 = arith.mulf %819, %1043 : vector<16x128xf32>
    %1045 = arith.addf %1042, %1044 : vector<16x128xf32>
    %1046 = vector.broadcast %127 : f32 to vector<16x128xf32>
    %1047 = arith.addf %1045, %1046 : vector<16x128xf32>
    %c7_287 = arith.constant 7 : index
    %1048 = arith.index_cast %591 : i32 to index
    %c0_288 = arith.constant 0 : index
    %1049 = vector.load %arg5[%c7_287, %1048, %c0_288] : memref<8x32x128xf32, #tpu.memory_space<vmem>>, vector<1x16x128xf32>
    %1050 = vector.shape_cast %1049 : vector<1x16x128xf32> to vector<16x128xf32>
    %1051 = vector.shape_cast %1047 : vector<16x128xf32> to vector<1x16x128xf32>
    tpu.vector_store %arg5[%c7_287, %1048, %c0_288], %1051 {strides = array<i32>} : memref<8x32x128xf32, #tpu.memory_space<vmem>>, vector<1x16x128xf32>,
    %c2_i32 = arith.constant 2 : i32
    return
  }
  func.func @transform_0(%arg0: i32) -> (i32, i32, i32) {
    %c0_i32 = arith.constant 0 : i32
    %c0_i32_0 = arith.constant 0 : i32
    %c0_i32_1 = arith.constant 0 : i32
    return %c0_i32, %arg0, %c0_i32_0 : i32, i32, i32
  }
  func.func @transform_1(%arg0: i32) -> (i32, i32) {
    %c0_i32 = arith.constant 0 : i32
    %c0_i32_0 = arith.constant 0 : i32
    %c0_i32_1 = arith.constant 0 : i32
    return %c0_i32, %c0_i32_0 : i32, i32
  }
  func.func @transform_2(%arg0: i32) -> (i32, i32) {
    %c0_i32 = arith.constant 0 : i32
    %c0_i32_0 = arith.constant 0 : i32
    %c0_i32_1 = arith.constant 0 : i32
    return %c0_i32, %c0_i32_0 : i32, i32
  }
  func.func @transform_3(%arg0: i32) -> i32 {
    %c0_i32 = arith.constant 0 : i32
    %c0_i32_0 = arith.constant 0 : i32
    return %c0_i32 : i32
  }
  func.func @transform_4(%arg0: i32) -> (i32, i32, i32) {
    %c0_i32 = arith.constant 0 : i32
    %c0_i32_0 = arith.constant 0 : i32
    %c0_i32_1 = arith.constant 0 : i32
    return %c0_i32, %arg0, %c0_i32_0 : i32, i32, i32
  }
}

</mosaic_0001>

<llo_original>
// kernel: depthwise_separable_conv.1
$region0: #{depthwise_separable_conv.1}
  #allocation0 [shape = 'u32[]', space=smem, size = 0x4, offset = 0x4, fixed_abs, tag = 'smem constant byte address 0x4 - core index']
  #allocation1 [shape = 'u32[144,128]{1,0:T(1,128)}', space=vmem, size = 0x12000, scoped, tag = 'internal scratch']
  %s0 = inlined_call_operand.vmem [shape: f32[4,32,134], index: 0, kind: input, shape index: {}]
  %s1 = inlined_call_operand.vmem [shape: f32[8,7], index: 1, kind: input, shape index: {}]
  %s2 = inlined_call_operand.vmem [shape: f32[8,8], index: 2, kind: input, shape index: {}]
  %s3 = inlined_call_operand.vmem [shape: f32[8], index: 3, kind: input, shape index: {}]
  %s4 = inlined_call_operand.vmem [shape: f32[8,32,128], index: 4, kind: output, shape index: {}]
  %s5 = sld [smem:[#allocation0]]
  $region38: #{depthwise_separable_conv.1} parent=0
    _
  %s7 = ssub.s32 1, %s5
  %s8 = scalar_select 0, %s7, %s5
  $region1: #{depthwise_separable_conv.1} parent=0
    #allocation2 [shape = 'u8[4096]{0}', space=smem, size = 0x1000, scoped, tag = 'input window, operand 1, single buffered']
    #allocation3 [shape = 's32[1]{0}', space=sflag, size = 0x4, scoped, tag = 'scoped memory for depthwise_separable_conv.1']
    #allocation4 [shape = 'u8[4096]{0}', space=smem, size = 0x1000, scoped, tag = 'input window, operand 2, single buffered']
    #allocation5 [shape = 's32[1]{0}', space=sflag, size = 0x4, scoped, tag = 'scoped memory for depthwise_separable_conv.1']
    #allocation6 [shape = 'u8[512]{0}', space=smem, size = 0x200, scoped, tag = 'input window, operand 3, single buffered']
    %9 = vsyncpa [#allocation3], 0
    %10 = vsyncpa [#allocation5], 0
    // Predicated region
    $region2: #{depthwise_separable_conv.1} parent=1 // pred_check
      _
    $region3: #{depthwise_separable_conv.1} parent=1 // pred_check_branch
      %12 = sbr.rel (0) target = $region5
    $region4: #{depthwise_separable_conv.1} parent=1 // pred_region
      _
    $region5: #{depthwise_separable_conv.1} parent=1 // pred_fallthru
      _
    // Predicated region
    $region6: #{depthwise_separable_conv.1} parent=1 // pred_check
      _
    $region7: #{depthwise_separable_conv.1} parent=1 // pred_check_branch
      %14 = sbr.rel (0) target = $region9
    $region8: #{depthwise_separable_conv.1} parent=1 // pred_region
      %s16 = ssub.s32 128, 128
      %17 = vsyncadd [#allocation3], %s16
      %s19 = sshll.u32 %s1, 4
      %s20 = int_to_ptr.vmem [resolvable:$true] %s19
      %22 = dma.vmem_to_smem %s20, 128, [#allocation2], [#allocation3]
    $region9: #{depthwise_separable_conv.1} parent=1 // pred_fallthru
      _
    // Predicated region
    $region10: #{depthwise_separable_conv.1} parent=1 // pred_check
      _
    $region11: #{depthwise_separable_conv.1} parent=1 // pred_check_branch
      %24 = sbr.rel (0) target = $region13
    $region12: #{depthwise_separable_conv.1} parent=1 // pred_region
      %s26 = ssub.s32 128, 128
      %27 = vsyncadd [#allocation5], %s26
      %s29 = sshll.u32 %s2, 4
      %s30 = int_to_ptr.vmem [resolvable:$true] %s29
      %32 = dma.vmem_to_smem %s30, 128, [#allocation4], [#allocation5]
    $region13: #{depthwise_separable_conv.1} parent=1 // pred_fallthru
      _
    // Predicated region
    $region14: #{depthwise_separable_conv.1} parent=1 // pred_check
      _
    $region15: #{depthwise_separable_conv.1} parent=1 // pred_check_branch
      %34 = sbr.rel (0) target = $region17
    $region16: #{depthwise_separable_conv.1} parent=1 // pred_region
      %s36 = ssub.s32 16, 16
      %37 = vsyncadd [#allocation5], %s36
      %s39 = sshll.u32 %s3, 4
      %s40 = int_to_ptr.vmem [resolvable:$true] %s39
      %42 = dma.vmem_to_smem %s40, 16, [#allocation6], [#allocation5]
    $region17: #{depthwise_separable_conv.1} parent=1 // pred_fallthru
      _
    // Predicated region
    $region18: #{depthwise_separable_conv.1} parent=1 // pred_check
      _
    $region19: #{depthwise_separable_conv.1} parent=1 // pred_check_branch
      %44 = sbr.rel (0) target = $region21
    $region20: #{depthwise_separable_conv.1} parent=1 // pred_region
      %45 = dma.done [#allocation3], 128
    $region21: #{depthwise_separable_conv.1} parent=1 // pred_fallthru
      _
    // Predicated region
    $region22: #{depthwise_separable_conv.1} parent=1 // pred_check
      _
    $region23: #{depthwise_separable_conv.1} parent=1 // pred_check_branch
      %47 = sbr.rel (0) target = $region25
    $region24: #{depthwise_separable_conv.1} parent=1 // pred_region
      %48 = dma.done [#allocation5], 128
    $region25: #{depthwise_separable_conv.1} parent=1 // pred_fallthru
      _
    // Predicated region
    $region26: #{depthwise_separable_conv.1} parent=1 // pred_check
      _
    $region27: #{depthwise_separable_conv.1} parent=1 // pred_check_branch
      %50 = sbr.rel (0) target = $region29
    $region28: #{depthwise_separable_conv.1} parent=1 // pred_region
      %51 = dma.done [#allocation5], 16
    $region29: #{depthwise_separable_conv.1} parent=1 // pred_fallthru
      _
    %52 = sfence
    %s53 = sld [smem:[#allocation2]]
    %s54 = sld [smem:[#allocation2 + $0x1]]
    %s55 = sld [smem:[#allocation2 + $0x2]]
    %s56 = sld [smem:[#allocation2 + $0x3]]
    %s57 = sld [smem:[#allocation2 + $0x4]]
    %s58 = sld [smem:[#allocation2 + $0x5]]
    %s59 = sld [smem:[#allocation2 + $0x6]]
    %s60 = sld [smem:[#allocation2 + $0x80]]
    %s61 = sld [smem:[#allocation2 + $0x81]]
    %s62 = sld [smem:[#allocation2 + $0x82]]
    %s63 = sld [smem:[#allocation2 + $0x83]]
    %s64 = sld [smem:[#allocation2 + $0x84]]
    %s65 = sld [smem:[#allocation2 + $0x85]]
    %s66 = sld [smem:[#allocation2 + $0x86]]
    %s67 = sld [smem:[#allocation2 + $0x100]]
    %s68 = sld [smem:[#allocation2 + $0x101]]
    %s69 = sld [smem:[#allocation2 + $0x102]]
    %s70 = sld [smem:[#allocation2 + $0x103]]
    %s71 = sld [smem:[#allocation2 + $0x104]]
    %s72 = sld [smem:[#allocation2 + $0x105]]
    %s73 = sld [smem:[#allocation2 + $0x106]]
    %s74 = sld [smem:[#allocation2 + $0x180]]
    %s75 = sld [smem:[#allocation2 + $0x181]]
    %s76 = sld [smem:[#allocation2 + $0x182]]
    %s77 = sld [smem:[#allocation2 + $0x183]]
    %s78 = sld [smem:[#allocation2 + $0x184]]
    %s79 = sld [smem:[#allocation2 + $0x185]]
    %s80 = sld [smem:[#allocation2 + $0x186]]
    %s81 = sld [smem:[#allocation2 + $0x200]]
    %s82 = sld [smem:[#allocation2 + $0x201]]
    %s83 = sld [smem:[#allocation2 + $0x202]]
    %s84 = sld [smem:[#allocation2 + $0x203]]
    %s85 = sld [smem:[#allocation2 + $0x204]]
    %s86 = sld [smem:[#allocation2 + $0x205]]
    %s87 = sld [smem:[#allocation2 + $0x206]]
    %s88 = sld [smem:[#allocation2 + $0x280]]
    %s89 = sld [smem:[#allocation2 + $0x281]]
    %s90 = sld [smem:[#allocation2 + $0x282]]
    %s91 = sld [smem:[#allocation2 + $0x283]]
    %s92 = sld [smem:[#allocation2 + $0x284]]
    %s93 = sld [smem:[#allocation2 + $0x285]]
    %s94 = sld [smem:[#allocation2 + $0x286]]
    %s95 = sld [smem:[#allocation2 + $0x300]]
    %s96 = sld [smem:[#allocation2 + $0x301]]
    %s97 = sld [smem:[#allocation2 + $0x302]]
    %s98 = sld [smem:[#allocation2 + $0x303]]
    %s99 = sld [smem:[#allocation2 + $0x304]]
    %s100 = sld [smem:[#allocation2 + $0x305]]
    %s101 = sld [smem:[#allocation2 + $0x306]]
    %s102 = sld [smem:[#allocation2 + $0x380]]
    %s103 = sld [smem:[#allocation2 + $0x381]]
    %s104 = sld [smem:[#allocation2 + $0x382]]
    %s105 = sld [smem:[#allocation2 + $0x383]]
    %s106 = sld [smem:[#allocation2 + $0x384]]
    %s107 = sld [smem:[#allocation2 + $0x385]]
    %s108 = sld [smem:[#allocation2 + $0x386]]
    %s109 = sld [smem:[#allocation4]]
    %s110 = sld [smem:[#allocation4 + $0x1]]
    %s111 = sld [smem:[#allocation4 + $0x2]]
    %s112 = sld [smem:[#allocation4 + $0x3]]
    %s113 = sld [smem:[#allocation4 + $0x4]]
    %s114 = sld [smem:[#allocation4 + $0x5]]
    %s115 = sld [smem:[#allocation4 + $0x6]]
    %s116 = sld [smem:[#allocation4 + $0x7]]
    %s117 = sld [smem:[#allocation4 + $0x80]]
    %s118 = sld [smem:[#allocation4 + $0x81]]
    %s119 = sld [smem:[#allocation4 + $0x82]]
    %s120 = sld [smem:[#allocation4 + $0x83]]
    %s121 = sld [smem:[#allocation4 + $0x84]]
    %s122 = sld [smem:[#allocation4 + $0x85]]
    %s123 = sld [smem:[#allocation4 + $0x86]]
    %s124 = sld [smem:[#allocation4 + $0x87]]
    %s125 = sld [smem:[#allocation4 + $0x100]]
    %s126 = sld [smem:[#allocation4 + $0x101]]
    %s127 = sld [smem:[#allocation4 + $0x102]]
    %s128 = sld [smem:[#allocation4 + $0x103]]
    %s129 = sld [smem:[#allocation4 + $0x104]]
    %s130 = sld [smem:[#allocation4 + $0x105]]
    %s131 = sld [smem:[#allocation4 + $0x106]]
    %s132 = sld [smem:[#allocation4 + $0x107]]
    %s133 = sld [smem:[#allocation4 + $0x180]]
    %s134 = sld [smem:[#allocation4 + $0x181]]
    %s135 = sld [smem:[#allocation4 + $0x182]]
    %s136 = sld [smem:[#allocation4 + $0x183]]
    %s137 = sld [smem:[#allocation4 + $0x184]]
    %s138 = sld [smem:[#allocation4 + $0x185]]
    %s139 = sld [smem:[#allocation4 + $0x186]]
    %s140 = sld [smem:[#allocation4 + $0x187]]
    %s141 = sld [smem:[#allocation4 + $0x200]]
    %s142 = sld [smem:[#allocation4 + $0x201]]
    %s143 = sld [smem:[#allocation4 + $0x202]]
    %s144 = sld [smem:[#allocation4 + $0x203]]
    %s145 = sld [smem:[#allocation4 + $0x204]]
    %s146 = sld [smem:[#allocation4 + $0x205]]
    %s147 = sld [smem:[#allocation4 + $0x206]]
    %s148 = sld [smem:[#allocation4 + $0x207]]
    %s149 = sld [smem:[#allocation4 + $0x280]]
    %s150 = sld [smem:[#allocation4 + $0x281]]
    %s151 = sld [smem:[#allocation4 + $0x282]]
    %s152 = sld [smem:[#allocation4 + $0x283]]
    %s153 = sld [smem:[#allocation4 + $0x284]]
    %s154 = sld [smem:[#allocation4 + $0x285]]
    %s155 = sld [smem:[#allocation4 + $0x286]]
    %s156 = sld [smem:[#allocation4 + $0x287]]
    %s157 = sld [smem:[#allocation4 + $0x300]]
    %s158 = sld [smem:[#allocation4 + $0x301]]
    %s159 = sld [smem:[#allocation4 + $0x302]]
    %s160 = sld [smem:[#allocation4 + $0x303]]
    %s161 = sld [smem:[#allocation4 + $0x304]]
    %s162 = sld [smem:[#allocation4 + $0x305]]
    %s163 = sld [smem:[#allocation4 + $0x306]]
    %s164 = sld [smem:[#allocation4 + $0x307]]
    %s165 = sld [smem:[#allocation4 + $0x380]]
    %s166 = sld [smem:[#allocation4 + $0x381]]
    %s167 = sld [smem:[#allocation4 + $0x382]]
    %s168 = sld [smem:[#allocation4 + $0x383]]
    %s169 = sld [smem:[#allocation4 + $0x384]]
    %s170 = sld [smem:[#allocation4 + $0x385]]
    %s171 = sld [smem:[#allocation4 + $0x386]]
    %s172 = sld [smem:[#allocation4 + $0x387]]
    %s173 = sld [smem:[#allocation6]]
    %s174 = sld [smem:[#allocation6 + $0x1]]
    %s175 = sld [smem:[#allocation6 + $0x2]]
    %s176 = sld [smem:[#allocation6 + $0x3]]
    %s177 = sld [smem:[#allocation6 + $0x4]]
    %s178 = sld [smem:[#allocation6 + $0x5]]
    %s179 = sld [smem:[#allocation6 + $0x6]]
    %s180 = sld [smem:[#allocation6 + $0x7]]
    %s181 = smul.u32 0, 2
    %s182 = smul.addr %s181, 8
    %s183 = scalar_lea.vmem %s0, %s182
    %v184 = vld [vmem:[%s183] sm:$0xff]
    %v185 = vld [vmem:[%s183 + $0x8] sm:$0xff]
    %v186 = vld [vmem:[%s183 + $0x10] sm:$0xff]
    %v187 = vld [vmem:[%s183 + $0x18] sm:$0xff]
    %s188 = sadd.s32 %s181, 8
    %s189 = smul.addr %s188, 8
    %s190 = scalar_lea.vmem %s0, %s189
    %v191 = vld [vmem:[%s190] sm:$0xff]
    %v192 = vld [vmem:[%s190 + $0x8] sm:$0xff]
    %v193 = vld [vmem:[%s190 + $0x10] sm:$0xff]
    %v194 = vld [vmem:[%s190 + $0x18] sm:$0xff]
    %s195 = sadd.s32 %s181, 16
    %s196 = smul.addr %s195, 8
    %s197 = scalar_lea.vmem %s0, %s196
    %v198 = vld [vmem:[%s197] sm:$0xff]
    %v199 = vld [vmem:[%s197 + $0x8] sm:$0xff]
    %v200 = vld [vmem:[%s197 + $0x10] sm:$0xff]
    %v201 = vld [vmem:[%s197 + $0x18] sm:$0xff]
    %s202 = sadd.s32 %s181, 24
    %s203 = smul.addr %s202, 8
    %s204 = scalar_lea.vmem %s0, %s203
    %v205 = vld [vmem:[%s204] sm:$0xff]
    %v206 = vld [vmem:[%s204 + $0x8] sm:$0xff]
    %v207 = vld [vmem:[%s204 + $0x10] sm:$0xff]
    %v208 = vld [vmem:[%s204 + $0x18] sm:$0xff]
    %v209 = vstv %s53
    %v210 = vmul.f32 %v184, %v209
    %v211 = vmul.f32 %v186, %v209
    %v212 = vstv %s54
    %v213 = vmul.f32 %v184, %v212
    %v214 = vmul.f32 %v185, %v212
    %v215 = vmul.f32 %v186, %v212
    %v216 = vmul.f32 %v187, %v212
    %221 = vrot.lane.b32.xlu0 %v213, 127
    %v222 = vpop.permute.xlu0 %221
    %223 = vrot.lane.b32.xlu0 %v214, 127
    %v224 = vpop.permute.xlu0 %223
    %225 = vrot.lane.b32.xlu0 %v215, 127
    %v226 = vpop.permute.xlu0 %225
    %227 = vrot.lane.b32.xlu0 %v216, 127
    %v228 = vpop.permute.xlu0 %227
    %vm229 = vcmask 1039360
    %v230 = vsel %vm229, %v222, %v224
    %v231 = vsel %vm229, %v226, %v228
    %v234 = vadd.f32 %v210, %v230
    %v235 = vadd.f32 %v211, %v231
    %v236 = vstv %s55
    %v237 = vmul.f32 %v184, %v236
    %v238 = vmul.f32 %v185, %v236
    %v239 = vmul.f32 %v186, %v236
    %v240 = vmul.f32 %v187, %v236
    %245 = vrot.lane.b32.xlu0 %v237, 126
    %v246 = vpop.permute.xlu0 %245
    %247 = vrot.lane.b32.xlu0 %v238, 126
    %v248 = vpop.permute.xlu0 %247
    %249 = vrot.lane.b32.xlu0 %v239, 126
    %v250 = vpop.permute.xlu0 %249
    %251 = vrot.lane.b32.xlu0 %v240, 126
    %v252 = vpop.permute.xlu0 %251
    %vm253 = vcmask 1031168
    %v254 = vsel %vm253, %v246, %v248
    %v255 = vsel %vm253, %v250, %v252
    %v258 = vadd.f32 %v234, %v254
    %v259 = vadd.f32 %v235, %v255
    %v260 = vstv %s56
    %v261 = vmul.f32 %v184, %v260
    %v262 = vmul.f32 %v185, %v260
    %v263 = vmul.f32 %v186, %v260
    %v264 = vmul.f32 %v187, %v260
    %269 = vrot.lane.b32.xlu0 %v261, 125
    %v270 = vpop.permute.xlu0 %269
    %271 = vrot.lane.b32.xlu0 %v262, 125
    %v272 = vpop.permute.xlu0 %271
    %273 = vrot.lane.b32.xlu0 %v263, 125
    %v274 = vpop.permute.xlu0 %273
    %275 = vrot.lane.b32.xlu0 %v264, 125
    %v276 = vpop.permute.xlu0 %275
    %vm277 = vcmask 1022976
    %v278 = vsel %vm277, %v270, %v272
    %v279 = vsel %vm277, %v274, %v276
    %v282 = vadd.f32 %v258, %v278
    %v283 = vadd.f32 %v259, %v279
    %v284 = vstv %s57
    %v285 = vmul.f32 %v184, %v284
    %v286 = vmul.f32 %v185, %v284
    %v287 = vmul.f32 %v186, %v284
    %v288 = vmul.f32 %v187, %v284
    %293 = vrot.lane.b32.xlu0 %v285, 124
    %v294 = vpop.permute.xlu0 %293
    %295 = vrot.lane.b32.xlu0 %v286, 124
    %v296 = vpop.permute.xlu0 %295
    %297 = vrot.lane.b32.xlu0 %v287, 124
    %v298 = vpop.permute.xlu0 %297
    %299 = vrot.lane.b32.xlu0 %v288, 124
    %v300 = vpop.permute.xlu0 %299
    %vm301 = vcmask 1014784
    %v302 = vsel %vm301, %v294, %v296
    %v303 = vsel %vm301, %v298, %v300
    %v306 = vadd.f32 %v282, %v302
    %v307 = vadd.f32 %v283, %v303
    %v308 = vstv %s58
    %v309 = vmul.f32 %v184, %v308
    %v310 = vmul.f32 %v185, %v308
    %v311 = vmul.f32 %v186, %v308
    %v312 = vmul.f32 %v187, %v308
    %317 = vrot.lane.b32.xlu0 %v309, 123
    %v318 = vpop.permute.xlu0 %317
    %319 = vrot.lane.b32.xlu0 %v310, 123
    %v320 = vpop.permute.xlu0 %319
    %321 = vrot.lane.b32.xlu0 %v311, 123
    %v322 = vpop.permute.xlu0 %321
    %323 = vrot.lane.b32.xlu0 %v312, 123
    %v324 = vpop.permute.xlu0 %323
    %vm325 = vcmask 1006592
    %v326 = vsel %vm325, %v318, %v320
    %v327 = vsel %vm325, %v322, %v324
    %v330 = vadd.f32 %v306, %v326
    %v331 = vadd.f32 %v307, %v327
    %v332 = vstv %s59
    %v333 = vmul.f32 %v184, %v332
    %v334 = vmul.f32 %v185, %v332
    %v335 = vmul.f32 %v186, %v332
    %v336 = vmul.f32 %v187, %v332
    %341 = vrot.lane.b32.xlu0 %v333, 122
    %v342 = vpop.permute.xlu0 %341
    %343 = vrot.lane.b32.xlu0 %v334, 122
    %v344 = vpop.permute.xlu0 %343
    %345 = vrot.lane.b32.xlu0 %v335, 122
    %v346 = vpop.permute.xlu0 %345
    %347 = vrot.lane.b32.xlu0 %v336, 122
    %v348 = vpop.permute.xlu0 %347
    %vm349 = vcmask 998400
    %v350 = vsel %vm349, %v342, %v344
    %v351 = vsel %vm349, %v346, %v348
    %v354 = vadd.f32 %v330, %v350
    %v355 = vadd.f32 %v331, %v351
    %v356 = vstv %s60
    %v357 = vmul.f32 %v184, %v356
    %v358 = vmul.f32 %v186, %v356
    %v359 = vstv %s61
    %v360 = vmul.f32 %v184, %v359
    %v361 = vmul.f32 %v185, %v359
    %v362 = vmul.f32 %v186, %v359
    %v363 = vmul.f32 %v187, %v359
    %368 = vrot.lane.b32.xlu0 %v360, 127
    %v369 = vpop.permute.xlu0 %368
    %370 = vrot.lane.b32.xlu0 %v361, 127
    %v371 = vpop.permute.xlu0 %370
    %372 = vrot.lane.b32.xlu0 %v362, 127
    %v373 = vpop.permute.xlu0 %372
    %374 = vrot.lane.b32.xlu0 %v363, 127
    %v375 = vpop.permute.xlu0 %374
    %v376 = vsel %vm229, %v369, %v371
    %v377 = vsel %vm229, %v373, %v375
    %v380 = vadd.f32 %v357, %v376
    %v381 = vadd.f32 %v358, %v377
    %v382 = vstv %s62
    %v383 = vmul.f32 %v184, %v382
    %v384 = vmul.f32 %v185, %v382
    %v385 = vmul.f32 %v186, %v382
    %v386 = vmul.f32 %v187, %v382
    %391 = vrot.lane.b32.xlu0 %v383, 126
    %v392 = vpop.permute.xlu0 %391
    %393 = vrot.lane.b32.xlu0 %v384, 126
    %v394 = vpop.permute.xlu0 %393
    %395 = vrot.lane.b32.xlu0 %v385, 126
    %v396 = vpop.permute.xlu0 %395
    %397 = vrot.lane.b32.xlu0 %v386, 126
    %v398 = vpop.permute.xlu0 %397
    %v399 = vsel %vm253, %v392, %v394
    %v400 = vsel %vm253, %v396, %v398
    %v403 = vadd.f32 %v380, %v399
    %v404 = vadd.f32 %v381, %v400
    %v405 = vstv %s63
    %v406 = vmul.f32 %v184, %v405
    %v407 = vmul.f32 %v185, %v405
    %v408 = vmul.f32 %v186, %v405
    %v409 = vmul.f32 %v187, %v405
    %414 = vrot.lane.b32.xlu0 %v406, 125
    %v415 = vpop.permute.xlu0 %414
    %416 = vrot.lane.b32.xlu0 %v407, 125
    %v417 = vpop.permute.xlu0 %416
    %418 = vrot.lane.b32.xlu0 %v408, 125
    %v419 = vpop.permute.xlu0 %418
    %420 = vrot.lane.b32.xlu0 %v409, 125
    %v421 = vpop.permute.xlu0 %420
    %v422 = vsel %vm277, %v415, %v417
    %v423 = vsel %vm277, %v419, %v421
    %v426 = vadd.f32 %v403, %v422
    %v427 = vadd.f32 %v404, %v423
    %v428 = vstv %s64
    %v429 = vmul.f32 %v184, %v428
    %v430 = vmul.f32 %v185, %v428
    %v431 = vmul.f32 %v186, %v428
    %v432 = vmul.f32 %v187, %v428
    %437 = vrot.lane.b32.xlu0 %v429, 124
    %v438 = vpop.permute.xlu0 %437
    %439 = vrot.lane.b32.xlu0 %v430, 124
    %v440 = vpop.permute.xlu0 %439
    %441 = vrot.lane.b32.xlu0 %v431, 124
    %v442 = vpop.permute.xlu0 %441
    %443 = vrot.lane.b32.xlu0 %v432, 124
    %v444 = vpop.permute.xlu0 %443
    %v445 = vsel %vm301, %v438, %v440
    %v446 = vsel %vm301, %v442, %v444
    %v449 = vadd.f32 %v426, %v445
    %v450 = vadd.f32 %v427, %v446
    %v451 = vstv %s65
    %v452 = vmul.f32 %v184, %v451
    %v453 = vmul.f32 %v185, %v451
    %v454 = vmul.f32 %v186, %v451
    %v455 = vmul.f32 %v187, %v451
    %460 = vrot.lane.b32.xlu0 %v452, 123
    %v461 = vpop.permute.xlu0 %460
    %462 = vrot.lane.b32.xlu0 %v453, 123
    %v463 = vpop.permute.xlu0 %462
    %464 = vrot.lane.b32.xlu0 %v454, 123
    %v465 = vpop.permute.xlu0 %464
    %466 = vrot.lane.b32.xlu0 %v455, 123
    %v467 = vpop.permute.xlu0 %466
    %v468 = vsel %vm325, %v461, %v463
    %v469 = vsel %vm325, %v465, %v467
    %v472 = vadd.f32 %v449, %v468
    %v473 = vadd.f32 %v450, %v469
    %v474 = vstv %s66
    %v475 = vmul.f32 %v184, %v474
    %v476 = vmul.f32 %v185, %v474
    %v477 = vmul.f32 %v186, %v474
    %v478 = vmul.f32 %v187, %v474
    %483 = vrot.lane.b32.xlu0 %v475, 122
    %v484 = vpop.permute.xlu0 %483
    %485 = vrot.lane.b32.xlu0 %v476, 122
    %v486 = vpop.permute.xlu0 %485
    %487 = vrot.lane.b32.xlu0 %v477, 122
    %v488 = vpop.permute.xlu0 %487
    %489 = vrot.lane.b32.xlu0 %v478, 122
    %v490 = vpop.permute.xlu0 %489
    %v491 = vsel %vm349, %v484, %v486
    %v492 = vsel %vm349, %v488, %v490
    %v495 = vadd.f32 %v472, %v491
    %v496 = vadd.f32 %v473, %v492
    %v497 = vstv %s67
    %v498 = vmul.f32 %v191, %v497
    %v499 = vmul.f32 %v193, %v497
    %v500 = vstv %s68
    %v501 = vmul.f32 %v191, %v500
    %v502 = vmul.f32 %v192, %v500
    %v503 = vmul.f32 %v193, %v500
    %v504 = vmul.f32 %v194, %v500
    %509 = vrot.lane.b32.xlu0 %v501, 127
    %v510 = vpop.permute.xlu0 %509
    %511 = vrot.lane.b32.xlu0 %v502, 127
    %v512 = vpop.permute.xlu0 %511
    %513 = vrot.lane.b32.xlu0 %v503, 127
    %v514 = vpop.permute.xlu0 %513
    %515 = vrot.lane.b32.xlu0 %v504, 127
    %v516 = vpop.permute.xlu0 %515
    %v517 = vsel %vm229, %v510, %v512
    %v518 = vsel %vm229, %v514, %v516
    %v521 = vadd.f32 %v498, %v517
    %v522 = vadd.f32 %v499, %v518
    %v523 = vstv %s69
    %v524 = vmul.f32 %v191, %v523
    %v525 = vmul.f32 %v192, %v523
    %v526 = vmul.f32 %v193, %v523
    %v527 = vmul.f32 %v194, %v523
    %532 = vrot.lane.b32.xlu0 %v524, 126
    %v533 = vpop.permute.xlu0 %532
    %534 = vrot.lane.b32.xlu0 %v525, 126
    %v535 = vpop.permute.xlu0 %534
    %536 = vrot.lane.b32.xlu0 %v526, 126
    %v537 = vpop.permute.xlu0 %536
    %538 = vrot.lane.b32.xlu0 %v527, 126
    %v539 = vpop.permute.xlu0 %538
    %v540 = vsel %vm253, %v533, %v535
    %v541 = vsel %vm253, %v537, %v539
    %v544 = vadd.f32 %v521, %v540
    %v545 = vadd.f32 %v522, %v541
    %v546 = vstv %s70
    %v547 = vmul.f32 %v191, %v546
    %v548 = vmul.f32 %v192, %v546
    %v549 = vmul.f32 %v193, %v546
    %v550 = vmul.f32 %v194, %v546
    %555 = vrot.lane.b32.xlu0 %v547, 125
    %v556 = vpop.permute.xlu0 %555
    %557 = vrot.lane.b32.xlu0 %v548, 125
    %v558 = vpop.permute.xlu0 %557
    %559 = vrot.lane.b32.xlu0 %v549, 125
    %v560 = vpop.permute.xlu0 %559
    %561 = vrot.lane.b32.xlu0 %v550, 125
    %v562 = vpop.permute.xlu0 %561
    %v563 = vsel %vm277, %v556, %v558
    %v564 = vsel %vm277, %v560, %v562
    %v567 = vadd.f32 %v544, %v563
    %v568 = vadd.f32 %v545, %v564
    %v569 = vstv %s71
    %v570 = vmul.f32 %v191, %v569
    %v571 = vmul.f32 %v192, %v569
    %v572 = vmul.f32 %v193, %v569
    %v573 = vmul.f32 %v194, %v569
    %578 = vrot.lane.b32.xlu0 %v570, 124
    %v579 = vpop.permute.xlu0 %578
    %580 = vrot.lane.b32.xlu0 %v571, 124
    %v581 = vpop.permute.xlu0 %580
    %582 = vrot.lane.b32.xlu0 %v572, 124
    %v583 = vpop.permute.xlu0 %582
    %584 = vrot.lane.b32.xlu0 %v573, 124
    %v585 = vpop.permute.xlu0 %584
    %v586 = vsel %vm301, %v579, %v581
    %v587 = vsel %vm301, %v583, %v585
    %v590 = vadd.f32 %v567, %v586
    %v591 = vadd.f32 %v568, %v587
    %v592 = vstv %s72
    %v593 = vmul.f32 %v191, %v592
    %v594 = vmul.f32 %v192, %v592
    %v595 = vmul.f32 %v193, %v592
    %v596 = vmul.f32 %v194, %v592
    %601 = vrot.lane.b32.xlu0 %v593, 123
    %v602 = vpop.permute.xlu0 %601
    %603 = vrot.lane.b32.xlu0 %v594, 123
    %v604 = vpop.permute.xlu0 %603
    %605 = vrot.lane.b32.xlu0 %v595, 123
    %v606 = vpop.permute.xlu0 %605
    %607 = vrot.lane.b32.xlu0 %v596, 123
    %v608 = vpop.permute.xlu0 %607
    %v609 = vsel %vm325, %v602, %v604
    %v610 = vsel %vm325, %v606, %v608
    %v613 = vadd.f32 %v590, %v609
    %v614 = vadd.f32 %v591, %v610
    %v615 = vstv %s73
    %v616 = vmul.f32 %v191, %v615
    %v617 = vmul.f32 %v192, %v615
    %v618 = vmul.f32 %v193, %v615
    %v619 = vmul.f32 %v194, %v615
    %624 = vrot.lane.b32.xlu0 %v616, 122
    %v625 = vpop.permute.xlu0 %624
    %626 = vrot.lane.b32.xlu0 %v617, 122
    %v627 = vpop.permute.xlu0 %626
    %628 = vrot.lane.b32.xlu0 %v618, 122
    %v629 = vpop.permute.xlu0 %628
    %630 = vrot.lane.b32.xlu0 %v619, 122
    %v631 = vpop.permute.xlu0 %630
    %v632 = vsel %vm349, %v625, %v627
    %v633 = vsel %vm349, %v629, %v631
    %v636 = vadd.f32 %v613, %v632
    %v637 = vadd.f32 %v614, %v633
    %v638 = vstv %s74
    %v639 = vmul.f32 %v191, %v638
    %v640 = vmul.f32 %v193, %v638
    %v641 = vstv %s75
    %v642 = vmul.f32 %v191, %v641
    %v643 = vmul.f32 %v192, %v641
    %v644 = vmul.f32 %v193, %v641
    %v645 = vmul.f32 %v194, %v641
    %650 = vrot.lane.b32.xlu0 %v642, 127
    %v651 = vpop.permute.xlu0 %650
    %652 = vrot.lane.b32.xlu0 %v643, 127
    %v653 = vpop.permute.xlu0 %652
    %654 = vrot.lane.b32.xlu0 %v644, 127
    %v655 = vpop.permute.xlu0 %654
    %656 = vrot.lane.b32.xlu0 %v645, 127
    %v657 = vpop.permute.xlu0 %656
    %v658 = vsel %vm229, %v651, %v653
    %v659 = vsel %vm229, %v655, %v657
    %v662 = vadd.f32 %v639, %v658
    %v663 = vadd.f32 %v640, %v659
    %v664 = vstv %s76
    %v665 = vmul.f32 %v191, %v664
    %v666 = vmul.f32 %v192, %v664
    %v667 = vmul.f32 %v193, %v664
    %v668 = vmul.f32 %v194, %v664
    %673 = vrot.lane.b32.xlu0 %v665, 126
    %v674 = vpop.permute.xlu0 %673
    %675 = vrot.lane.b32.xlu0 %v666, 126
    %v676 = vpop.permute.xlu0 %675
    %677 = vrot.lane.b32.xlu0 %v667, 126
    %v678 = vpop.permute.xlu0 %677
    %679 = vrot.lane.b32.xlu0 %v668, 126
    %v680 = vpop.permute.xlu0 %679
    %v681 = vsel %vm253, %v674, %v676
    %v682 = vsel %vm253, %v678, %v680
    %v685 = vadd.f32 %v662, %v681
    %v686 = vadd.f32 %v663, %v682
    %v687 = vstv %s77
    %v688 = vmul.f32 %v191, %v687
    %v689 = vmul.f32 %v192, %v687
    %v690 = vmul.f32 %v193, %v687
    %v691 = vmul.f32 %v194, %v687
    %696 = vrot.lane.b32.xlu0 %v688, 125
    %v697 = vpop.permute.xlu0 %696
    %698 = vrot.lane.b32.xlu0 %v689, 125
    %v699 = vpop.permute.xlu0 %698
    %700 = vrot.lane.b32.xlu0 %v690, 125
    %v701 = vpop.permute.xlu0 %700
    %702 = vrot.lane.b32.xlu0 %v691, 125
    %v703 = vpop.permute.xlu0 %702
    %v704 = vsel %vm277, %v697, %v699
    %v705 = vsel %vm277, %v701, %v703
    %v708 = vadd.f32 %v685, %v704
    %v709 = vadd.f32 %v686, %v705
    %v710 = vstv %s78
    %v711 = vmul.f32 %v191, %v710
    %v712 = vmul.f32 %v192, %v710
    %v713 = vmul.f32 %v193, %v710
    %v714 = vmul.f32 %v194, %v710
    %719 = vrot.lane.b32.xlu0 %v711, 124
    %v720 = vpop.permute.xlu0 %719
    %721 = vrot.lane.b32.xlu0 %v712, 124
    %v722 = vpop.permute.xlu0 %721
    %723 = vrot.lane.b32.xlu0 %v713, 124
    %v724 = vpop.permute.xlu0 %723
    %725 = vrot.lane.b32.xlu0 %v714, 124
    %v726 = vpop.permute.xlu0 %725
    %v727 = vsel %vm301, %v720, %v722
    %v728 = vsel %vm301, %v724, %v726
    %v731 = vadd.f32 %v708, %v727
    %v732 = vadd.f32 %v709, %v728
    %v733 = vstv %s79
    %v734 = vmul.f32 %v191, %v733
    %v735 = vmul.f32 %v192, %v733
    %v736 = vmul.f32 %v193, %v733
    %v737 = vmul.f32 %v194, %v733
    %742 = vrot.lane.b32.xlu0 %v734, 123
    %v743 = vpop.permute.xlu0 %742
    %744 = vrot.lane.b32.xlu0 %v735, 123
    %v745 = vpop.permute.xlu0 %744
    %746 = vrot.lane.b32.xlu0 %v736, 123
    %v747 = vpop.permute.xlu0 %746
    %748 = vrot.lane.b32.xlu0 %v737, 123
    %v749 = vpop.permute.xlu0 %748
    %v750 = vsel %vm325, %v743, %v745
    %v751 = vsel %vm325, %v747, %v749
    %v754 = vadd.f32 %v731, %v750
    %v755 = vadd.f32 %v732, %v751
    %v756 = vstv %s80
    %v757 = vmul.f32 %v191, %v756
    %v758 = vmul.f32 %v192, %v756
    %v759 = vmul.f32 %v193, %v756
    %v760 = vmul.f32 %v194, %v756
    %765 = vrot.lane.b32.xlu0 %v757, 122
    %v766 = vpop.permute.xlu0 %765
    %767 = vrot.lane.b32.xlu0 %v758, 122
    %v768 = vpop.permute.xlu0 %767
    %769 = vrot.lane.b32.xlu0 %v759, 122
    %v770 = vpop.permute.xlu0 %769
    %771 = vrot.lane.b32.xlu0 %v760, 122
    %v772 = vpop.permute.xlu0 %771
    %v773 = vsel %vm349, %v766, %v768
    %v774 = vsel %vm349, %v770, %v772
    %v777 = vadd.f32 %v754, %v773
    %v778 = vadd.f32 %v755, %v774
    %v779 = vstv %s81
    %v780 = vmul.f32 %v198, %v779
    %v781 = vmul.f32 %v200, %v779
    %v782 = vstv %s82
    %v783 = vmul.f32 %v198, %v782
    %v784 = vmul.f32 %v199, %v782
    %v785 = vmul.f32 %v200, %v782
    %v786 = vmul.f32 %v201, %v782
    %791 = vrot.lane.b32.xlu0 %v783, 127
    %v792 = vpop.permute.xlu0 %791
    %793 = vrot.lane.b32.xlu0 %v784, 127
    %v794 = vpop.permute.xlu0 %793
    %795 = vrot.lane.b32.xlu0 %v785, 127
    %v796 = vpop.permute.xlu0 %795
    %797 = vrot.lane.b32.xlu0 %v786, 127
    %v798 = vpop.permute.xlu0 %797
    %v799 = vsel %vm229, %v792, %v794
    %v800 = vsel %vm229, %v796, %v798
    %v803 = vadd.f32 %v780, %v799
    %v804 = vadd.f32 %v781, %v800
    %v805 = vstv %s83
    %v806 = vmul.f32 %v198, %v805
    %v807 = vmul.f32 %v199, %v805
    %v808 = vmul.f32 %v200, %v805
    %v809 = vmul.f32 %v201, %v805
    %814 = vrot.lane.b32.xlu0 %v806, 126
    %v815 = vpop.permute.xlu0 %814
    %816 = vrot.lane.b32.xlu0 %v807, 126
    %v817 = vpop.permute.xlu0 %816
    %818 = vrot.lane.b32.xlu0 %v808, 126
    %v819 = vpop.permute.xlu0 %818
    %820 = vrot.lane.b32.xlu0 %v809, 126
    %v821 = vpop.permute.xlu0 %820
    %v822 = vsel %vm253, %v815, %v817
    %v823 = vsel %vm253, %v819, %v821
    %v826 = vadd.f32 %v803, %v822
    %v827 = vadd.f32 %v804, %v823
    %v828 = vstv %s84
    %v829 = vmul.f32 %v198, %v828
    %v830 = vmul.f32 %v199, %v828
    %v831 = vmul.f32 %v200, %v828
    %v832 = vmul.f32 %v201, %v828
    %837 = vrot.lane.b32.xlu0 %v829, 125
    %v838 = vpop.permute.xlu0 %837
    %839 = vrot.lane.b32.xlu0 %v830, 125
    %v840 = vpop.permute.xlu0 %839
    %841 = vrot.lane.b32.xlu0 %v831, 125
    %v842 = vpop.permute.xlu0 %841
    %843 = vrot.lane.b32.xlu0 %v832, 125
    %v844 = vpop.permute.xlu0 %843
    %v845 = vsel %vm277, %v838, %v840
    %v846 = vsel %vm277, %v842, %v844
    %v849 = vadd.f32 %v826, %v845
    %v850 = vadd.f32 %v827, %v846
    %v851 = vstv %s85
    %v852 = vmul.f32 %v198, %v851
    %v853 = vmul.f32 %v199, %v851
    %v854 = vmul.f32 %v200, %v851
    %v855 = vmul.f32 %v201, %v851
    %860 = vrot.lane.b32.xlu0 %v852, 124
    %v861 = vpop.permute.xlu0 %860
    %862 = vrot.lane.b32.xlu0 %v853, 124
    %v863 = vpop.permute.xlu0 %862
    %864 = vrot.lane.b32.xlu0 %v854, 124
    %v865 = vpop.permute.xlu0 %864
    %866 = vrot.lane.b32.xlu0 %v855, 124
    %v867 = vpop.permute.xlu0 %866
    %v868 = vsel %vm301, %v861, %v863
    %v869 = vsel %vm301, %v865, %v867
    %v872 = vadd.f32 %v849, %v868
    %v873 = vadd.f32 %v850, %v869
    %v874 = vstv %s86
    %v875 = vmul.f32 %v198, %v874
    %v876 = vmul.f32 %v199, %v874
    %v877 = vmul.f32 %v200, %v874
    %v878 = vmul.f32 %v201, %v874
    %883 = vrot.lane.b32.xlu0 %v875, 123
    %v884 = vpop.permute.xlu0 %883
    %885 = vrot.lane.b32.xlu0 %v876, 123
    %v886 = vpop.permute.xlu0 %885
    %887 = vrot.lane.b32.xlu0 %v877, 123
    %v888 = vpop.permute.xlu0 %887
    %889 = vrot.lane.b32.xlu0 %v878, 123
    %v890 = vpop.permute.xlu0 %889
    %v891 = vsel %vm325, %v884, %v886
    %v892 = vsel %vm325, %v888, %v890
    %v895 = vadd.f32 %v872, %v891
    %v896 = vadd.f32 %v873, %v892
    %v897 = vstv %s87
    %v898 = vmul.f32 %v198, %v897
    %v899 = vmul.f32 %v199, %v897
    %v900 = vmul.f32 %v200, %v897
    %v901 = vmul.f32 %v201, %v897
    %906 = vrot.lane.b32.xlu0 %v898, 122
    %v907 = vpop.permute.xlu0 %906
    %908 = vrot.lane.b32.xlu0 %v899, 122
    %v909 = vpop.permute.xlu0 %908
    %910 = vrot.lane.b32.xlu0 %v900, 122
    %v911 = vpop.permute.xlu0 %910
    %912 = vrot.lane.b32.xlu0 %v901, 122
    %v913 = vpop.permute.xlu0 %912
    %v914 = vsel %vm349, %v907, %v909
    %v915 = vsel %vm349, %v911, %v913
    %v918 = vadd.f32 %v895, %v914
    %v919 = vadd.f32 %v896, %v915
    %v920 = vstv %s88
    %v921 = vmul.f32 %v198, %v920
    %v922 = vmul.f32 %v200, %v920
    %v923 = vstv %s89
    %v924 = vmul.f32 %v198, %v923
    %v925 = vmul.f32 %v199, %v923
    %v926 = vmul.f32 %v200, %v923
    %v927 = vmul.f32 %v201, %v923
    %932 = vrot.lane.b32.xlu0 %v924, 127
    %v933 = vpop.permute.xlu0 %932
    %934 = vrot.lane.b32.xlu0 %v925, 127
    %v935 = vpop.permute.xlu0 %934
    %936 = vrot.lane.b32.xlu0 %v926, 127
    %v937 = vpop.permute.xlu0 %936
    %938 = vrot.lane.b32.xlu0 %v927, 127
    %v939 = vpop.permute.xlu0 %938
    %v940 = vsel %vm229, %v933, %v935
    %v941 = vsel %vm229, %v937, %v939
    %v944 = vadd.f32 %v921, %v940
    %v945 = vadd.f32 %v922, %v941
    %v946 = vstv %s90
    %v947 = vmul.f32 %v198, %v946
    %v948 = vmul.f32 %v199, %v946
    %v949 = vmul.f32 %v200, %v946
    %v950 = vmul.f32 %v201, %v946
    %955 = vrot.lane.b32.xlu0 %v947, 126
    %v956 = vpop.permute.xlu0 %955
    %957 = vrot.lane.b32.xlu0 %v948, 126
    %v958 = vpop.permute.xlu0 %957
    %959 = vrot.lane.b32.xlu0 %v949, 126
    %v960 = vpop.permute.xlu0 %959
    %961 = vrot.lane.b32.xlu0 %v950, 126
    %v962 = vpop.permute.xlu0 %961
    %v963 = vsel %vm253, %v956, %v958
    %v964 = vsel %vm253, %v960, %v962
    %v967 = vadd.f32 %v944, %v963
    %v968 = vadd.f32 %v945, %v964
    %v969 = vstv %s91
    %v970 = vmul.f32 %v198, %v969
    %v971 = vmul.f32 %v199, %v969
    %v972 = vmul.f32 %v200, %v969
    %v973 = vmul.f32 %v201, %v969
    %978 = vrot.lane.b32.xlu0 %v970, 125
    %v979 = vpop.permute.xlu0 %978
    %980 = vrot.lane.b32.xlu0 %v971, 125
    %v981 = vpop.permute.xlu0 %980
    %982 = vrot.lane.b32.xlu0 %v972, 125
    %v983 = vpop.permute.xlu0 %982
    %984 = vrot.lane.b32.xlu0 %v973, 125
    %v985 = vpop.permute.xlu0 %984
    %v986 = vsel %vm277, %v979, %v981
    %v987 = vsel %vm277, %v983, %v985
    %v990 = vadd.f32 %v967, %v986
    %v991 = vadd.f32 %v968, %v987
    %v992 = vstv %s92
    %v993 = vmul.f32 %v198, %v992
    %v994 = vmul.f32 %v199, %v992
    %v995 = vmul.f32 %v200, %v992
    %v996 = vmul.f32 %v201, %v992
    %1001 = vrot.lane.b32.xlu0 %v993, 124
    %v1002 = vpop.permute.xlu0 %1001
    %1003 = vrot.lane.b32.xlu0 %v994, 124
    %v1004 = vpop.permute.xlu0 %1003
    %1005 = vrot.lane.b32.xlu0 %v995, 124
    %v1006 = vpop.permute.xlu0 %1005
    %1007 = vrot.lane.b32.xlu0 %v996, 124
    %v1008 = vpop.permute.xlu0 %1007
    %v1009 = vsel %vm301, %v1002, %v1004
    %v1010 = vsel %vm301, %v1006, %v1008
    %v1013 = vadd.f32 %v990, %v1009
    %v1014 = vadd.f32 %v991, %v1010
    %v1015 = vstv %s93
    %v1016 = vmul.f32 %v198, %v1015
    %v1017 = vmul.f32 %v199, %v1015
    %v1018 = vmul.f32 %v200, %v1015
    %v1019 = vmul.f32 %v201, %v1015
    %1024 = vrot.lane.b32.xlu0 %v1016, 123
    %v1025 = vpop.permute.xlu0 %1024
    %1026 = vrot.lane.b32.xlu0 %v1017, 123
    %v1027 = vpop.permute.xlu0 %1026
    %1028 = vrot.lane.b32.xlu0 %v1018, 123
    %v1029 = vpop.permute.xlu0 %1028
    %1030 = vrot.lane.b32.xlu0 %v1019, 123
    %v1031 = vpop.permute.xlu0 %1030
    %v1032 = vsel %vm325, %v1025, %v1027
    %v1033 = vsel %vm325, %v1029, %v1031
    %v1036 = vadd.f32 %v1013, %v1032
    %v1037 = vadd.f32 %v1014, %v1033
    %v1038 = vstv %s94
    %v1039 = vmul.f32 %v198, %v1038
    %v1040 = vmul.f32 %v199, %v1038
    %v1041 = vmul.f32 %v200, %v1038
    %v1042 = vmul.f32 %v201, %v1038
    %1047 = vrot.lane.b32.xlu0 %v1039, 122
    %v1048 = vpop.permute.xlu0 %1047
    %1049 = vrot.lane.b32.xlu0 %v1040, 122
    %v1050 = vpop.permute.xlu0 %1049
    %1051 = vrot.lane.b32.xlu0 %v1041, 122
    %v1052 = vpop.permute.xlu0 %1051
    %1053 = vrot.lane.b32.xlu0 %v1042, 122
    %v1054 = vpop.permute.xlu0 %1053
    %v1055 = vsel %vm349, %v1048, %v1050
    %v1056 = vsel %vm349, %v1052, %v1054
    %v1059 = vadd.f32 %v1036, %v1055
    %v1060 = vadd.f32 %v1037, %v1056
    %v1061 = vstv %s95
    %v1062 = vmul.f32 %v205, %v1061
    %v1063 = vmul.f32 %v207, %v1061
    %v1064 = vstv %s96
    %v1065 = vmul.f32 %v205, %v1064
    %v1066 = vmul.f32 %v206, %v1064
    %v1067 = vmul.f32 %v207, %v1064
    %v1068 = vmul.f32 %v208, %v1064
    %1073 = vrot.lane.b32.xlu0 %v1065, 127
    %v1074 = vpop.permute.xlu0 %1073
    %1075 = vrot.lane.b32.xlu0 %v1066, 127
    %v1076 = vpop.permute.xlu0 %1075
    %1077 = vrot.lane.b32.xlu0 %v1067, 127
    %v1078 = vpop.permute.xlu0 %1077
    %1079 = vrot.lane.b32.xlu0 %v1068, 127
    %v1080 = vpop.permute.xlu0 %1079
    %v1081 = vsel %vm229, %v1074, %v1076
    %v1082 = vsel %vm229, %v1078, %v1080
    %v1085 = vadd.f32 %v1062, %v1081
    %v1086 = vadd.f32 %v1063, %v1082
    %v1087 = vstv %s97
    %v1088 = vmul.f32 %v205, %v1087
    %v1089 = vmul.f32 %v206, %v1087
    %v1090 = vmul.f32 %v207, %v1087
    %v1091 = vmul.f32 %v208, %v1087
    %1096 = vrot.lane.b32.xlu0 %v1088, 126
    %v1097 = vpop.permute.xlu0 %1096
    %1098 = vrot.lane.b32.xlu0 %v1089, 126
    %v1099 = vpop.permute.xlu0 %1098
    %1100 = vrot.lane.b32.xlu0 %v1090, 126
    %v1101 = vpop.permute.xlu0 %1100
    %1102 = vrot.lane.b32.xlu0 %v1091, 126
    %v1103 = vpop.permute.xlu0 %1102
    %v1104 = vsel %vm253, %v1097, %v1099
    %v1105 = vsel %vm253, %v1101, %v1103
    %v1108 = vadd.f32 %v1085, %v1104
    %v1109 = vadd.f32 %v1086, %v1105
    %v1110 = vstv %s98
    %v1111 = vmul.f32 %v205, %v1110
    %v1112 = vmul.f32 %v206, %v1110
    %v1113 = vmul.f32 %v207, %v1110
    %v1114 = vmul.f32 %v208, %v1110
    %1119 = vrot.lane.b32.xlu0 %v1111, 125
    %v1120 = vpop.permute.xlu0 %1119
    %1121 = vrot.lane.b32.xlu0 %v1112, 125
    %v1122 = vpop.permute.xlu0 %1121
    %1123 = vrot.lane.b32.xlu0 %v1113, 125
    %v1124 = vpop.permute.xlu0 %1123
    %1125 = vrot.lane.b32.xlu0 %v1114, 125
    %v1126 = vpop.permute.xlu0 %1125
    %v1127 = vsel %vm277, %v1120, %v1122
    %v1128 = vsel %vm277, %v1124, %v1126
    %v1131 = vadd.f32 %v1108, %v1127
    %v1132 = vadd.f32 %v1109, %v1128
    %v1133 = vstv %s99
    %v1134 = vmul.f32 %v205, %v1133
    %v1135 = vmul.f32 %v206, %v1133
    %v1136 = vmul.f32 %v207, %v1133
    %v1137 = vmul.f32 %v208, %v1133
    %1142 = vrot.lane.b32.xlu0 %v1134, 124
    %v1143 = vpop.permute.xlu0 %1142
    %1144 = vrot.lane.b32.xlu0 %v1135, 124
    %v1145 = vpop.permute.xlu0 %1144
    %1146 = vrot.lane.b32.xlu0 %v1136, 124
    %v1147 = vpop.permute.xlu0 %1146
    %1148 = vrot.lane.b32.xlu0 %v1137, 124
    %v1149 = vpop.permute.xlu0 %1148
    %v1150 = vsel %vm301, %v1143, %v1145
    %v1151 = vsel %vm301, %v1147, %v1149
    %v1154 = vadd.f32 %v1131, %v1150
    %v1155 = vadd.f32 %v1132, %v1151
    %v1156 = vstv %s100
    %v1157 = vmul.f32 %v205, %v1156
    %v1158 = vmul.f32 %v206, %v1156
    %v1159 = vmul.f32 %v207, %v1156
    %v1160 = vmul.f32 %v208, %v1156
    %1165 = vrot.lane.b32.xlu0 %v1157, 123
    %v1166 = vpop.permute.xlu0 %1165
    %1167 = vrot.lane.b32.xlu0 %v1158, 123
    %v1168 = vpop.permute.xlu0 %1167
    %1169 = vrot.lane.b32.xlu0 %v1159, 123
    %v1170 = vpop.permute.xlu0 %1169
    %1171 = vrot.lane.b32.xlu0 %v1160, 123
    %v1172 = vpop.permute.xlu0 %1171
    %v1173 = vsel %vm325, %v1166, %v1168
    %v1174 = vsel %vm325, %v1170, %v1172
    %v1177 = vadd.f32 %v1154, %v1173
    %v1178 = vadd.f32 %v1155, %v1174
    %v1179 = vstv %s101
    %v1180 = vmul.f32 %v205, %v1179
    %v1181 = vmul.f32 %v206, %v1179
    %v1182 = vmul.f32 %v207, %v1179
    %v1183 = vmul.f32 %v208, %v1179
    %1188 = vrot.lane.b32.xlu0 %v1180, 122
    %v1189 = vpop.permute.xlu0 %1188
    %1190 = vrot.lane.b32.xlu0 %v1181, 122
    %v1191 = vpop.permute.xlu0 %1190
    %1192 = vrot.lane.b32.xlu0 %v1182, 122
    %v1193 = vpop.permute.xlu0 %1192
    %1194 = vrot.lane.b32.xlu0 %v1183, 122
    %v1195 = vpop.permute.xlu0 %1194
    %v1196 = vsel %vm349, %v1189, %v1191
    %v1197 = vsel %vm349, %v1193, %v1195
    %v1200 = vadd.f32 %v1177, %v1196
    %v1201 = vadd.f32 %v1178, %v1197
    %v1202 = vstv %s102
    %v1203 = vmul.f32 %v205, %v1202
    %v1204 = vmul.f32 %v207, %v1202
    %v1205 = vstv %s103
    %v1206 = vmul.f32 %v205, %v1205
    %v1207 = vmul.f32 %v206, %v1205
    %v1208 = vmul.f32 %v207, %v1205
    %v1209 = vmul.f32 %v208, %v1205
    %1214 = vrot.lane.b32.xlu0 %v1206, 127
    %v1215 = vpop.permute.xlu0 %1214
    %1216 = vrot.lane.b32.xlu0 %v1207, 127
    %v1217 = vpop.permute.xlu0 %1216
    %1218 = vrot.lane.b32.xlu0 %v1208, 127
    %v1219 = vpop.permute.xlu0 %1218
    %1220 = vrot.lane.b32.xlu0 %v1209, 127
    %v1221 = vpop.permute.xlu0 %1220
    %v1222 = vsel %vm229, %v1215, %v1217
    %v1223 = vsel %vm229, %v1219, %v1221
    %v1226 = vadd.f32 %v1203, %v1222
    %v1227 = vadd.f32 %v1204, %v1223
    %v1228 = vstv %s104
    %v1229 = vmul.f32 %v205, %v1228
    %v1230 = vmul.f32 %v206, %v1228
    %v1231 = vmul.f32 %v207, %v1228
    %v1232 = vmul.f32 %v208, %v1228
    %1237 = vrot.lane.b32.xlu0 %v1229, 126
    %v1238 = vpop.permute.xlu0 %1237
    %1239 = vrot.lane.b32.xlu0 %v1230, 126
    %v1240 = vpop.permute.xlu0 %1239
    %1241 = vrot.lane.b32.xlu0 %v1231, 126
    %v1242 = vpop.permute.xlu0 %1241
    %1243 = vrot.lane.b32.xlu0 %v1232, 126
    %v1244 = vpop.permute.xlu0 %1243
    %v1245 = vsel %vm253, %v1238, %v1240
    %v1246 = vsel %vm253, %v1242, %v1244
    %v1249 = vadd.f32 %v1226, %v1245
    %v1250 = vadd.f32 %v1227, %v1246
    %v1251 = vstv %s105
    %v1252 = vmul.f32 %v205, %v1251
    %v1253 = vmul.f32 %v206, %v1251
    %v1254 = vmul.f32 %v207, %v1251
    %v1255 = vmul.f32 %v208, %v1251
    %1260 = vrot.lane.b32.xlu0 %v1252, 125
    %v1261 = vpop.permute.xlu0 %1260
    %1262 = vrot.lane.b32.xlu0 %v1253, 125
    %v1263 = vpop.permute.xlu0 %1262
    %1264 = vrot.lane.b32.xlu0 %v1254, 125
    %v1265 = vpop.permute.xlu0 %1264
    %1266 = vrot.lane.b32.xlu0 %v1255, 125
    %v1267 = vpop.permute.xlu0 %1266
    %v1268 = vsel %vm277, %v1261, %v1263
    %v1269 = vsel %vm277, %v1265, %v1267
    %v1272 = vadd.f32 %v1249, %v1268
    %v1273 = vadd.f32 %v1250, %v1269
    %v1274 = vstv %s106
    %v1275 = vmul.f32 %v205, %v1274
    %v1276 = vmul.f32 %v206, %v1274
    %v1277 = vmul.f32 %v207, %v1274
    %v1278 = vmul.f32 %v208, %v1274
    %1283 = vrot.lane.b32.xlu0 %v1275, 124
    %v1284 = vpop.permute.xlu0 %1283
    %1285 = vrot.lane.b32.xlu0 %v1276, 124
    %v1286 = vpop.permute.xlu0 %1285
    %1287 = vrot.lane.b32.xlu0 %v1277, 124
    %v1288 = vpop.permute.xlu0 %1287
    %1289 = vrot.lane.b32.xlu0 %v1278, 124
    %v1290 = vpop.permute.xlu0 %1289
    %v1291 = vsel %vm301, %v1284, %v1286
    %v1292 = vsel %vm301, %v1288, %v1290
    %v1295 = vadd.f32 %v1272, %v1291
    %v1296 = vadd.f32 %v1273, %v1292
    %v1297 = vstv %s107
    %v1298 = vmul.f32 %v205, %v1297
    %v1299 = vmul.f32 %v206, %v1297
    %v1300 = vmul.f32 %v207, %v1297
    %v1301 = vmul.f32 %v208, %v1297
    %1306 = vrot.lane.b32.xlu0 %v1298, 123
    %v1307 = vpop.permute.xlu0 %1306
    %1308 = vrot.lane.b32.xlu0 %v1299, 123
    %v1309 = vpop.permute.xlu0 %1308
    %1310 = vrot.lane.b32.xlu0 %v1300, 123
    %v1311 = vpop.permute.xlu0 %1310
    %1312 = vrot.lane.b32.xlu0 %v1301, 123
    %v1313 = vpop.permute.xlu0 %1312
    %v1314 = vsel %vm325, %v1307, %v1309
    %v1315 = vsel %vm325, %v1311, %v1313
    %v1318 = vadd.f32 %v1295, %v1314
    %v1319 = vadd.f32 %v1296, %v1315
    %v1320 = vstv %s108
    %v1321 = vmul.f32 %v205, %v1320
    %v1322 = vmul.f32 %v206, %v1320
    %v1323 = vmul.f32 %v207, %v1320
    %v1324 = vmul.f32 %v208, %v1320
    %1329 = vrot.lane.b32.xlu0 %v1321, 122
    %v1330 = vpop.permute.xlu0 %1329
    %1331 = vrot.lane.b32.xlu0 %v1322, 122
    %v1332 = vpop.permute.xlu0 %1331
    %1333 = vrot.lane.b32.xlu0 %v1323, 122
    %v1334 = vpop.permute.xlu0 %1333
    %1335 = vrot.lane.b32.xlu0 %v1324, 122
    %v1336 = vpop.permute.xlu0 %1335
    %v1337 = vsel %vm349, %v1330, %v1332
    %v1338 = vsel %vm349, %v1334, %v1336
    %v1341 = vadd.f32 %v1318, %v1337
    %v1342 = vadd.f32 %v1319, %v1338
    %v1343 = vstv %s109
    %v1344 = vmul.f32 %v354, %v1343
    %v1345 = vmul.f32 %v355, %v1343
    %v1346 = vstv %s110
    %v1347 = vmul.f32 %v495, %v1346
    %v1348 = vmul.f32 %v496, %v1346
    %v1349 = vadd.f32 %v1344, %v1347
    %v1350 = vadd.f32 %v1345, %v1348
    %v1351 = vstv %s111
    %v1352 = vmul.f32 %v636, %v1351
    %v1353 = vmul.f32 %v637, %v1351
    %v1354 = vadd.f32 %v1349, %v1352
    %v1355 = vadd.f32 %v1350, %v1353
    %v1356 = vstv %s112
    %v1357 = vmul.f32 %v777, %v1356
    %v1358 = vmul.f32 %v778, %v1356
    %v1359 = vadd.f32 %v1354, %v1357
    %v1360 = vadd.f32 %v1355, %v1358
    %v1361 = vstv %s113
    %v1362 = vmul.f32 %v918, %v1361
    %v1363 = vmul.f32 %v919, %v1361
    %v1364 = vadd.f32 %v1359, %v1362
    %v1365 = vadd.f32 %v1360, %v1363
    %v1366 = vstv %s114
    %v1367 = vmul.f32 %v1059, %v1366
    %v1368 = vmul.f32 %v1060, %v1366
    %v1369 = vadd.f32 %v1364, %v1367
    %v1370 = vadd.f32 %v1365, %v1368
    %v1371 = vstv %s115
    %v1372 = vmul.f32 %v1200, %v1371
    %v1373 = vmul.f32 %v1201, %v1371
    %v1374 = vadd.f32 %v1369, %v1372
    %v1375 = vadd.f32 %v1370, %v1373
    %v1376 = vstv %s116
    %v1377 = vmul.f32 %v1341, %v1376
    %v1378 = vmul.f32 %v1342, %v1376
    %v1379 = vadd.f32 %v1374, %v1377
    %v1380 = vadd.f32 %v1375, %v1378
    %v1381 = vstv %s173
    %v1382 = vadd.f32 %v1379, %v1381
    %v1383 = vadd.f32 %v1380, %v1381
    %1384 = vst [vmem:[%s4] sm:$0xff] %v1382
    %1385 = vst [vmem:[%s4 + $0x8] sm:$0xff] %v1383
    %v1386 = vstv %s117
    %v1387 = vmul.f32 %v354, %v1386
    %v1388 = vmul.f32 %v355, %v1386
    %v1389 = vstv %s118
    %v1390 = vmul.f32 %v495, %v1389
    %v1391 = vmul.f32 %v496, %v1389
    %v1392 = vadd.f32 %v1387, %v1390
    %v1393 = vadd.f32 %v1388, %v1391
    %v1394 = vstv %s119
    %v1395 = vmul.f32 %v636, %v1394
    %v1396 = vmul.f32 %v637, %v1394
    %v1397 = vadd.f32 %v1392, %v1395
    %v1398 = vadd.f32 %v1393, %v1396
    %v1399 = vstv %s120
    %v1400 = vmul.f32 %v777, %v1399
    %v1401 = vmul.f32 %v778, %v1399
    %v1402 = vadd.f32 %v1397, %v1400
    %v1403 = vadd.f32 %v1398, %v1401
    %v1404 = vstv %s121
    %v1405 = vmul.f32 %v918, %v1404
    %v1406 = vmul.f32 %v919, %v1404
    %v1407 = vadd.f32 %v1402, %v1405
    %v1408 = vadd.f32 %v1403, %v1406
    %v1409 = vstv %s122
    %v1410 = vmul.f32 %v1059, %v1409
    %v1411 = vmul.f32 %v1060, %v1409
    %v1412 = vadd.f32 %v1407, %v1410
    %v1413 = vadd.f32 %v1408, %v1411
    %v1414 = vstv %s123
    %v1415 = vmul.f32 %v1200, %v1414
    %v1416 = vmul.f32 %v1201, %v1414
    %v1417 = vadd.f32 %v1412, %v1415
    %v1418 = vadd.f32 %v1413, %v1416
    %v1419 = vstv %s124
    %v1420 = vmul.f32 %v1341, %v1419
    %v1421 = vmul.f32 %v1342, %v1419
    %v1422 = vadd.f32 %v1417, %v1420
    %v1423 = vadd.f32 %v1418, %v1421
    %v1424 = vstv %s174
    %v1425 = vadd.f32 %v1422, %v1424
    %v1426 = vadd.f32 %v1423, %v1424
    %s1427 = sadd.s32 0, 32
    %s1428 = scalar_lea.vmem %s4, %s1427
    %1429 = vst [vmem:[%s1428] sm:$0xff] %v1425
    %1430 = vst [vmem:[%s1428 + $0x8] sm:$0xff] %v1426
    %v1431 = vstv %s125
    %v1432 = vmul.f32 %v354, %v1431
    %v1433 = vmul.f32 %v355, %v1431
    %v1434 = vstv %s126
    %v1435 = vmul.f32 %v495, %v1434
    %v1436 = vmul.f32 %v496, %v1434
    %v1437 = vadd.f32 %v1432, %v1435
    %v1438 = vadd.f32 %v1433, %v1436
    %v1439 = vstv %s127
    %v1440 = vmul.f32 %v636, %v1439
    %v1441 = vmul.f32 %v637, %v1439
    %v1442 = vadd.f32 %v1437, %v1440
    %v1443 = vadd.f32 %v1438, %v1441
    %v1444 = vstv %s128
    %v1445 = vmul.f32 %v777, %v1444
    %v1446 = vmul.f32 %v778, %v1444
    %v1447 = vadd.f32 %v1442, %v1445
    %v1448 = vadd.f32 %v1443, %v1446
    %v1449 = vstv %s129
    %v1450 = vmul.f32 %v918, %v1449
    %v1451 = vmul.f32 %v919, %v1449
    %v1452 = vadd.f32 %v1447, %v1450
    %v1453 = vadd.f32 %v1448, %v1451
    %v1454 = vstv %s130
    %v1455 = vmul.f32 %v1059, %v1454
    %v1456 = vmul.f32 %v1060, %v1454
    %v1457 = vadd.f32 %v1452, %v1455
    %v1458 = vadd.f32 %v1453, %v1456
    %v1459 = vstv %s131
    %v1460 = vmul.f32 %v1200, %v1459
    %v1461 = vmul.f32 %v1201, %v1459
    %v1462 = vadd.f32 %v1457, %v1460
    %v1463 = vadd.f32 %v1458, %v1461
    %v1464 = vstv %s132
    %v1465 = vmul.f32 %v1341, %v1464
    %v1466 = vmul.f32 %v1342, %v1464
    %v1467 = vadd.f32 %v1462, %v1465
    %v1468 = vadd.f32 %v1463, %v1466
    %v1469 = vstv %s175
    %v1470 = vadd.f32 %v1467, %v1469
    %v1471 = vadd.f32 %v1468, %v1469
    %s1472 = sadd.s32 0, 64
    %s1473 = scalar_lea.vmem %s4, %s1472
    %1474 = vst [vmem:[%s1473] sm:$0xff] %v1470
    %1475 = vst [vmem:[%s1473 + $0x8] sm:$0xff] %v1471
    %v1476 = vstv %s133
    %v1477 = vmul.f32 %v354, %v1476
    %v1478 = vmul.f32 %v355, %v1476
    %v1479 = vstv %s134
    %v1480 = vmul.f32 %v495, %v1479
    %v1481 = vmul.f32 %v496, %v1479
    %v1482 = vadd.f32 %v1477, %v1480
    %v1483 = vadd.f32 %v1478, %v1481
    %v1484 = vstv %s135
    %v1485 = vmul.f32 %v636, %v1484
    %v1486 = vmul.f32 %v637, %v1484
    %v1487 = vadd.f32 %v1482, %v1485
    %v1488 = vadd.f32 %v1483, %v1486
    %v1489 = vstv %s136
    %v1490 = vmul.f32 %v777, %v1489
    %v1491 = vmul.f32 %v778, %v1489
    %v1492 = vadd.f32 %v1487, %v1490
    %v1493 = vadd.f32 %v1488, %v1491
    %v1494 = vstv %s137
    %v1495 = vmul.f32 %v918, %v1494
    %v1496 = vmul.f32 %v919, %v1494
    %v1497 = vadd.f32 %v1492, %v1495
    %v1498 = vadd.f32 %v1493, %v1496
    %v1499 = vstv %s138
    %v1500 = vmul.f32 %v1059, %v1499
    %v1501 = vmul.f32 %v1060, %v1499
    %v1502 = vadd.f32 %v1497, %v1500
    %v1503 = vadd.f32 %v1498, %v1501
    %v1504 = vstv %s139
    %v1505 = vmul.f32 %v1200, %v1504
    %v1506 = vmul.f32 %v1201, %v1504
    %v1507 = vadd.f32 %v1502, %v1505
    %v1508 = vadd.f32 %v1503, %v1506
    %v1509 = vstv %s140
    %v1510 = vmul.f32 %v1341, %v1509
    %v1511 = vmul.f32 %v1342, %v1509
    %v1512 = vadd.f32 %v1507, %v1510
    %v1513 = vadd.f32 %v1508, %v1511
    %v1514 = vstv %s176
    %v1515 = vadd.f32 %v1512, %v1514
    %v1516 = vadd.f32 %v1513, %v1514
    %s1517 = sadd.s32 0, 96
    %s1518 = scalar_lea.vmem %s4, %s1517
    %1519 = vst [vmem:[%s1518] sm:$0xff] %v1515
    %1520 = vst [vmem:[%s1518 + $0x8] sm:$0xff] %v1516
    %v1521 = vstv %s141
    %v1522 = vmul.f32 %v354, %v1521
    %v1523 = vmul.f32 %v355, %v1521
    %v1524 = vstv %s142
    %v1525 = vmul.f32 %v495, %v1524
    %v1526 = vmul.f32 %v496, %v1524
    %v1527 = vadd.f32 %v1522, %v1525
    %v1528 = vadd.f32 %v1523, %v1526
    %v1529 = vstv %s143
    %v1530 = vmul.f32 %v636, %v1529
    %v1531 = vmul.f32 %v637, %v1529
    %v1532 = vadd.f32 %v1527, %v1530
    %v1533 = vadd.f32 %v1528, %v1531
    %v1534 = vstv %s144
    %v1535 = vmul.f32 %v777, %v1534
    %v1536 = vmul.f32 %v778, %v1534
    %v1537 = vadd.f32 %v1532, %v1535
    %v1538 = vadd.f32 %v1533, %v1536
    %v1539 = vstv %s145
    %v1540 = vmul.f32 %v918, %v1539
    %v1541 = vmul.f32 %v919, %v1539
    %v1542 = vadd.f32 %v1537, %v1540
    %v1543 = vadd.f32 %v1538, %v1541
    %v1544 = vstv %s146
    %v1545 = vmul.f32 %v1059, %v1544
    %v1546 = vmul.f32 %v1060, %v1544
    %v1547 = vadd.f32 %v1542, %v1545
    %v1548 = vadd.f32 %v1543, %v1546
    %v1549 = vstv %s147
    %v1550 = vmul.f32 %v1200, %v1549
    %v1551 = vmul.f32 %v1201, %v1549
    %v1552 = vadd.f32 %v1547, %v1550
    %v1553 = vadd.f32 %v1548, %v1551
    %v1554 = vstv %s148
    %v1555 = vmul.f32 %v1341, %v1554
    %v1556 = vmul.f32 %v1342, %v1554
    %v1557 = vadd.f32 %v1552, %v1555
    %v1558 = vadd.f32 %v1553, %v1556
    %v1559 = vstv %s177
    %v1560 = vadd.f32 %v1557, %v1559
    %v1561 = vadd.f32 %v1558, %v1559
    %s1562 = sadd.s32 0, 128
    %s1563 = scalar_lea.vmem %s4, %s1562
    %1564 = vst [vmem:[%s1563] sm:$0xff] %v1560
    %1565 = vst [vmem:[%s1563 + $0x8] sm:$0xff] %v1561
    %v1566 = vstv %s149
    %v1567 = vmul.f32 %v354, %v1566
    %v1568 = vmul.f32 %v355, %v1566
    %v1569 = vstv %s150
    %v1570 = vmul.f32 %v495, %v1569
    %v1571 = vmul.f32 %v496, %v1569
    %v1572 = vadd.f32 %v1567, %v1570
    %v1573 = vadd.f32 %v1568, %v1571
    %v1574 = vstv %s151
    %v1575 = vmul.f32 %v636, %v1574
    %v1576 = vmul.f32 %v637, %v1574
    %v1577 = vadd.f32 %v1572, %v1575
    %v1578 = vadd.f32 %v1573, %v1576
    %v1579 = vstv %s152
    %v1580 = vmul.f32 %v777, %v1579
    %v1581 = vmul.f32 %v778, %v1579
    %v1582 = vadd.f32 %v1577, %v1580
    %v1583 = vadd.f32 %v1578, %v1581
    %v1584 = vstv %s153
    %v1585 = vmul.f32 %v918, %v1584
    %v1586 = vmul.f32 %v919, %v1584
    %v1587 = vadd.f32 %v1582, %v1585
    %v1588 = vadd.f32 %v1583, %v1586
    %v1589 = vstv %s154
    %v1590 = vmul.f32 %v1059, %v1589
    %v1591 = vmul.f32 %v1060, %v1589
    %v1592 = vadd.f32 %v1587, %v1590
    %v1593 = vadd.f32 %v1588, %v1591
    %v1594 = vstv %s155
    %v1595 = vmul.f32 %v1200, %v1594
    %v1596 = vmul.f32 %v1201, %v1594
    %v1597 = vadd.f32 %v1592, %v1595
    %v1598 = vadd.f32 %v1593, %v1596
    %v1599 = vstv %s156
    %v1600 = vmul.f32 %v1341, %v1599
    %v1601 = vmul.f32 %v1342, %v1599
    %v1602 = vadd.f32 %v1597, %v1600
    %v1603 = vadd.f32 %v1598, %v1601
    %v1604 = vstv %s178
    %v1605 = vadd.f32 %v1602, %v1604
    %v1606 = vadd.f32 %v1603, %v1604
    %s1607 = sadd.s32 0, 160
    %s1608 = scalar_lea.vmem %s4, %s1607
    %1609 = vst [vmem:[%s1608] sm:$0xff] %v1605
    %1610 = vst [vmem:[%s1608 + $0x8] sm:$0xff] %v1606
    %v1611 = vstv %s157
    %v1612 = vmul.f32 %v354, %v1611
    %v1613 = vmul.f32 %v355, %v1611
    %v1614 = vstv %s158
    %v1615 = vmul.f32 %v495, %v1614
    %v1616 = vmul.f32 %v496, %v1614
    %v1617 = vadd.f32 %v1612, %v1615
    %v1618 = vadd.f32 %v1613, %v1616
    %v1619 = vstv %s159
    %v1620 = vmul.f32 %v636, %v1619
    %v1621 = vmul.f32 %v637, %v1619
    %v1622 = vadd.f32 %v1617, %v1620
    %v1623 = vadd.f32 %v1618, %v1621
    %v1624 = vstv %s160
    %v1625 = vmul.f32 %v777, %v1624
    %v1626 = vmul.f32 %v778, %v1624
    %v1627 = vadd.f32 %v1622, %v1625
    %v1628 = vadd.f32 %v1623, %v1626
    %v1629 = vstv %s161
    %v1630 = vmul.f32 %v918, %v1629
    %v1631 = vmul.f32 %v919, %v1629
    %v1632 = vadd.f32 %v1627, %v1630
    %v1633 = vadd.f32 %v1628, %v1631
    %v1634 = vstv %s162
    %v1635 = vmul.f32 %v1059, %v1634
    %v1636 = vmul.f32 %v1060, %v1634
    %v1637 = vadd.f32 %v1632, %v1635
    %v1638 = vadd.f32 %v1633, %v1636
    %v1639 = vstv %s163
    %v1640 = vmul.f32 %v1200, %v1639
    %v1641 = vmul.f32 %v1201, %v1639
    %v1642 = vadd.f32 %v1637, %v1640
    %v1643 = vadd.f32 %v1638, %v1641
    %v1644 = vstv %s164
    %v1645 = vmul.f32 %v1341, %v1644
    %v1646 = vmul.f32 %v1342, %v1644
    %v1647 = vadd.f32 %v1642, %v1645
    %v1648 = vadd.f32 %v1643, %v1646
    %v1649 = vstv %s179
    %v1650 = vadd.f32 %v1647, %v1649
    %v1651 = vadd.f32 %v1648, %v1649
    %s1652 = sadd.s32 0, 192
    %s1653 = scalar_lea.vmem %s4, %s1652
    %1654 = vst [vmem:[%s1653] sm:$0xff] %v1650
    %1655 = vst [vmem:[%s1653 + $0x8] sm:$0xff] %v1651
    %v1656 = vstv %s165
    %v1657 = vmul.f32 %v354, %v1656
    %v1658 = vmul.f32 %v355, %v1656
    %v1659 = vstv %s166
    %v1660 = vmul.f32 %v495, %v1659
    %v1661 = vmul.f32 %v496, %v1659
    %v1662 = vadd.f32 %v1657, %v1660
    %v1663 = vadd.f32 %v1658, %v1661
    %v1664 = vstv %s167
    %v1665 = vmul.f32 %v636, %v1664
    %v1666 = vmul.f32 %v637, %v1664
    %v1667 = vadd.f32 %v1662, %v1665
    %v1668 = vadd.f32 %v1663, %v1666
    %v1669 = vstv %s168
    %v1670 = vmul.f32 %v777, %v1669
    %v1671 = vmul.f32 %v778, %v1669
    %v1672 = vadd.f32 %v1667, %v1670
    %v1673 = vadd.f32 %v1668, %v1671
    %v1674 = vstv %s169
    %v1675 = vmul.f32 %v918, %v1674
    %v1676 = vmul.f32 %v919, %v1674
    %v1677 = vadd.f32 %v1672, %v1675
    %v1678 = vadd.f32 %v1673, %v1676
    %v1679 = vstv %s170
    %v1680 = vmul.f32 %v1059, %v1679
    %v1681 = vmul.f32 %v1060, %v1679
    %v1682 = vadd.f32 %v1677, %v1680
    %v1683 = vadd.f32 %v1678, %v1681
    %v1684 = vstv %s171
    %v1685 = vmul.f32 %v1200, %v1684
    %v1686 = vmul.f32 %v1201, %v1684
    %v1687 = vadd.f32 %v1682, %v1685
    %v1688 = vadd.f32 %v1683, %v1686
    %v1689 = vstv %s172
    %v1690 = vmul.f32 %v1341, %v1689
    %v1691 = vmul.f32 %v1342, %v1689
    %v1692 = vadd.f32 %v1687, %v1690
    %v1693 = vadd.f32 %v1688, %v1691
    %v1694 = vstv %s180
    %v1695 = vadd.f32 %v1692, %v1694
    %v1696 = vadd.f32 %v1693, %v1694
    %s1697 = sadd.s32 0, 224
    %s1698 = scalar_lea.vmem %s4, %s1697
    %1699 = vst [vmem:[%s1698] sm:$0xff] %v1695
    %1700 = vst [vmem:[%s1698 + $0x8] sm:$0xff] %v1696
    %s1701 = smul.u32 2, 2
    %s1702 = smul.addr %s1701, 8
    %s1703 = scalar_lea.vmem %s0, %s1702
    %v1704 = vld [vmem:[%s1703] sm:$0xff]
    %v1705 = vld [vmem:[%s1703 + $0x8] sm:$0xff]
    %v1706 = vld [vmem:[%s1703 + $0x10] sm:$0xff]
    %v1707 = vld [vmem:[%s1703 + $0x18] sm:$0xff]
    %s1708 = sadd.s32 %s1701, 8
    %s1709 = smul.addr %s1708, 8
    %s1710 = scalar_lea.vmem %s0, %s1709
    %v1711 = vld [vmem:[%s1710] sm:$0xff]
    %v1712 = vld [vmem:[%s1710 + $0x8] sm:$0xff]
    %v1713 = vld [vmem:[%s1710 + $0x10] sm:$0xff]
    %v1714 = vld [vmem:[%s1710 + $0x18] sm:$0xff]
    %s1715 = sadd.s32 %s1701, 16
    %s1716 = smul.addr %s1715, 8
    %s1717 = scalar_lea.vmem %s0, %s1716
    %v1718 = vld [vmem:[%s1717] sm:$0xff]
    %v1719 = vld [vmem:[%s1717 + $0x8] sm:$0xff]
    %v1720 = vld [vmem:[%s1717 + $0x10] sm:$0xff]
    %v1721 = vld [vmem:[%s1717 + $0x18] sm:$0xff]
    %s1722 = sadd.s32 %s1701, 24
    %s1723 = smul.addr %s1722, 8
    %s1724 = scalar_lea.vmem %s0, %s1723
    %v1725 = vld [vmem:[%s1724] sm:$0xff]
    %v1726 = vld [vmem:[%s1724 + $0x8] sm:$0xff]
    %v1727 = vld [vmem:[%s1724 + $0x10] sm:$0xff]
    %v1728 = vld [vmem:[%s1724 + $0x18] sm:$0xff]
    %v1729 = vmul.f32 %v1704, %v209
    %v1730 = vmul.f32 %v1706, %v209
    %v1731 = vmul.f32 %v1704, %v212
    %v1732 = vmul.f32 %v1705, %v212
    %v1733 = vmul.f32 %v1706, %v212
    %v1734 = vmul.f32 %v1707, %v212
    %1739 = vrot.lane.b32.xlu0 %v1731, 127
    %v1740 = vpop.permute.xlu0 %1739
    %1741 = vrot.lane.b32.xlu0 %v1732, 127
    %v1742 = vpop.permute.xlu0 %1741
    %1743 = vrot.lane.b32.xlu0 %v1733, 127
    %v1744 = vpop.permute.xlu0 %1743
    %1745 = vrot.lane.b32.xlu0 %v1734, 127
    %v1746 = vpop.permute.xlu0 %1745
    %v1747 = vsel %vm229, %v1740, %v1742
    %v1748 = vsel %vm229, %v1744, %v1746
    %v1751 = vadd.f32 %v1729, %v1747
    %v1752 = vadd.f32 %v1730, %v1748
    %v1753 = vmul.f32 %v1704, %v236
    %v1754 = vmul.f32 %v1705, %v236
    %v1755 = vmul.f32 %v1706, %v236
    %v1756 = vmul.f32 %v1707, %v236
    %1761 = vrot.lane.b32.xlu0 %v1753, 126
    %v1762 = vpop.permute.xlu0 %1761
    %1763 = vrot.lane.b32.xlu0 %v1754, 126
    %v1764 = vpop.permute.xlu0 %1763
    %1765 = vrot.lane.b32.xlu0 %v1755, 126
    %v1766 = vpop.permute.xlu0 %1765
    %1767 = vrot.lane.b32.xlu0 %v1756, 126
    %v1768 = vpop.permute.xlu0 %1767
    %v1769 = vsel %vm253, %v1762, %v1764
    %v1770 = vsel %vm253, %v1766, %v1768
    %v1773 = vadd.f32 %v1751, %v1769
    %v1774 = vadd.f32 %v1752, %v1770
    %v1775 = vmul.f32 %v1704, %v260
    %v1776 = vmul.f32 %v1705, %v260
    %v1777 = vmul.f32 %v1706, %v260
    %v1778 = vmul.f32 %v1707, %v260
    %1783 = vrot.lane.b32.xlu0 %v1775, 125
    %v1784 = vpop.permute.xlu0 %1783
    %1785 = vrot.lane.b32.xlu0 %v1776, 125
    %v1786 = vpop.permute.xlu0 %1785
    %1787 = vrot.lane.b32.xlu0 %v1777, 125
    %v1788 = vpop.permute.xlu0 %1787
    %1789 = vrot.lane.b32.xlu0 %v1778, 125
    %v1790 = vpop.permute.xlu0 %1789
    %v1791 = vsel %vm277, %v1784, %v1786
    %v1792 = vsel %vm277, %v1788, %v1790
    %v1795 = vadd.f32 %v1773, %v1791
    %v1796 = vadd.f32 %v1774, %v1792
    %v1797 = vmul.f32 %v1704, %v284
    %v1798 = vmul.f32 %v1705, %v284
    %v1799 = vmul.f32 %v1706, %v284
    %v1800 = vmul.f32 %v1707, %v284
    %1805 = vrot.lane.b32.xlu0 %v1797, 124
    %v1806 = vpop.permute.xlu0 %1805
    %1807 = vrot.lane.b32.xlu0 %v1798, 124
    %v1808 = vpop.permute.xlu0 %1807
    %1809 = vrot.lane.b32.xlu0 %v1799, 124
    %v1810 = vpop.permute.xlu0 %1809
    %1811 = vrot.lane.b32.xlu0 %v1800, 124
    %v1812 = vpop.permute.xlu0 %1811
    %v1813 = vsel %vm301, %v1806, %v1808
    %v1814 = vsel %vm301, %v1810, %v1812
    %v1817 = vadd.f32 %v1795, %v1813
    %v1818 = vadd.f32 %v1796, %v1814
    %v1819 = vmul.f32 %v1704, %v308
    %v1820 = vmul.f32 %v1705, %v308
    %v1821 = vmul.f32 %v1706, %v308
    %v1822 = vmul.f32 %v1707, %v308
    %1827 = vrot.lane.b32.xlu0 %v1819, 123
    %v1828 = vpop.permute.xlu0 %1827
    %1829 = vrot.lane.b32.xlu0 %v1820, 123
    %v1830 = vpop.permute.xlu0 %1829
    %1831 = vrot.lane.b32.xlu0 %v1821, 123
    %v1832 = vpop.permute.xlu0 %1831
    %1833 = vrot.lane.b32.xlu0 %v1822, 123
    %v1834 = vpop.permute.xlu0 %1833
    %v1835 = vsel %vm325, %v1828, %v1830
    %v1836 = vsel %vm325, %v1832, %v1834
    %v1839 = vadd.f32 %v1817, %v1835
    %v1840 = vadd.f32 %v1818, %v1836
    %v1841 = vmul.f32 %v1704, %v332
    %v1842 = vmul.f32 %v1705, %v332
    %v1843 = vmul.f32 %v1706, %v332
    %v1844 = vmul.f32 %v1707, %v332
    %1849 = vrot.lane.b32.xlu0 %v1841, 122
    %v1850 = vpop.permute.xlu0 %1849
    %1851 = vrot.lane.b32.xlu0 %v1842, 122
    %v1852 = vpop.permute.xlu0 %1851
    %1853 = vrot.lane.b32.xlu0 %v1843, 122
    %v1854 = vpop.permute.xlu0 %1853
    %1855 = vrot.lane.b32.xlu0 %v1844, 122
    %v1856 = vpop.permute.xlu0 %1855
    %v1857 = vsel %vm349, %v1850, %v1852
    %v1858 = vsel %vm349, %v1854, %v1856
    %v1861 = vadd.f32 %v1839, %v1857
    %v1862 = vadd.f32 %v1840, %v1858
    %v1863 = vmul.f32 %v1704, %v356
    %v1864 = vmul.f32 %v1706, %v356
    %v1865 = vmul.f32 %v1704, %v359
    %v1866 = vmul.f32 %v1705, %v359
    %v1867 = vmul.f32 %v1706, %v359
    %v1868 = vmul.f32 %v1707, %v359
    %1873 = vrot.lane.b32.xlu0 %v1865, 127
    %v1874 = vpop.permute.xlu0 %1873
    %1875 = vrot.lane.b32.xlu0 %v1866, 127
    %v1876 = vpop.permute.xlu0 %1875
    %1877 = vrot.lane.b32.xlu0 %v1867, 127
    %v1878 = vpop.permute.xlu0 %1877
    %1879 = vrot.lane.b32.xlu0 %v1868, 127
    %v1880 = vpop.permute.xlu0 %1879
    %v1881 = vsel %vm229, %v1874, %v1876
    %v1882 = vsel %vm229, %v1878, %v1880
    %v1885 = vadd.f32 %v1863, %v1881
    %v1886 = vadd.f32 %v1864, %v1882
    %v1887 = vmul.f32 %v1704, %v382
    %v1888 = vmul.f32 %v1705, %v382
    %v1889 = vmul.f32 %v1706, %v382
    %v1890 = vmul.f32 %v1707, %v382
    %1895 = vrot.lane.b32.xlu0 %v1887, 126
    %v1896 = vpop.permute.xlu0 %1895
    %1897 = vrot.lane.b32.xlu0 %v1888, 126
    %v1898 = vpop.permute.xlu0 %1897
    %1899 = vrot.lane.b32.xlu0 %v1889, 126
    %v1900 = vpop.permute.xlu0 %1899
    %1901 = vrot.lane.b32.xlu0 %v1890, 126
    %v1902 = vpop.permute.xlu0 %1901
    %v1903 = vsel %vm253, %v1896, %v1898
    %v1904 = vsel %vm253, %v1900, %v1902
    %v1907 = vadd.f32 %v1885, %v1903
    %v1908 = vadd.f32 %v1886, %v1904
    %v1909 = vmul.f32 %v1704, %v405
    %v1910 = vmul.f32 %v1705, %v405
    %v1911 = vmul.f32 %v1706, %v405
    %v1912 = vmul.f32 %v1707, %v405
    %1917 = vrot.lane.b32.xlu0 %v1909, 125
    %v1918 = vpop.permute.xlu0 %1917
    %1919 = vrot.lane.b32.xlu0 %v1910, 125
    %v1920 = vpop.permute.xlu0 %1919
    %1921 = vrot.lane.b32.xlu0 %v1911, 125
    %v1922 = vpop.permute.xlu0 %1921
    %1923 = vrot.lane.b32.xlu0 %v1912, 125
    %v1924 = vpop.permute.xlu0 %1923
    %v1925 = vsel %vm277, %v1918, %v1920
    %v1926 = vsel %vm277, %v1922, %v1924
    %v1929 = vadd.f32 %v1907, %v1925
    %v1930 = vadd.f32 %v1908, %v1926
    %v1931 = vmul.f32 %v1704, %v428
    %v1932 = vmul.f32 %v1705, %v428
    %v1933 = vmul.f32 %v1706, %v428
    %v1934 = vmul.f32 %v1707, %v428
    %1939 = vrot.lane.b32.xlu0 %v1931, 124
    %v1940 = vpop.permute.xlu0 %1939
    %1941 = vrot.lane.b32.xlu0 %v1932, 124
    %v1942 = vpop.permute.xlu0 %1941
    %1943 = vrot.lane.b32.xlu0 %v1933, 124
    %v1944 = vpop.permute.xlu0 %1943
    %1945 = vrot.lane.b32.xlu0 %v1934, 124
    %v1946 = vpop.permute.xlu0 %1945
    %v1947 = vsel %vm301, %v1940, %v1942
    %v1948 = vsel %vm301, %v1944, %v1946
    %v1951 = vadd.f32 %v1929, %v1947
    %v1952 = vadd.f32 %v1930, %v1948
    %v1953 = vmul.f32 %v1704, %v451
    %v1954 = vmul.f32 %v1705, %v451
    %v1955 = vmul.f32 %v1706, %v451
    %v1956 = vmul.f32 %v1707, %v451
    %1961 = vrot.lane.b32.xlu0 %v1953, 123
    %v1962 = vpop.permute.xlu0 %1961
    %1963 = vrot.lane.b32.xlu0 %v1954, 123
    %v1964 = vpop.permute.xlu0 %1963
    %1965 = vrot.lane.b32.xlu0 %v1955, 123
    %v1966 = vpop.permute.xlu0 %1965
    %1967 = vrot.lane.b32.xlu0 %v1956, 123
    %v1968 = vpop.permute.xlu0 %1967
    %v1969 = vsel %vm325, %v1962, %v1964
    %v1970 = vsel %vm325, %v1966, %v1968
    %v1973 = vadd.f32 %v1951, %v1969
    %v1974 = vadd.f32 %v1952, %v1970
    %v1975 = vmul.f32 %v1704, %v474
    %v1976 = vmul.f32 %v1705, %v474
    %v1977 = vmul.f32 %v1706, %v474
    %v1978 = vmul.f32 %v1707, %v474
    %1983 = vrot.lane.b32.xlu0 %v1975, 122
    %v1984 = vpop.permute.xlu0 %1983
    %1985 = vrot.lane.b32.xlu0 %v1976, 122
    %v1986 = vpop.permute.xlu0 %1985
    %1987 = vrot.lane.b32.xlu0 %v1977, 122
    %v1988 = vpop.permute.xlu0 %1987
    %1989 = vrot.lane.b32.xlu0 %v1978, 122
    %v1990 = vpop.permute.xlu0 %1989
    %v1991 = vsel %vm349, %v1984, %v1986
    %v1992 = vsel %vm349, %v1988, %v1990
    %v1995 = vadd.f32 %v1973, %v1991
    %v1996 = vadd.f32 %v1974, %v1992
    %v1997 = vmul.f32 %v1711, %v497
    %v1998 = vmul.f32 %v1713, %v497
    %v1999 = vmul.f32 %v1711, %v500
    %v2000 = vmul.f32 %v1712, %v500
    %v2001 = vmul.f32 %v1713, %v500
    %v2002 = vmul.f32 %v1714, %v500
    %2007 = vrot.lane.b32.xlu0 %v1999, 127
    %v2008 = vpop.permute.xlu0 %2007
    %2009 = vrot.lane.b32.xlu0 %v2000, 127
    %v2010 = vpop.permute.xlu0 %2009
    %2011 = vrot.lane.b32.xlu0 %v2001, 127
    %v2012 = vpop.permute.xlu0 %2011
    %2013 = vrot.lane.b32.xlu0 %v2002, 127
    %v2014 = vpop.permute.xlu0 %2013
    %v2015 = vsel %vm229, %v2008, %v2010
    %v2016 = vsel %vm229, %v2012, %v2014
    %v2019 = vadd.f32 %v1997, %v2015
    %v2020 = vadd.f32 %v1998, %v2016
    %v2021 = vmul.f32 %v1711, %v523
    %v2022 = vmul.f32 %v1712, %v523
    %v2023 = vmul.f32 %v1713, %v523
    %v2024 = vmul.f32 %v1714, %v523
    %2029 = vrot.lane.b32.xlu0 %v2021, 126
    %v2030 = vpop.permute.xlu0 %2029
    %2031 = vrot.lane.b32.xlu0 %v2022, 126
    %v2032 = vpop.permute.xlu0 %2031
    %2033 = vrot.lane.b32.xlu0 %v2023, 126
    %v2034 = vpop.permute.xlu0 %2033
    %2035 = vrot.lane.b32.xlu0 %v2024, 126
    %v2036 = vpop.permute.xlu0 %2035
    %v2037 = vsel %vm253, %v2030, %v2032
    %v2038 = vsel %vm253, %v2034, %v2036
    %v2041 = vadd.f32 %v2019, %v2037
    %v2042 = vadd.f32 %v2020, %v2038
    %v2043 = vmul.f32 %v1711, %v546
    %v2044 = vmul.f32 %v1712, %v546
    %v2045 = vmul.f32 %v1713, %v546
    %v2046 = vmul.f32 %v1714, %v546
    %2051 = vrot.lane.b32.xlu0 %v2043, 125
    %v2052 = vpop.permute.xlu0 %2051
    %2053 = vrot.lane.b32.xlu0 %v2044, 125
    %v2054 = vpop.permute.xlu0 %2053
    %2055 = vrot.lane.b32.xlu0 %v2045, 125
    %v2056 = vpop.permute.xlu0 %2055
    %2057 = vrot.lane.b32.xlu0 %v2046, 125
    %v2058 = vpop.permute.xlu0 %2057
    %v2059 = vsel %vm277, %v2052, %v2054
    %v2060 = vsel %vm277, %v2056, %v2058
    %v2063 = vadd.f32 %v2041, %v2059
    %v2064 = vadd.f32 %v2042, %v2060
    %v2065 = vmul.f32 %v1711, %v569
    %v2066 = vmul.f32 %v1712, %v569
    %v2067 = vmul.f32 %v1713, %v569
    %v2068 = vmul.f32 %v1714, %v569
    %2073 = vrot.lane.b32.xlu0 %v2065, 124
    %v2074 = vpop.permute.xlu0 %2073
    %2075 = vrot.lane.b32.xlu0 %v2066, 124
    %v2076 = vpop.permute.xlu0 %2075
    %2077 = vrot.lane.b32.xlu0 %v2067, 124
    %v2078 = vpop.permute.xlu0 %2077
    %2079 = vrot.lane.b32.xlu0 %v2068, 124
    %v2080 = vpop.permute.xlu0 %2079
    %v2081 = vsel %vm301, %v2074, %v2076
    %v2082 = vsel %vm301, %v2078, %v2080
    %v2085 = vadd.f32 %v2063, %v2081
    %v2086 = vadd.f32 %v2064, %v2082
    %v2087 = vmul.f32 %v1711, %v592
    %v2088 = vmul.f32 %v1712, %v592
    %v2089 = vmul.f32 %v1713, %v592
    %v2090 = vmul.f32 %v1714, %v592
    %2095 = vrot.lane.b32.xlu0 %v2087, 123
    %v2096 = vpop.permute.xlu0 %2095
    %2097 = vrot.lane.b32.xlu0 %v2088, 123
    %v2098 = vpop.permute.xlu0 %2097
    %2099 = vrot.lane.b32.xlu0 %v2089, 123
    %v2100 = vpop.permute.xlu0 %2099
    %2101 = vrot.lane.b32.xlu0 %v2090, 123
    %v2102 = vpop.permute.xlu0 %2101
    %v2103 = vsel %vm325, %v2096, %v2098
    %v2104 = vsel %vm325, %v2100, %v2102
    %v2107 = vadd.f32 %v2085, %v2103
    %v2108 = vadd.f32 %v2086, %v2104
    %v2109 = vmul.f32 %v1711, %v615
    %v2110 = vmul.f32 %v1712, %v615
    %v2111 = vmul.f32 %v1713, %v615
    %v2112 = vmul.f32 %v1714, %v615
    %2117 = vrot.lane.b32.xlu0 %v2109, 122
    %v2118 = vpop.permute.xlu0 %2117
    %2119 = vrot.lane.b32.xlu0 %v2110, 122
    %v2120 = vpop.permute.xlu0 %2119
    %2121 = vrot.lane.b32.xlu0 %v2111, 122
    %v2122 = vpop.permute.xlu0 %2121
    %2123 = vrot.lane.b32.xlu0 %v2112, 122
    %v2124 = vpop.permute.xlu0 %2123
    %v2125 = vsel %vm349, %v2118, %v2120
    %v2126 = vsel %vm349, %v2122, %v2124
    %v2129 = vadd.f32 %v2107, %v2125
    %v2130 = vadd.f32 %v2108, %v2126
    %v2131 = vmul.f32 %v1711, %v638
    %v2132 = vmul.f32 %v1713, %v638
    %v2133 = vmul.f32 %v1711, %v641
    %v2134 = vmul.f32 %v1712, %v641
    %v2135 = vmul.f32 %v1713, %v641
    %v2136 = vmul.f32 %v1714, %v641
    %2141 = vrot.lane.b32.xlu0 %v2133, 127
    %v2142 = vpop.permute.xlu0 %2141
    %2143 = vrot.lane.b32.xlu0 %v2134, 127
    %v2144 = vpop.permute.xlu0 %2143
    %2145 = vrot.lane.b32.xlu0 %v2135, 127
    %v2146 = vpop.permute.xlu0 %2145
    %2147 = vrot.lane.b32.xlu0 %v2136, 127
    %v2148 = vpop.permute.xlu0 %2147
    %v2149 = vsel %vm229, %v2142, %v2144
    %v2150 = vsel %vm229, %v2146, %v2148
    %v2153 = vadd.f32 %v2131, %v2149
    %v2154 = vadd.f32 %v2132, %v2150
    %v2155 = vmul.f32 %v1711, %v664
    %v2156 = vmul.f32 %v1712, %v664
    %v2157 = vmul.f32 %v1713, %v664
    %v2158 = vmul.f32 %v1714, %v664
    %2163 = vrot.lane.b32.xlu0 %v2155, 126
    %v2164 = vpop.permute.xlu0 %2163
    %2165 = vrot.lane.b32.xlu0 %v2156, 126
    %v2166 = vpop.permute.xlu0 %2165
    %2167 = vrot.lane.b32.xlu0 %v2157, 126
    %v2168 = vpop.permute.xlu0 %2167
    %2169 = vrot.lane.b32.xlu0 %v2158, 126
    %v2170 = vpop.permute.xlu0 %2169
    %v2171 = vsel %vm253, %v2164, %v2166
    %v2172 = vsel %vm253, %v2168, %v2170
    %v2175 = vadd.f32 %v2153, %v2171
    %v2176 = vadd.f32 %v2154, %v2172
    %v2177 = vmul.f32 %v1711, %v687
    %v2178 = vmul.f32 %v1712, %v687
    %v2179 = vmul.f32 %v1713, %v687
    %v2180 = vmul.f32 %v1714, %v687
    %2185 = vrot.lane.b32.xlu0 %v2177, 125
    %v2186 = vpop.permute.xlu0 %2185
    %2187 = vrot.lane.b32.xlu0 %v2178, 125
    %v2188 = vpop.permute.xlu0 %2187
    %2189 = vrot.lane.b32.xlu0 %v2179, 125
    %v2190 = vpop.permute.xlu0 %2189
    %2191 = vrot.lane.b32.xlu0 %v2180, 125
    %v2192 = vpop.permute.xlu0 %2191
    %v2193 = vsel %vm277, %v2186, %v2188
    %v2194 = vsel %vm277, %v2190, %v2192
    %v2197 = vadd.f32 %v2175, %v2193
    %v2198 = vadd.f32 %v2176, %v2194
    %v2199 = vmul.f32 %v1711, %v710
    %v2200 = vmul.f32 %v1712, %v710
    %v2201 = vmul.f32 %v1713, %v710
    %v2202 = vmul.f32 %v1714, %v710
    %2207 = vrot.lane.b32.xlu0 %v2199, 124
    %v2208 = vpop.permute.xlu0 %2207
    %2209 = vrot.lane.b32.xlu0 %v2200, 124
    %v2210 = vpop.permute.xlu0 %2209
    %2211 = vrot.lane.b32.xlu0 %v2201, 124
    %v2212 = vpop.permute.xlu0 %2211
    %2213 = vrot.lane.b32.xlu0 %v2202, 124
    %v2214 = vpop.permute.xlu0 %2213
    %v2215 = vsel %vm301, %v2208, %v2210
    %v2216 = vsel %vm301, %v2212, %v2214
    %v2219 = vadd.f32 %v2197, %v2215
    %v2220 = vadd.f32 %v2198, %v2216
    %v2221 = vmul.f32 %v1711, %v733
    %v2222 = vmul.f32 %v1712, %v733
    %v2223 = vmul.f32 %v1713, %v733
    %v2224 = vmul.f32 %v1714, %v733
    %2229 = vrot.lane.b32.xlu0 %v2221, 123
    %v2230 = vpop.permute.xlu0 %2229
    %2231 = vrot.lane.b32.xlu0 %v2222, 123
    %v2232 = vpop.permute.xlu0 %2231
    %2233 = vrot.lane.b32.xlu0 %v2223, 123
    %v2234 = vpop.permute.xlu0 %2233
    %2235 = vrot.lane.b32.xlu0 %v2224, 123
    %v2236 = vpop.permute.xlu0 %2235
    %v2237 = vsel %vm325, %v2230, %v2232
    %v2238 = vsel %vm325, %v2234, %v2236
    %v2241 = vadd.f32 %v2219, %v2237
    %v2242 = vadd.f32 %v2220, %v2238
    %v2243 = vmul.f32 %v1711, %v756
    %v2244 = vmul.f32 %v1712, %v756
    %v2245 = vmul.f32 %v1713, %v756
    %v2246 = vmul.f32 %v1714, %v756
    %2251 = vrot.lane.b32.xlu0 %v2243, 122
    %v2252 = vpop.permute.xlu0 %2251
    %2253 = vrot.lane.b32.xlu0 %v2244, 122
    %v2254 = vpop.permute.xlu0 %2253
    %2255 = vrot.lane.b32.xlu0 %v2245, 122
    %v2256 = vpop.permute.xlu0 %2255
    %2257 = vrot.lane.b32.xlu0 %v2246, 122
    %v2258 = vpop.permute.xlu0 %2257
    %v2259 = vsel %vm349, %v2252, %v2254
    %v2260 = vsel %vm349, %v2256, %v2258
    %v2263 = vadd.f32 %v2241, %v2259
    %v2264 = vadd.f32 %v2242, %v2260
    %v2265 = vmul.f32 %v1718, %v779
    %v2266 = vmul.f32 %v1720, %v779
    %v2267 = vmul.f32 %v1718, %v782
    %v2268 = vmul.f32 %v1719, %v782
    %v2269 = vmul.f32 %v1720, %v782
    %v2270 = vmul.f32 %v1721, %v782
    %2275 = vrot.lane.b32.xlu0 %v2267, 127
    %v2276 = vpop.permute.xlu0 %2275
    %2277 = vrot.lane.b32.xlu0 %v2268, 127
    %v2278 = vpop.permute.xlu0 %2277
    %2279 = vrot.lane.b32.xlu0 %v2269, 127
    %v2280 = vpop.permute.xlu0 %2279
    %2281 = vrot.lane.b32.xlu0 %v2270, 127
    %v2282 = vpop.permute.xlu0 %2281
    %v2283 = vsel %vm229, %v2276, %v2278
    %v2284 = vsel %vm229, %v2280, %v2282
    %v2287 = vadd.f32 %v2265, %v2283
    %v2288 = vadd.f32 %v2266, %v2284
    %v2289 = vmul.f32 %v1718, %v805
    %v2290 = vmul.f32 %v1719, %v805
    %v2291 = vmul.f32 %v1720, %v805
    %v2292 = vmul.f32 %v1721, %v805
    %2297 = vrot.lane.b32.xlu0 %v2289, 126
    %v2298 = vpop.permute.xlu0 %2297
    %2299 = vrot.lane.b32.xlu0 %v2290, 126
    %v2300 = vpop.permute.xlu0 %2299
    %2301 = vrot.lane.b32.xlu0 %v2291, 126
    %v2302 = vpop.permute.xlu0 %2301
    %2303 = vrot.lane.b32.xlu0 %v2292, 126
    %v2304 = vpop.permute.xlu0 %2303
    %v2305 = vsel %vm253, %v2298, %v2300
    %v2306 = vsel %vm253, %v2302, %v2304
    %v2309 = vadd.f32 %v2287, %v2305
    %v2310 = vadd.f32 %v2288, %v2306
    %v2311 = vmul.f32 %v1718, %v828
    %v2312 = vmul.f32 %v1719, %v828
    %v2313 = vmul.f32 %v1720, %v828
    %v2314 = vmul.f32 %v1721, %v828
    %2319 = vrot.lane.b32.xlu0 %v2311, 125
    %v2320 = vpop.permute.xlu0 %2319
    %2321 = vrot.lane.b32.xlu0 %v2312, 125
    %v2322 = vpop.permute.xlu0 %2321
    %2323 = vrot.lane.b32.xlu0 %v2313, 125
    %v2324 = vpop.permute.xlu0 %2323
    %2325 = vrot.lane.b32.xlu0 %v2314, 125
    %v2326 = vpop.permute.xlu0 %2325
    %v2327 = vsel %vm277, %v2320, %v2322
    %v2328 = vsel %vm277, %v2324, %v2326
    %v2331 = vadd.f32 %v2309, %v2327
    %v2332 = vadd.f32 %v2310, %v2328
    %v2333 = vmul.f32 %v1718, %v851
    %v2334 = vmul.f32 %v1719, %v851
    %v2335 = vmul.f32 %v1720, %v851
    %v2336 = vmul.f32 %v1721, %v851
    %2341 = vrot.lane.b32.xlu0 %v2333, 124
    %v2342 = vpop.permute.xlu0 %2341
    %2343 = vrot.lane.b32.xlu0 %v2334, 124
    %v2344 = vpop.permute.xlu0 %2343
    %2345 = vrot.lane.b32.xlu0 %v2335, 124
    %v2346 = vpop.permute.xlu0 %2345
    %2347 = vrot.lane.b32.xlu0 %v2336, 124
    %v2348 = vpop.permute.xlu0 %2347
    %v2349 = vsel %vm301, %v2342, %v2344
    %v2350 = vsel %vm301, %v2346, %v2348
    %v2353 = vadd.f32 %v2331, %v2349
    %v2354 = vadd.f32 %v2332, %v2350
    %v2355 = vmul.f32 %v1718, %v874
    %v2356 = vmul.f32 %v1719, %v874
    %v2357 = vmul.f32 %v1720, %v874
    %v2358 = vmul.f32 %v1721, %v874
    %2363 = vrot.lane.b32.xlu0 %v2355, 123
    %v2364 = vpop.permute.xlu0 %2363
    %2365 = vrot.lane.b32.xlu0 %v2356, 123
    %v2366 = vpop.permute.xlu0 %2365
    %2367 = vrot.lane.b32.xlu0 %v2357, 123
    %v2368 = vpop.permute.xlu0 %2367
    %2369 = vrot.lane.b32.xlu0 %v2358, 123
    %v2370 = vpop.permute.xlu0 %2369
    %v2371 = vsel %vm325, %v2364, %v2366
    %v2372 = vsel %vm325, %v2368, %v2370
    %v2375 = vadd.f32 %v2353, %v2371
    %v2376 = vadd.f32 %v2354, %v2372
    %v2377 = vmul.f32 %v1718, %v897
    %v2378 = vmul.f32 %v1719, %v897
    %v2379 = vmul.f32 %v1720, %v897
    %v2380 = vmul.f32 %v1721, %v897
    %2385 = vrot.lane.b32.xlu0 %v2377, 122
    %v2386 = vpop.permute.xlu0 %2385
    %2387 = vrot.lane.b32.xlu0 %v2378, 122
    %v2388 = vpop.permute.xlu0 %2387
    %2389 = vrot.lane.b32.xlu0 %v2379, 122
    %v2390 = vpop.permute.xlu0 %2389
    %2391 = vrot.lane.b32.xlu0 %v2380, 122
    %v2392 = vpop.permute.xlu0 %2391
    %v2393 = vsel %vm349, %v2386, %v2388
    %v2394 = vsel %vm349, %v2390, %v2392
    %v2397 = vadd.f32 %v2375, %v2393
    %v2398 = vadd.f32 %v2376, %v2394
    %v2399 = vmul.f32 %v1718, %v920
    %v2400 = vmul.f32 %v1720, %v920
    %v2401 = vmul.f32 %v1718, %v923
    %v2402 = vmul.f32 %v1719, %v923
    %v2403 = vmul.f32 %v1720, %v923
    %v2404 = vmul.f32 %v1721, %v923
    %2409 = vrot.lane.b32.xlu0 %v2401, 127
    %v2410 = vpop.permute.xlu0 %2409
    %2411 = vrot.lane.b32.xlu0 %v2402, 127
    %v2412 = vpop.permute.xlu0 %2411
    %2413 = vrot.lane.b32.xlu0 %v2403, 127
    %v2414 = vpop.permute.xlu0 %2413
    %2415 = vrot.lane.b32.xlu0 %v2404, 127
    %v2416 = vpop.permute.xlu0 %2415
    %v2417 = vsel %vm229, %v2410, %v2412
    %v2418 = vsel %vm229, %v2414, %v2416
    %v2421 = vadd.f32 %v2399, %v2417
    %v2422 = vadd.f32 %v2400, %v2418
    %v2423 = vmul.f32 %v1718, %v946
    %v2424 = vmul.f32 %v1719, %v946
    %v2425 = vmul.f32 %v1720, %v946
    %v2426 = vmul.f32 %v1721, %v946
    %2431 = vrot.lane.b32.xlu0 %v2423, 126
    %v2432 = vpop.permute.xlu0 %2431
    %2433 = vrot.lane.b32.xlu0 %v2424, 126
    %v2434 = vpop.permute.xlu0 %2433
    %2435 = vrot.lane.b32.xlu0 %v2425, 126
    %v2436 = vpop.permute.xlu0 %2435
    %2437 = vrot.lane.b32.xlu0 %v2426, 126
    %v2438 = vpop.permute.xlu0 %2437
    %v2439 = vsel %vm253, %v2432, %v2434
    %v2440 = vsel %vm253, %v2436, %v2438
    %v2443 = vadd.f32 %v2421, %v2439
    %v2444 = vadd.f32 %v2422, %v2440
    %v2445 = vmul.f32 %v1718, %v969
    %v2446 = vmul.f32 %v1719, %v969
    %v2447 = vmul.f32 %v1720, %v969
    %v2448 = vmul.f32 %v1721, %v969
    %2453 = vrot.lane.b32.xlu0 %v2445, 125
    %v2454 = vpop.permute.xlu0 %2453
    %2455 = vrot.lane.b32.xlu0 %v2446, 125
    %v2456 = vpop.permute.xlu0 %2455
    %2457 = vrot.lane.b32.xlu0 %v2447, 125
    %v2458 = vpop.permute.xlu0 %2457
    %2459 = vrot.lane.b32.xlu0 %v2448, 125
    %v2460 = vpop.permute.xlu0 %2459
    %v2461 = vsel %vm277, %v2454, %v2456
    %v2462 = vsel %vm277, %v2458, %v2460
    %v2465 = vadd.f32 %v2443, %v2461
    %v2466 = vadd.f32 %v2444, %v2462
    %v2467 = vmul.f32 %v1718, %v992
    %v2468 = vmul.f32 %v1719, %v992
    %v2469 = vmul.f32 %v1720, %v992
    %v2470 = vmul.f32 %v1721, %v992
    %2475 = vrot.lane.b32.xlu0 %v2467, 124
    %v2476 = vpop.permute.xlu0 %2475
    %2477 = vrot.lane.b32.xlu0 %v2468, 124
    %v2478 = vpop.permute.xlu0 %2477
    %2479 = vrot.lane.b32.xlu0 %v2469, 124
    %v2480 = vpop.permute.xlu0 %2479
    %2481 = vrot.lane.b32.xlu0 %v2470, 124
    %v2482 = vpop.permute.xlu0 %2481
    %v2483 = vsel %vm301, %v2476, %v2478
    %v2484 = vsel %vm301, %v2480, %v2482
    %v2487 = vadd.f32 %v2465, %v2483
    %v2488 = vadd.f32 %v2466, %v2484
    %v2489 = vmul.f32 %v1718, %v1015
    %v2490 = vmul.f32 %v1719, %v1015
    %v2491 = vmul.f32 %v1720, %v1015
    %v2492 = vmul.f32 %v1721, %v1015
    %2497 = vrot.lane.b32.xlu0 %v2489, 123
    %v2498 = vpop.permute.xlu0 %2497
    %2499 = vrot.lane.b32.xlu0 %v2490, 123
    %v2500 = vpop.permute.xlu0 %2499
    %2501 = vrot.lane.b32.xlu0 %v2491, 123
    %v2502 = vpop.permute.xlu0 %2501
    %2503 = vrot.lane.b32.xlu0 %v2492, 123
    %v2504 = vpop.permute.xlu0 %2503
    %v2505 = vsel %vm325, %v2498, %v2500
    %v2506 = vsel %vm325, %v2502, %v2504
    %v2509 = vadd.f32 %v2487, %v2505
    %v2510 = vadd.f32 %v2488, %v2506
    %v2511 = vmul.f32 %v1718, %v1038
    %v2512 = vmul.f32 %v1719, %v1038
    %v2513 = vmul.f32 %v1720, %v1038
    %v2514 = vmul.f32 %v1721, %v1038
    %2519 = vrot.lane.b32.xlu0 %v2511, 122
    %v2520 = vpop.permute.xlu0 %2519
    %2521 = vrot.lane.b32.xlu0 %v2512, 122
    %v2522 = vpop.permute.xlu0 %2521
    %2523 = vrot.lane.b32.xlu0 %v2513, 122
    %v2524 = vpop.permute.xlu0 %2523
    %2525 = vrot.lane.b32.xlu0 %v2514, 122
    %v2526 = vpop.permute.xlu0 %2525
    %v2527 = vsel %vm349, %v2520, %v2522
    %v2528 = vsel %vm349, %v2524, %v2526
    %v2531 = vadd.f32 %v2509, %v2527
    %v2532 = vadd.f32 %v2510, %v2528
    %v2533 = vmul.f32 %v1725, %v1061
    %v2534 = vmul.f32 %v1727, %v1061
    %v2535 = vmul.f32 %v1725, %v1064
    %v2536 = vmul.f32 %v1726, %v1064
    %v2537 = vmul.f32 %v1727, %v1064
    %v2538 = vmul.f32 %v1728, %v1064
    %2543 = vrot.lane.b32.xlu0 %v2535, 127
    %v2544 = vpop.permute.xlu0 %2543
    %2545 = vrot.lane.b32.xlu0 %v2536, 127
    %v2546 = vpop.permute.xlu0 %2545
    %2547 = vrot.lane.b32.xlu0 %v2537, 127
    %v2548 = vpop.permute.xlu0 %2547
    %2549 = vrot.lane.b32.xlu0 %v2538, 127
    %v2550 = vpop.permute.xlu0 %2549
    %v2551 = vsel %vm229, %v2544, %v2546
    %v2552 = vsel %vm229, %v2548, %v2550
    %v2555 = vadd.f32 %v2533, %v2551
    %v2556 = vadd.f32 %v2534, %v2552
    %v2557 = vmul.f32 %v1725, %v1087
    %v2558 = vmul.f32 %v1726, %v1087
    %v2559 = vmul.f32 %v1727, %v1087
    %v2560 = vmul.f32 %v1728, %v1087
    %2565 = vrot.lane.b32.xlu0 %v2557, 126
    %v2566 = vpop.permute.xlu0 %2565
    %2567 = vrot.lane.b32.xlu0 %v2558, 126
    %v2568 = vpop.permute.xlu0 %2567
    %2569 = vrot.lane.b32.xlu0 %v2559, 126
    %v2570 = vpop.permute.xlu0 %2569
    %2571 = vrot.lane.b32.xlu0 %v2560, 126
    %v2572 = vpop.permute.xlu0 %2571
    %v2573 = vsel %vm253, %v2566, %v2568
    %v2574 = vsel %vm253, %v2570, %v2572
    %v2577 = vadd.f32 %v2555, %v2573
    %v2578 = vadd.f32 %v2556, %v2574
    %v2579 = vmul.f32 %v1725, %v1110
    %v2580 = vmul.f32 %v1726, %v1110
    %v2581 = vmul.f32 %v1727, %v1110
    %v2582 = vmul.f32 %v1728, %v1110
    %2587 = vrot.lane.b32.xlu0 %v2579, 125
    %v2588 = vpop.permute.xlu0 %2587
    %2589 = vrot.lane.b32.xlu0 %v2580, 125
    %v2590 = vpop.permute.xlu0 %2589
    %2591 = vrot.lane.b32.xlu0 %v2581, 125
    %v2592 = vpop.permute.xlu0 %2591
    %2593 = vrot.lane.b32.xlu0 %v2582, 125
    %v2594 = vpop.permute.xlu0 %2593
    %v2595 = vsel %vm277, %v2588, %v2590
    %v2596 = vsel %vm277, %v2592, %v2594
    %v2599 = vadd.f32 %v2577, %v2595
    %v2600 = vadd.f32 %v2578, %v2596
    %v2601 = vmul.f32 %v1725, %v1133
    %v2602 = vmul.f32 %v1726, %v1133
    %v2603 = vmul.f32 %v1727, %v1133
    %v2604 = vmul.f32 %v1728, %v1133
    %2609 = vrot.lane.b32.xlu0 %v2601, 124
    %v2610 = vpop.permute.xlu0 %2609
    %2611 = vrot.lane.b32.xlu0 %v2602, 124
    %v2612 = vpop.permute.xlu0 %2611
    %2613 = vrot.lane.b32.xlu0 %v2603, 124
    %v2614 = vpop.permute.xlu0 %2613
    %2615 = vrot.lane.b32.xlu0 %v2604, 124
    %v2616 = vpop.permute.xlu0 %2615
    %v2617 = vsel %vm301, %v2610, %v2612
    %v2618 = vsel %vm301, %v2614, %v2616
    %v2621 = vadd.f32 %v2599, %v2617
    %v2622 = vadd.f32 %v2600, %v2618
    %v2623 = vmul.f32 %v1725, %v1156
    %v2624 = vmul.f32 %v1726, %v1156
    %v2625 = vmul.f32 %v1727, %v1156
    %v2626 = vmul.f32 %v1728, %v1156
    %2631 = vrot.lane.b32.xlu0 %v2623, 123
    %v2632 = vpop.permute.xlu0 %2631
    %2633 = vrot.lane.b32.xlu0 %v2624, 123
    %v2634 = vpop.permute.xlu0 %2633
    %2635 = vrot.lane.b32.xlu0 %v2625, 123
    %v2636 = vpop.permute.xlu0 %2635
    %2637 = vrot.lane.b32.xlu0 %v2626, 123
    %v2638 = vpop.permute.xlu0 %2637
    %v2639 = vsel %vm325, %v2632, %v2634
    %v2640 = vsel %vm325, %v2636, %v2638
    %v2643 = vadd.f32 %v2621, %v2639
    %v2644 = vadd.f32 %v2622, %v2640
    %v2645 = vmul.f32 %v1725, %v1179
    %v2646 = vmul.f32 %v1726, %v1179
    %v2647 = vmul.f32 %v1727, %v1179
    %v2648 = vmul.f32 %v1728, %v1179
    %2653 = vrot.lane.b32.xlu0 %v2645, 122
    %v2654 = vpop.permute.xlu0 %2653
    %2655 = vrot.lane.b32.xlu0 %v2646, 122
    %v2656 = vpop.permute.xlu0 %2655
    %2657 = vrot.lane.b32.xlu0 %v2647, 122
    %v2658 = vpop.permute.xlu0 %2657
    %2659 = vrot.lane.b32.xlu0 %v2648, 122
    %v2660 = vpop.permute.xlu0 %2659
    %v2661 = vsel %vm349, %v2654, %v2656
    %v2662 = vsel %vm349, %v2658, %v2660
    %v2665 = vadd.f32 %v2643, %v2661
    %v2666 = vadd.f32 %v2644, %v2662
    %v2667 = vmul.f32 %v1725, %v1202
    %v2668 = vmul.f32 %v1727, %v1202
    %v2669 = vmul.f32 %v1725, %v1205
    %v2670 = vmul.f32 %v1726, %v1205
    %v2671 = vmul.f32 %v1727, %v1205
    %v2672 = vmul.f32 %v1728, %v1205
    %2677 = vrot.lane.b32.xlu0 %v2669, 127
    %v2678 = vpop.permute.xlu0 %2677
    %2679 = vrot.lane.b32.xlu0 %v2670, 127
    %v2680 = vpop.permute.xlu0 %2679
    %2681 = vrot.lane.b32.xlu0 %v2671, 127
    %v2682 = vpop.permute.xlu0 %2681
    %2683 = vrot.lane.b32.xlu0 %v2672, 127
    %v2684 = vpop.permute.xlu0 %2683
    %v2685 = vsel %vm229, %v2678, %v2680
    %v2686 = vsel %vm229, %v2682, %v2684
    %v2689 = vadd.f32 %v2667, %v2685
    %v2690 = vadd.f32 %v2668, %v2686
    %v2691 = vmul.f32 %v1725, %v1228
    %v2692 = vmul.f32 %v1726, %v1228
    %v2693 = vmul.f32 %v1727, %v1228
    %v2694 = vmul.f32 %v1728, %v1228
    %2699 = vrot.lane.b32.xlu0 %v2691, 126
    %v2700 = vpop.permute.xlu0 %2699
    %2701 = vrot.lane.b32.xlu0 %v2692, 126
    %v2702 = vpop.permute.xlu0 %2701
    %2703 = vrot.lane.b32.xlu0 %v2693, 126
    %v2704 = vpop.permute.xlu0 %2703
    %2705 = vrot.lane.b32.xlu0 %v2694, 126
    %v2706 = vpop.permute.xlu0 %2705
    %v2707 = vsel %vm253, %v2700, %v2702
    %v2708 = vsel %vm253, %v2704, %v2706
    %v2711 = vadd.f32 %v2689, %v2707
    %v2712 = vadd.f32 %v2690, %v2708
    %v2713 = vmul.f32 %v1725, %v1251
    %v2714 = vmul.f32 %v1726, %v1251
    %v2715 = vmul.f32 %v1727, %v1251
    %v2716 = vmul.f32 %v1728, %v1251
    %2721 = vrot.lane.b32.xlu0 %v2713, 125
    %v2722 = vpop.permute.xlu0 %2721
    %2723 = vrot.lane.b32.xlu0 %v2714, 125
    %v2724 = vpop.permute.xlu0 %2723
    %2725 = vrot.lane.b32.xlu0 %v2715, 125
    %v2726 = vpop.permute.xlu0 %2725
    %2727 = vrot.lane.b32.xlu0 %v2716, 125
    %v2728 = vpop.permute.xlu0 %2727
    %v2729 = vsel %vm277, %v2722, %v2724
    %v2730 = vsel %vm277, %v2726, %v2728
    %v2733 = vadd.f32 %v2711, %v2729
    %v2734 = vadd.f32 %v2712, %v2730
    %v2735 = vmul.f32 %v1725, %v1274
    %v2736 = vmul.f32 %v1726, %v1274
    %v2737 = vmul.f32 %v1727, %v1274
    %v2738 = vmul.f32 %v1728, %v1274
    %2743 = vrot.lane.b32.xlu0 %v2735, 124
    %v2744 = vpop.permute.xlu0 %2743
    %2745 = vrot.lane.b32.xlu0 %v2736, 124
    %v2746 = vpop.permute.xlu0 %2745
    %2747 = vrot.lane.b32.xlu0 %v2737, 124
    %v2748 = vpop.permute.xlu0 %2747
    %2749 = vrot.lane.b32.xlu0 %v2738, 124
    %v2750 = vpop.permute.xlu0 %2749
    %v2751 = vsel %vm301, %v2744, %v2746
    %v2752 = vsel %vm301, %v2748, %v2750
    %v2755 = vadd.f32 %v2733, %v2751
    %v2756 = vadd.f32 %v2734, %v2752
    %v2757 = vmul.f32 %v1725, %v1297
    %v2758 = vmul.f32 %v1726, %v1297
    %v2759 = vmul.f32 %v1727, %v1297
    %v2760 = vmul.f32 %v1728, %v1297
    %2765 = vrot.lane.b32.xlu0 %v2757, 123
    %v2766 = vpop.permute.xlu0 %2765
    %2767 = vrot.lane.b32.xlu0 %v2758, 123
    %v2768 = vpop.permute.xlu0 %2767
    %2769 = vrot.lane.b32.xlu0 %v2759, 123
    %v2770 = vpop.permute.xlu0 %2769
    %2771 = vrot.lane.b32.xlu0 %v2760, 123
    %v2772 = vpop.permute.xlu0 %2771
    %v2773 = vsel %vm325, %v2766, %v2768
    %v2774 = vsel %vm325, %v2770, %v2772
    %v2777 = vadd.f32 %v2755, %v2773
    %v2778 = vadd.f32 %v2756, %v2774
    %v2779 = vmul.f32 %v1725, %v1320
    %v2780 = vmul.f32 %v1726, %v1320
    %v2781 = vmul.f32 %v1727, %v1320
    %v2782 = vmul.f32 %v1728, %v1320
    %2787 = vrot.lane.b32.xlu0 %v2779, 122
    %v2788 = vpop.permute.xlu0 %2787
    %2789 = vrot.lane.b32.xlu0 %v2780, 122
    %v2790 = vpop.permute.xlu0 %2789
    %2791 = vrot.lane.b32.xlu0 %v2781, 122
    %v2792 = vpop.permute.xlu0 %2791
    %2793 = vrot.lane.b32.xlu0 %v2782, 122
    %v2794 = vpop.permute.xlu0 %2793
    %v2795 = vsel %vm349, %v2788, %v2790
    %v2796 = vsel %vm349, %v2792, %v2794
    %v2799 = vadd.f32 %v2777, %v2795
    %v2800 = vadd.f32 %v2778, %v2796
    %v2801 = vmul.f32 %v1861, %v1343
    %v2802 = vmul.f32 %v1862, %v1343
    %v2803 = vmul.f32 %v1995, %v1346
    %v2804 = vmul.f32 %v1996, %v1346
    %v2805 = vadd.f32 %v2801, %v2803
    %v2806 = vadd.f32 %v2802, %v2804
    %v2807 = vmul.f32 %v2129, %v1351
    %v2808 = vmul.f32 %v2130, %v1351
    %v2809 = vadd.f32 %v2805, %v2807
    %v2810 = vadd.f32 %v2806, %v2808
    %v2811 = vmul.f32 %v2263, %v1356
    %v2812 = vmul.f32 %v2264, %v1356
    %v2813 = vadd.f32 %v2809, %v2811
    %v2814 = vadd.f32 %v2810, %v2812
    %v2815 = vmul.f32 %v2397, %v1361
    %v2816 = vmul.f32 %v2398, %v1361
    %v2817 = vadd.f32 %v2813, %v2815
    %v2818 = vadd.f32 %v2814, %v2816
    %v2819 = vmul.f32 %v2531, %v1366
    %v2820 = vmul.f32 %v2532, %v1366
    %v2821 = vadd.f32 %v2817, %v2819
    %v2822 = vadd.f32 %v2818, %v2820
    %v2823 = vmul.f32 %v2665, %v1371
    %v2824 = vmul.f32 %v2666, %v1371
    %v2825 = vadd.f32 %v2821, %v2823
    %v2826 = vadd.f32 %v2822, %v2824
    %v2827 = vmul.f32 %v2799, %v1376
    %v2828 = vmul.f32 %v2800, %v1376
    %v2829 = vadd.f32 %v2825, %v2827
    %v2830 = vadd.f32 %v2826, %v2828
    %v2831 = vadd.f32 %v2829, %v1381
    %v2832 = vadd.f32 %v2830, %v1381
    %s2833 = scalar_lea.vmem %s4, 16
    %2834 = vst [vmem:[%s2833] sm:$0xff] %v2831
    %2835 = vst [vmem:[%s2833 + $0x8] sm:$0xff] %v2832
    %v2836 = vmul.f32 %v1861, %v1386
    %v2837 = vmul.f32 %v1862, %v1386
    %v2838 = vmul.f32 %v1995, %v1389
    %v2839 = vmul.f32 %v1996, %v1389
    %v2840 = vadd.f32 %v2836, %v2838
    %v2841 = vadd.f32 %v2837, %v2839
    %v2842 = vmul.f32 %v2129, %v1394
    %v2843 = vmul.f32 %v2130, %v1394
    %v2844 = vadd.f32 %v2840, %v2842
    %v2845 = vadd.f32 %v2841, %v2843
    %v2846 = vmul.f32 %v2263, %v1399
    %v2847 = vmul.f32 %v2264, %v1399
    %v2848 = vadd.f32 %v2844, %v2846
    %v2849 = vadd.f32 %v2845, %v2847
    %v2850 = vmul.f32 %v2397, %v1404
    %v2851 = vmul.f32 %v2398, %v1404
    %v2852 = vadd.f32 %v2848, %v2850
    %v2853 = vadd.f32 %v2849, %v2851
    %v2854 = vmul.f32 %v2531, %v1409
    %v2855 = vmul.f32 %v2532, %v1409
    %v2856 = vadd.f32 %v2852, %v2854
    %v2857 = vadd.f32 %v2853, %v2855
    %v2858 = vmul.f32 %v2665, %v1414
    %v2859 = vmul.f32 %v2666, %v1414
    %v2860 = vadd.f32 %v2856, %v2858
    %v2861 = vadd.f32 %v2857, %v2859
    %v2862 = vmul.f32 %v2799, %v1419
    %v2863 = vmul.f32 %v2800, %v1419
    %v2864 = vadd.f32 %v2860, %v2862
    %v2865 = vadd.f32 %v2861, %v2863
    %v2866 = vadd.f32 %v2864, %v1424
    %v2867 = vadd.f32 %v2865, %v1424
    %s2868 = sadd.s32 16, 32
    %s2869 = scalar_lea.vmem %s4, %s2868
    %2870 = vst [vmem:[%s2869] sm:$0xff] %v2866
    %2871 = vst [vmem:[%s2869 + $0x8] sm:$0xff] %v2867
    %v2872 = vmul.f32 %v1861, %v1431
    %v2873 = vmul.f32 %v1862, %v1431
    %v2874 = vmul.f32 %v1995, %v1434
    %v2875 = vmul.f32 %v1996, %v1434
    %v2876 = vadd.f32 %v2872, %v2874
    %v2877 = vadd.f32 %v2873, %v2875
    %v2878 = vmul.f32 %v2129, %v1439
    %v2879 = vmul.f32 %v2130, %v1439
    %v2880 = vadd.f32 %v2876, %v2878
    %v2881 = vadd.f32 %v2877, %v2879
    %v2882 = vmul.f32 %v2263, %v1444
    %v2883 = vmul.f32 %v2264, %v1444
    %v2884 = vadd.f32 %v2880, %v2882
    %v2885 = vadd.f32 %v2881, %v2883
    %v2886 = vmul.f32 %v2397, %v1449
    %v2887 = vmul.f32 %v2398, %v1449
    %v2888 = vadd.f32 %v2884, %v2886
    %v2889 = vadd.f32 %v2885, %v2887
    %v2890 = vmul.f32 %v2531, %v1454
    %v2891 = vmul.f32 %v2532, %v1454
    %v2892 = vadd.f32 %v2888, %v2890
    %v2893 = vadd.f32 %v2889, %v2891
    %v2894 = vmul.f32 %v2665, %v1459
    %v2895 = vmul.f32 %v2666, %v1459
    %v2896 = vadd.f32 %v2892, %v2894
    %v2897 = vadd.f32 %v2893, %v2895
    %v2898 = vmul.f32 %v2799, %v1464
    %v2899 = vmul.f32 %v2800, %v1464
    %v2900 = vadd.f32 %v2896, %v2898
    %v2901 = vadd.f32 %v2897, %v2899
    %v2902 = vadd.f32 %v2900, %v1469
    %v2903 = vadd.f32 %v2901, %v1469
    %s2904 = sadd.s32 16, 64
    %s2905 = scalar_lea.vmem %s4, %s2904
    %2906 = vst [vmem:[%s2905] sm:$0xff] %v2902
    %2907 = vst [vmem:[%s2905 + $0x8] sm:$0xff] %v2903
    %v2908 = vmul.f32 %v1861, %v1476
    %v2909 = vmul.f32 %v1862, %v1476
    %v2910 = vmul.f32 %v1995, %v1479
    %v2911 = vmul.f32 %v1996, %v1479
    %v2912 = vadd.f32 %v2908, %v2910
    %v2913 = vadd.f32 %v2909, %v2911
    %v2914 = vmul.f32 %v2129, %v1484
    %v2915 = vmul.f32 %v2130, %v1484
    %v2916 = vadd.f32 %v2912, %v2914
    %v2917 = vadd.f32 %v2913, %v2915
    %v2918 = vmul.f32 %v2263, %v1489
    %v2919 = vmul.f32 %v2264, %v1489
    %v2920 = vadd.f32 %v2916, %v2918
    %v2921 = vadd.f32 %v2917, %v2919
    %v2922 = vmul.f32 %v2397, %v1494
    %v2923 = vmul.f32 %v2398, %v1494
    %v2924 = vadd.f32 %v2920, %v2922
    %v2925 = vadd.f32 %v2921, %v2923
    %v2926 = vmul.f32 %v2531, %v1499
    %v2927 = vmul.f32 %v2532, %v1499
    %v2928 = vadd.f32 %v2924, %v2926
    %v2929 = vadd.f32 %v2925, %v2927
    %v2930 = vmul.f32 %v2665, %v1504
    %v2931 = vmul.f32 %v2666, %v1504
    %v2932 = vadd.f32 %v2928, %v2930
    %v2933 = vadd.f32 %v2929, %v2931
    %v2934 = vmul.f32 %v2799, %v1509
    %v2935 = vmul.f32 %v2800, %v1509
    %v2936 = vadd.f32 %v2932, %v2934
    %v2937 = vadd.f32 %v2933, %v2935
    %v2938 = vadd.f32 %v2936, %v1514
    %v2939 = vadd.f32 %v2937, %v1514
    %s2940 = sadd.s32 16, 96
    %s2941 = scalar_lea.vmem %s4, %s2940
    %2942 = vst [vmem:[%s2941] sm:$0xff] %v2938
    %2943 = vst [vmem:[%s2941 + $0x8] sm:$0xff] %v2939
    %v2944 = vmul.f32 %v1861, %v1521
    %v2945 = vmul.f32 %v1862, %v1521
    %v2946 = vmul.f32 %v1995, %v1524
    %v2947 = vmul.f32 %v1996, %v1524
    %v2948 = vadd.f32 %v2944, %v2946
    %v2949 = vadd.f32 %v2945, %v2947
    %v2950 = vmul.f32 %v2129, %v1529
    %v2951 = vmul.f32 %v2130, %v1529
    %v2952 = vadd.f32 %v2948, %v2950
    %v2953 = vadd.f32 %v2949, %v2951
    %v2954 = vmul.f32 %v2263, %v1534
    %v2955 = vmul.f32 %v2264, %v1534
    %v2956 = vadd.f32 %v2952, %v2954
    %v2957 = vadd.f32 %v2953, %v2955
    %v2958 = vmul.f32 %v2397, %v1539
    %v2959 = vmul.f32 %v2398, %v1539
    %v2960 = vadd.f32 %v2956, %v2958
    %v2961 = vadd.f32 %v2957, %v2959
    %v2962 = vmul.f32 %v2531, %v1544
    %v2963 = vmul.f32 %v2532, %v1544
    %v2964 = vadd.f32 %v2960, %v2962
    %v2965 = vadd.f32 %v2961, %v2963
    %v2966 = vmul.f32 %v2665, %v1549
    %v2967 = vmul.f32 %v2666, %v1549
    %v2968 = vadd.f32 %v2964, %v2966
    %v2969 = vadd.f32 %v2965, %v2967
    %v2970 = vmul.f32 %v2799, %v1554
    %v2971 = vmul.f32 %v2800, %v1554
    %v2972 = vadd.f32 %v2968, %v2970
    %v2973 = vadd.f32 %v2969, %v2971
    %v2974 = vadd.f32 %v2972, %v1559
    %v2975 = vadd.f32 %v2973, %v1559
    %s2976 = sadd.s32 16, 128
    %s2977 = scalar_lea.vmem %s4, %s2976
    %2978 = vst [vmem:[%s2977] sm:$0xff] %v2974
    %2979 = vst [vmem:[%s2977 + $0x8] sm:$0xff] %v2975
    %v2980 = vmul.f32 %v1861, %v1566
    %v2981 = vmul.f32 %v1862, %v1566
    %v2982 = vmul.f32 %v1995, %v1569
    %v2983 = vmul.f32 %v1996, %v1569
    %v2984 = vadd.f32 %v2980, %v2982
    %v2985 = vadd.f32 %v2981, %v2983
    %v2986 = vmul.f32 %v2129, %v1574
    %v2987 = vmul.f32 %v2130, %v1574
    %v2988 = vadd.f32 %v2984, %v2986
    %v2989 = vadd.f32 %v2985, %v2987
    %v2990 = vmul.f32 %v2263, %v1579
    %v2991 = vmul.f32 %v2264, %v1579
    %v2992 = vadd.f32 %v2988, %v2990
    %v2993 = vadd.f32 %v2989, %v2991
    %v2994 = vmul.f32 %v2397, %v1584
    %v2995 = vmul.f32 %v2398, %v1584
    %v2996 = vadd.f32 %v2992, %v2994
    %v2997 = vadd.f32 %v2993, %v2995
    %v2998 = vmul.f32 %v2531, %v1589
    %v2999 = vmul.f32 %v2532, %v1589
    %v3000 = vadd.f32 %v2996, %v2998
    %v3001 = vadd.f32 %v2997, %v2999
    %v3002 = vmul.f32 %v2665, %v1594
    %v3003 = vmul.f32 %v2666, %v1594
    %v3004 = vadd.f32 %v3000, %v3002
    %v3005 = vadd.f32 %v3001, %v3003
    %v3006 = vmul.f32 %v2799, %v1599
    %v3007 = vmul.f32 %v2800, %v1599
    %v3008 = vadd.f32 %v3004, %v3006
    %v3009 = vadd.f32 %v3005, %v3007
    %v3010 = vadd.f32 %v3008, %v1604
    %v3011 = vadd.f32 %v3009, %v1604
    %s3012 = sadd.s32 16, 160
    %s3013 = scalar_lea.vmem %s4, %s3012
    %3014 = vst [vmem:[%s3013] sm:$0xff] %v3010
    %3015 = vst [vmem:[%s3013 + $0x8] sm:$0xff] %v3011
    %v3016 = vmul.f32 %v1861, %v1611
    %v3017 = vmul.f32 %v1862, %v1611
    %v3018 = vmul.f32 %v1995, %v1614
    %v3019 = vmul.f32 %v1996, %v1614
    %v3020 = vadd.f32 %v3016, %v3018
    %v3021 = vadd.f32 %v3017, %v3019
    %v3022 = vmul.f32 %v2129, %v1619
    %v3023 = vmul.f32 %v2130, %v1619
    %v3024 = vadd.f32 %v3020, %v3022
    %v3025 = vadd.f32 %v3021, %v3023
    %v3026 = vmul.f32 %v2263, %v1624
    %v3027 = vmul.f32 %v2264, %v1624
    %v3028 = vadd.f32 %v3024, %v3026
    %v3029 = vadd.f32 %v3025, %v3027
    %v3030 = vmul.f32 %v2397, %v1629
    %v3031 = vmul.f32 %v2398, %v1629
    %v3032 = vadd.f32 %v3028, %v3030
    %v3033 = vadd.f32 %v3029, %v3031
    %v3034 = vmul.f32 %v2531, %v1634
    %v3035 = vmul.f32 %v2532, %v1634
    %v3036 = vadd.f32 %v3032, %v3034
    %v3037 = vadd.f32 %v3033, %v3035
    %v3038 = vmul.f32 %v2665, %v1639
    %v3039 = vmul.f32 %v2666, %v1639
    %v3040 = vadd.f32 %v3036, %v3038
    %v3041 = vadd.f32 %v3037, %v3039
    %v3042 = vmul.f32 %v2799, %v1644
    %v3043 = vmul.f32 %v2800, %v1644
    %v3044 = vadd.f32 %v3040, %v3042
    %v3045 = vadd.f32 %v3041, %v3043
    %v3046 = vadd.f32 %v3044, %v1649
    %v3047 = vadd.f32 %v3045, %v1649
    %s3048 = sadd.s32 16, 192
    %s3049 = scalar_lea.vmem %s4, %s3048
    %3050 = vst [vmem:[%s3049] sm:$0xff] %v3046
    %3051 = vst [vmem:[%s3049 + $0x8] sm:$0xff] %v3047
    %v3052 = vmul.f32 %v1861, %v1656
    %v3053 = vmul.f32 %v1862, %v1656
    %v3054 = vmul.f32 %v1995, %v1659
    %v3055 = vmul.f32 %v1996, %v1659
    %v3056 = vadd.f32 %v3052, %v3054
    %v3057 = vadd.f32 %v3053, %v3055
    %v3058 = vmul.f32 %v2129, %v1664
    %v3059 = vmul.f32 %v2130, %v1664
    %v3060 = vadd.f32 %v3056, %v3058
    %v3061 = vadd.f32 %v3057, %v3059
    %v3062 = vmul.f32 %v2263, %v1669
    %v3063 = vmul.f32 %v2264, %v1669
    %v3064 = vadd.f32 %v3060, %v3062
    %v3065 = vadd.f32 %v3061, %v3063
    %v3066 = vmul.f32 %v2397, %v1674
    %v3067 = vmul.f32 %v2398, %v1674
    %v3068 = vadd.f32 %v3064, %v3066
    %v3069 = vadd.f32 %v3065, %v3067
    %v3070 = vmul.f32 %v2531, %v1679
    %v3071 = vmul.f32 %v2532, %v1679
    %v3072 = vadd.f32 %v3068, %v3070
    %v3073 = vadd.f32 %v3069, %v3071
    %v3074 = vmul.f32 %v2665, %v1684
    %v3075 = vmul.f32 %v2666, %v1684
    %v3076 = vadd.f32 %v3072, %v3074
    %v3077 = vadd.f32 %v3073, %v3075
    %v3078 = vmul.f32 %v2799, %v1689
    %v3079 = vmul.f32 %v2800, %v1689
    %v3080 = vadd.f32 %v3076, %v3078
    %v3081 = vadd.f32 %v3077, %v3079
    %v3082 = vadd.f32 %v3080, %v1694
    %v3083 = vadd.f32 %v3081, %v1694
    %s3084 = sadd.s32 16, 224
    %s3085 = scalar_lea.vmem %s4, %s3084
    %3086 = vst [vmem:[%s3085] sm:$0xff] %v3082
    %3087 = vst [vmem:[%s3085 + $0x8] sm:$0xff] %v3083
    // Predicated region
    $region30: #{depthwise_separable_conv.1} parent=1 // pred_check
      _
    $region31: #{depthwise_separable_conv.1} parent=1 // pred_check_branch
      %3089 = sbr.rel (0) target = $region33
    $region32: #{depthwise_separable_conv.1} parent=1 // pred_region
      _
    $region33: #{depthwise_separable_conv.1} parent=1 // pred_fallthru
      _
    // Predicated region
    $region34: #{depthwise_separable_conv.1} parent=1 // pred_check
      _
    $region35: #{depthwise_separable_conv.1} parent=1 // pred_check_branch
      %3091 = sbr.rel (0) target = $region37
    $region36: #{depthwise_separable_conv.1} parent=1 // pred_region
      _
    $region37: #{depthwise_separable_conv.1} parent=1 // pred_fallthru
      _
    %3092 = vsyncpa [#allocation3], 1
    %3093 = vsyncpa [#allocation5], 1

</llo_original>
